<compile_context>
chip_gen: v6e
topology: v6e:2x2x1
jax: 0.10.0
libtpu: 0.0.40
codegen_flags: <defaults>
</compile_context>

<pallas_src>
import functools
import math

import jax
import jax.numpy as jnp
from jax.experimental import pallas as pl
from jax.experimental.pallas import tpu as pltpu


GROUPS = 2  # the two stacked original forward passes that share every Pallas launch


def _round_up(x, m):
    return (x + m - 1) // m * m


def _pick_tm(m, cap):
    """Largest row tile <= cap that is a multiple of 8 and, if possible, divides m
    (so no pad / slice copies are emitted around the pallas_call)."""
    m8 = _round_up(m, 8)
    if m8 <= cap:
        return m8
    for t in range(cap - cap % 8, 7, -8):
        if m % t == 0:
            return t
    return cap


# ----------------------------------------------------------------------------
# Pallas kernels
# ----------------------------------------------------------------------------
def _matmul_kernel(a_ref, b_ref, o_ref):
    o_ref[...] = jnp.dot(a_ref[...], b_ref[...],
                         preferred_element_type=jnp.float32).astype(o_ref.dtype)


def pallas_matmul(a, b, tm_cap=4096):
    """[M,K] @ [K,N] -> f32 [M,N].  Operands in bf16 (MXU), f32 accumulation.

    K and N are kept un-padded (full-K / full-N blocks), so the grid is 1-D over
    row tiles: one MXU call per tile, no K loop, no lane-padded output slabs."""
    m, k = a.shape
    k2, n = b.shape
    assert k == k2
    a = a.astype(jnp.bfloat16)
    b = b.astype(jnp.bfloat16)
    tm = _pick_tm(m, tm_cap)
    mp = _round_up(m, tm)
    if mp != m:
        a = jnp.pad(a, ((0, mp - m), (0, 0)))
    out = pl.pallas_call(
        _matmul_kernel,
        out_shape=jax.ShapeDtypeStruct((mp, n), jnp.float32),
        grid_spec=pltpu.PrefetchScalarGridSpec(
            num_scalar_prefetch=0,
            grid=(mp // tm,),
            in_specs=[pl.BlockSpec((tm, k), lambda i: (i, 0)),
                      pl.BlockSpec((k, n), lambda i: (0, 0))],
            out_specs=pl.BlockSpec((tm, n), lambda i: (i, 0))),
        compiler_params=pltpu.CompilerParams(
            dimension_semantics=("parallel",)),
    )(a, b)
    return out[:m] if mp != m else out


def _affine_act_kernel(x_ref, s_ref, b_ref, o_ref, *, act):
    y = x_ref[...].astype(jnp.float32) * s_ref[...] + b_ref[...]
    if act == "relu":
        y = jnp.maximum(y, 0.0)
    elif act == "sigmoid":
        y = jax.nn.sigmoid(y)
    o_ref[...] = y.astype(o_ref.dtype)


def pallas_affine_act(x3, scale, shift, act=None, out_dtype=jnp.float32,
                      tm_cap=4096):
    """Per-group folded-BatchNorm affine + activation.
    x3: (G, Mg, C), scale/shift: (G, C) -> (G, Mg, C)."""
    g, mg, c = x3.shape
    tm = _pick_tm(mg, tm_cap)
    mp = _round_up(mg, tm)
    xp = jnp.pad(x3, ((0, 0), (0, mp - mg), (0, 0))) if mp != mg else x3
    s3 = scale.reshape(g, 1, c).astype(jnp.float32)
    b3 = shift.reshape(g, 1, c).astype(jnp.float32)
    out = pl.pallas_call(
        functools.partial(_affine_act_kernel, act=act),
        out_shape=jax.ShapeDtypeStruct((g, mp, c), out_dtype),
        grid_spec=pltpu.PrefetchScalarGridSpec(
            num_scalar_prefetch=0,
            grid=(g, mp // tm),
            in_specs=[pl.BlockSpec((1, tm, c), lambda gi, i: (gi, i, 0)),
                      pl.BlockSpec((1, 1, c), lambda gi, i: (gi, 0, 0)),
                      pl.BlockSpec((1, 1, c), lambda gi, i: (gi, 0, 0))],
            out_specs=pl.BlockSpec((1, tm, c), lambda gi, i: (gi, i, 0))),
        compiler_params=pltpu.CompilerParams(
            dimension_semantics=("parallel", "parallel")),
    )(xp, s3, b3)
    return out[:, :mg] if mp != mg else out


def _bn_add_relu_kernel(x_ref, i_ref, s_ref, b_ref, si_ref, bi_ref, o_ref):
    y = (x_ref[...].astype(jnp.float32) * s_ref[...] + b_ref[...]
         + i_ref[...].astype(jnp.float32) * si_ref[...] + bi_ref[...])
    o_ref[...] = jnp.maximum(y, 0.0).astype(o_ref.dtype)


def pallas_bn_add_relu(x3, idn3, s, b, si, bi, tm_cap=4096):
    """Fused bn2-affine + (downsample-BN-affine or identity) + residual add + ReLU."""
    g, mg, c = x3.shape
    tm = _pick_tm(mg, tm_cap)
    mp = _round_up(mg, tm)
    if mp != mg:
        x3 = jnp.pad(x3, ((0, 0), (0, mp - mg), (0, 0)))
        idn3 = jnp.pad(idn3, ((0, 0), (0, mp - mg), (0, 0)))

    def r3(v):
        return v.reshape(g, 1, c).astype(jnp.float32)

    out = pl.pallas_call(
        _bn_add_relu_kernel,
        out_shape=jax.ShapeDtypeStruct((g, mp, c), jnp.float32),
        grid_spec=pltpu.PrefetchScalarGridSpec(
            num_scalar_prefetch=0,
            grid=(g, mp // tm),
            in_specs=[pl.BlockSpec((1, tm, c), lambda gi, i: (gi, i, 0)),
                      pl.BlockSpec((1, tm, c), lambda gi, i: (gi, i, 0)),
                      pl.BlockSpec((1, 1, c), lambda gi, i: (gi, 0, 0)),
                      pl.BlockSpec((1, 1, c), lambda gi, i: (gi, 0, 0)),
                      pl.BlockSpec((1, 1, c), lambda gi, i: (gi, 0, 0)),
                      pl.BlockSpec((1, 1, c), lambda gi, i: (gi, 0, 0))],
            out_specs=pl.BlockSpec((1, tm, c), lambda gi, i: (gi, i, 0))),
        compiler_params=pltpu.CompilerParams(
            dimension_semantics=("parallel", "parallel")),
    )(x3, idn3, r3(s), r3(b), r3(si), r3(bi))
    return out[:, :mg] if mp != mg else out


# ----------------------------------------------------------------------------
# Conv / BN / pooling built on the Pallas kernels (glue = im2col / reshapes)
# ----------------------------------------------------------------------------
def im2col(x_nhwc, kh, kw, stride, pad):
    n, h, w, c = x_nhwc.shape
    if pad:
        x_nhwc = jnp.pad(x_nhwc, ((0, 0), (pad, pad), (pad, pad), (0, 0)))
    ho = (h + 2 * pad - kh) // stride + 1
    wo = (w + 2 * pad - kw) // stride + 1
    cols = []
    for i in range(kh):
        for j in range(kw):
            cols.append(x_nhwc[:, i:i + stride * ho:stride,
                               j:j + stride * wo:stride, :])
    return jnp.concatenate(cols, axis=-1), ho, wo


def conv2d(x_nhwc, w_mat, kh, kw, stride, pad):
    # im2col is done in bf16 so the materialized patches are half the bytes.
    patches, ho, wo = im2col(x_nhwc.astype(jnp.bfloat16), kh, kw, stride, pad)
    n = x_nhwc.shape[0]
    k = patches.shape[-1]
    out = pallas_matmul(patches.reshape(-1, k), w_mat)
    return out.reshape(n, ho, wo, w_mat.shape[1])


def _bn_scale_shift(x_nhwc, gamma, beta, eps=1e-5):
    """Per-group training-mode BN statistics (biased var, like PyTorch)."""
    gb, h, w, c = x_nhwc.shape
    xg = x_nhwc.reshape(GROUPS, -1, c).astype(jnp.float32)
    mean = jnp.mean(xg, axis=1)
    var = jnp.var(xg, axis=1)
    scale = gamma[None, :] / jnp.sqrt(var + eps)
    shift = beta[None, :] - mean * scale
    return scale, shift


def batchnorm_act(x_nhwc, gamma, beta, act=None, out_dtype=jnp.float32):
    gb, h, w, c = x_nhwc.shape
    scale, shift = _bn_scale_shift(x_nhwc, gamma, beta)
    y = pallas_affine_act(x_nhwc.reshape(GROUPS, -1, c), scale, shift, act,
                          out_dtype)
    return y.reshape(gb, h, w, c)


def maxpool_3x3_s2_p1(x_nhwc):
    n, h, w, c = x_nhwc.shape
    xp = jnp.pad(x_nhwc, ((0, 0), (1, 1), (1, 1), (0, 0)),
                 constant_values=-jnp.inf)
    ho = (h - 1) // 2 + 1
    wo = (w - 1) // 2 + 1
    out = None
    for i in range(3):
        for j in range(3):
            s = xp[:, i:i + 2 * ho:2, j:j + 2 * wo:2, :]
            out = s if out is None else jnp.maximum(out, s)
    return out


def avgpool_7x7_s1(x_nhwc):
    n, h, w, c = x_nhwc.shape
    if h == 7 and w == 7:
        return jnp.mean(x_nhwc, axis=(1, 2), keepdims=True)
    ho, wo = h - 6, w - 6
    acc = jnp.zeros((n, ho, wo, c), jnp.float32)
    for i in range(7):
        for j in range(7):
            acc = acc + x_nhwc[:, i:i + ho, j:j + wo, :]
    return acc / 49.0


# ----------------------------------------------------------------------------
# Parameter initialization (deterministic, shapes from the module __init__)
# ----------------------------------------------------------------------------
_KEY = jax.random.PRNGKey(0)
_counter = [0]


def _next_key():
    _counter[0] += 1
    return jax.random.fold_in(_KEY, _counter[0])


def conv_weight_mat(cout, cin, kh, kw):
    """Kaiming-normal conv weight pre-laid-out once as a (kh*kw*cin, cout) bf16
    matmul operand (transpose/cast at init, not per call)."""
    fan_in = cin * kh * kw
    std = math.sqrt(2.0 / fan_in)
    w = jax.random.normal(_next_key(), (cout, cin, kh, kw), jnp.float32) * std
    return jnp.transpose(w, (2, 3, 1, 0)).reshape(kh * kw * cin,
                                                  cout).astype(jnp.bfloat16)


def bn_params(c):
    return jnp.ones((c,), jnp.float32), jnp.zeros((c,), jnp.float32)


def make_chain(channels):
    layers = []
    for cin, cout in zip(channels[:-1], channels[1:]):
        g, b = bn_params(cout)
        layers.append({"w": conv_weight_mat(cout, cin, 3, 3), "g": g, "b": b})
    return layers


def make_basic_block(inplanes, planes, stride, with_downsample):
    blk = {"stride": stride}
    blk["w1"] = conv_weight_mat(planes, inplanes, 3, 3)
    blk["g1"], blk["b1"] = bn_params(planes)
    blk["w2"] = conv_weight_mat(planes, planes, 3, 3)
    blk["g2"], blk["b2"] = bn_params(planes)
    if with_downsample:
        blk["wd"] = conv_weight_mat(planes, inplanes, 1, 1)
        blk["gd"], blk["bd"] = bn_params(planes)
    else:
        blk["wd"] = None
    return blk


def init_params(layers=(1, 1, 1, 1), num_classes=8):
    # num_classes=8: the forward feeds the fc output into DLT_solve (4-pt offsets).
    p = {}
    p["conv1_w"] = conv_weight_mat(64, 2, 7, 7)
    p["bn1_g"], p["bn1_b"] = bn_params(64)
    inplanes = 64
    p["layers"] = []
    for planes, nblocks, stride in zip((64, 128, 256, 512), layers,
                                       (1, 2, 2, 2)):
        layer = []
        for bi in range(nblocks):
            s = stride if bi == 0 else 1
            need_ds = (bi == 0) and (s != 1 or inplanes != planes)
            layer.append(make_basic_block(inplanes, planes, s, need_ds))
            inplanes = planes
        p["layers"].append(layer)
    bound = 1.0 / math.sqrt(512)
    p["fc_w"] = jax.random.uniform(_next_key(), (num_classes, 512),
                                   jnp.float32, -bound, bound)
    p["fc_b"] = jax.random.uniform(_next_key(), (num_classes,),
                                   jnp.float32, -bound, bound)
    p["share"] = make_chain([1, 4, 8, 1])                # ShareFeature
    p["genmask"] = make_chain([1, 4, 8, 16, 32, 1])      # genMask
    return p


# ----------------------------------------------------------------------------
# Module forward
# ----------------------------------------------------------------------------
def apply_chain(chain, x_nchw, final_act):
    x = jnp.transpose(x_nchw, (0, 2, 3, 1))              # NCHW -> NHWC
    n = len(chain)
    for li, layer in enumerate(chain):
        y = conv2d(x, layer["w"], 3, 3, 1, 1)
        last = li == n - 1
        # Intermediate activations are kept in bf16 so the next conv's im2col
        # slab is half the HBM bytes; final output stays f32.
        x = batchnorm_act(y, layer["g"], layer["b"],
                          final_act if last else "relu",
                          out_dtype=jnp.float32 if last else jnp.bfloat16)
    return x


def basic_block_fwd(x_nhwc, blk):
    out = conv2d(x_nhwc, blk["w1"], 3, 3, blk["stride"], 1)
    out = batchnorm_act(out, blk["g1"], blk["b1"], "relu")
    out = conv2d(out, blk["w2"], 3, 3, 1, 1)                      # raw pre-bn2
    s2, b2 = _bn_scale_shift(out, blk["g2"], blk["b2"])
    if blk["wd"] is not None:
        idn = conv2d(x_nhwc, blk["wd"], 1, 1, blk["stride"], 0)   # raw pre-bn
        si, bi = _bn_scale_shift(idn, blk["gd"], blk["bd"])
    else:
        idn = x_nhwc
        c_out = out.shape[-1]
        si = jnp.ones((GROUPS, c_out), jnp.float32)
        bi = jnp.zeros((GROUPS, c_out), jnp.float32)
    gb, h, w, c = out.shape
    y = pallas_bn_add_relu(out.reshape(GROUPS, -1, c),
                           idn.astype(jnp.float32).reshape(GROUPS, -1, c),
                           s2, b2, si, bi)
    return y.reshape(gb, h, w, c)


def resnet_backbone(params, x_nchw):
    x = jnp.transpose(x_nchw, (0, 2, 3, 1))              # NCHW -> NHWC
    x = conv2d(x, params["conv1_w"], 7, 7, 2, 3)
    x = batchnorm_act(x, params["bn1_g"], params["bn1_b"], "relu")
    x = maxpool_3x3_s2_p1(x)
    for layer in params["layers"]:
        for blk in layer:
            x = basic_block_fwd(x, blk)
    x = avgpool_7x7_s1(x.astype(jnp.float32))            # -> [2B,1,1,512]
    gb = x.shape[0]
    feat = x.reshape(gb, -1)
    # FC (gb x 512 x 8) is tiny -> plain XLA, no 128-padded MXU launch.
    return feat @ params["fc_w"].T + params["fc_b"]


def get_patch_from_fullimg(ph, pw, patch_indices, batch_indices, img_full):
    num_batch = img_full.shape[0]
    flat = img_full.reshape(-1)
    idx = patch_indices.reshape(-1).astype(jnp.int32) + batch_indices
    return flat[idx].reshape(num_batch, 1, ph, pw)


def norm_mask(mask, strength=0.5):
    b = mask.shape[0]
    mx = jnp.max(mask.reshape(b, -1), axis=1).reshape(b, 1, 1, 1)
    mask = mask / (mx * strength)
    return jnp.clip(mask, 0.0, 1.0)


def resnet_forward(params, org_imges, input_tesnors, h4p, patch_indices):
    b, _, img_h, img_w = org_imges.shape
    _, _, ph, pw = input_tesnors.shape

    y_t = jnp.arange(0, b * img_w * img_h, img_w * img_h, dtype=jnp.int32)
    batch_indices = jnp.repeat(y_t, ph * pw)

    # genMask on both image channels in ONE stacked pass; per-group BN stats
    # reproduce the per-call batch statistics of the two original calls.
    gm_in = jnp.concatenate([org_imges[:, :1], org_imges[:, 1:2]], axis=0)
    masks_full = apply_chain(params["genmask"], gm_in, "sigmoid")  # (2b,H,W,1)
    mask_I1_full = masks_full[:b].reshape(b, 1, img_h, img_w)
    mask_I2_full = masks_full[b:].reshape(b, 1, img_h, img_w)

    mask_I1 = norm_mask(get_patch_from_fullimg(ph, pw, patch_indices,
                                               batch_indices, mask_I1_full))
    mask_I2 = norm_mask(get_patch_from_fullimg(ph, pw, patch_indices,
                                               batch_indices, mask_I2_full))

    # ShareFeature on both patch channels in one stacked pass.
    sf_in = jnp.concatenate([input_tesnors[:, :1], input_tesnors[:, 1:2]],
                            axis=0)
    patches = apply_chain(params["share"], sf_in, "relu")          # (2b,h,w,1)
    patch_1 = patches[:b].reshape(b, 1, ph, pw)
    patch_2 = patches[b:].reshape(b, 1, ph, pw)

    patch_1_res = patch_1 * mask_I1
    patch_2_res = patch_2 * mask_I2

    # The two backbone passes of the original forward are stacked along batch
    # and run once; group-wise BN preserves the per-pass statistics.
    x_in = jnp.concatenate([patch_1_res, patch_2_res], axis=1)
    y_in = jnp.concatenate([patch_2_res, patch_1_res], axis=1)
    fc_out = resnet_backbone(params, jnp.concatenate([x_in, y_in], axis=0))
    x = fc_out[:b]
    y = fc_out[b:]

    # TODO(synk): DLT_solve / transform / getBatchHLoss / triplet feature loss
    # are external functions not defined in the reference source; the warped
    # predictions and the loss terms that depend on them are not reproduced.
    L1_loss = jnp.mean(jnp.abs(patch_1 - patch_2))

    return {
        "x": x,
        "y": y,
        "patch_2_res_d": patch_2_res[:1],
        "mask_I1": mask_I1,
        "mask_I2": mask_I2,
        "L1_loss": L1_loss,
    }


# ----------------------------------------------------------------------------
if __name__ == "__main__":
    params = init_params(layers=(1, 1, 1, 1), num_classes=8)

    # Smallest practical patch size compatible with avgpool(7)+fc(512):
    # 200 -> conv1 100 -> maxpool 50 -> layer2 25 -> layer3 13 -> layer4 7.
    B, off = 1, 4
    ph = pw = 200
    img_h = img_w = ph + 2 * off

    k = jax.random.PRNGKey(0)
    k1, k2, k3 = jax.random.split(k, 3)
    org_imges = jax.random.uniform(k1, (B, 2, img_h, img_w), jnp.float32)
    input_tesnors = jax.random.uniform(k2, (B, 2, ph, pw), jnp.float32)
    h4p = jax.random.uniform(k3, (B, 4, 2), jnp.float32)   # unused downstream

    rows = jnp.arange(ph, dtype=jnp.int32) + off
    cols = jnp.arange(pw, dtype=jnp.int32) + off
    patch_idx_2d = rows[:, None] * img_w + cols[None, :]
    patch_indices = jnp.broadcast_to(patch_idx_2d, (B, ph, pw)).astype(jnp.int32)

    out = resnet_forward(params, org_imges, input_tesnors, h4p, patch_indices)
    out = jax.block_until_ready(out)
    assert out["x"].shape == (B, 8) and out["y"].shape == (B, 8)
    assert bool(jnp.all(jnp.isfinite(out["x"]))) and bool(jnp.all(jnp.isfinite(out["y"])))
    print("KERNEL_OK")
</pallas_src>

<mosaic_0001>
module attributes {stable_mosaic.version = 11 : i64} {
  func.func @_matmul_kernel(%arg0: i32, %arg1: memref<3328x9xbf16, #tpu.memory_space<vmem>>, %arg2: memref<9x4xbf16, #tpu.memory_space<vmem>>, %arg3: memref<3328x4xf32, #tpu.memory_space<vmem>>) attributes {dimension_semantics = [#tpu.dimension_semantics<parallel>], iteration_bounds = array<i64: 26>, scalar_prefetch = 0 : i64, scratch_operands = 0 : i64, tpu.core_type = #tpu.core_type<tc>, window_params = [{transform_indices = @transform_0, window_bounds = array<i64: 3328, 9>}, {pipeline_mode = #tpu.pipeline_mode<synchronous>, transform_indices = @transform_1, window_bounds = array<i64: 9, 4>}, {transform_indices = @transform_2, window_bounds = array<i64: 3328, 4>}]} {
    %c0 = arith.constant 0 : index
    %c0_0 = arith.constant 0 : index
    %0 = vector.load %arg1[%c0, %c0_0] : memref<3328x9xbf16, #tpu.memory_space<vmem>>, vector<3328x9xbf16>
    %c0_1 = arith.constant 0 : index
    %c0_2 = arith.constant 0 : index
    %1 = vector.load %arg2[%c0_1, %c0_2] : memref<9x4xbf16, #tpu.memory_space<vmem>>, vector<9x4xbf16>
    %cst = arith.constant dense<0.000000e+00> : vector<3328x4xf32>
    %2 = tpu.matmul %0, %1, %cst {dimension_numbers = #tpu.dot_dimension_numbers<[1], [0], [0], [1], [0, 0, 1, 1], [], []>} : vector<3328x9xbf16>, vector<9x4xbf16>, vector<3328x4xf32> -> vector<3328x4xf32>
    %c0_3 = arith.constant 0 : index
    %c0_4 = arith.constant 0 : index
    %3 = vector.load %arg3[%c0_3, %c0_4] : memref<3328x4xf32, #tpu.memory_space<vmem>>, vector<3328x4xf32>
    tpu.vector_store %arg3[%c0_3, %c0_4], %2 {strides = array<i32>} : memref<3328x4xf32, #tpu.memory_space<vmem>>, vector<3328x4xf32>,
    return
  }
  func.func @transform_0(%arg0: i32) -> (i32, i32) {
    %c0_i32 = arith.constant 0 : i32
    %c0_i32_0 = arith.constant 0 : i32
    return %arg0, %c0_i32 : i32, i32
  }
  func.func @transform_1(%arg0: i32) -> (i32, i32) {
    %c0_i32 = arith.constant 0 : i32
    %c0_i32_0 = arith.constant 0 : i32
    %c0_i32_1 = arith.constant 0 : i32
    return %c0_i32, %c0_i32_0 : i32, i32
  }
  func.func @transform_2(%arg0: i32) -> (i32, i32) {
    %c0_i32 = arith.constant 0 : i32
    %c0_i32_0 = arith.constant 0 : i32
    return %arg0, %c0_i32 : i32, i32
  }
}

</mosaic_0001>

<llo_original>
// kernel: tpu_custom_call.1
$region0: #{tpu_custom_call.1}
  #allocation0 [shape = 'u32[]', space=smem, size = 0x4, offset = 0x4, fixed_abs, tag = 'smem constant byte address 0x4 - core index']
  #allocation1 [shape = 'u32[144,128]{1,0:T(1,128)}', space=vmem, size = 0x12000, scoped, tag = 'internal scratch']
  %s0 = inlined_call_operand.vmem [shape: bf16[86528,9], index: 0, kind: input, shape index: {}]
  %s1 = inlined_call_operand.vmem [shape: bf16[9,4], index: 1, kind: input, shape index: {}]
  %s2 = inlined_call_operand.vmem [shape: f32[86528,4], index: 2, kind: output, shape index: {}]
  %s3 = sld [smem:[#allocation0]]
  $region41: #{tpu_custom_call.1} parent=0
    _
  %s5 = ssub.s32 1, %s3
  %s6 = scalar_select 0, %s5, %s3
  loop: start=0, step=1, limit=28
  $region2: #{tpu_custom_call.1} parent=0 // loop_pre_header
    _
  $region3: #{tpu_custom_call.1} parent=0 // loop_header
    %s8 = sphi 0, %s12
    %p9 = scmp.ge.s32.totalorder %s8, 28
    %s18 = sphi 0, %s20
    %s21 = sphi 0, %s18
    %s22 = sphi 0, %s21
    %s38 = sphi 0, %s22
    %s42 = sphi 0, %s42
    %s44 = sphi 0, %s42
    %s45 = sphi 0, %s44
    %s59 = sphi 0, %s45
    %s65 = sphi 0, %s67
    %s68 = sphi 0, %s65
    %s69 = sphi 0, %s68
    %s85 = sphi 0, %s69
  $region4: #{tpu_custom_call.1} parent=0 // loop_header_branch
    %11 = sbr.rel (%p9) target = $region8
  $region5: #{tpu_custom_call.1} parent=0 // loop_body
    %s13 = ssub.s32 %s8, 1
    %s14 = ssub.s32 %s8, 2
    %s15 = sadd.s32 %s8, 1
    %s16 = ssub.s32 %s8, %s15
    %p17 = scmp.eq.s32.totalorder %s16, 0
    %s19 = sadd.s32 %s18, 1
    %s20 = scalar_select %p17, %s18, %s19
    %p23 = pneg %p17
    %p24 = scmp.eq.s32.totalorder %s8, 25
    %p25 = por %p23, %p24
    %p26 = scmp.ne.s32.totalorder %s18, %s21
    %p27 = scmp.eq.s32.totalorder %s8, 0
    %p28 = por %p26, %p27
    %p29 = scmp.ne.s32.totalorder %s18, %s21
    %p30 = scmp.eq.s32.totalorder %s13, 25
    %p31 = por %p29, %p30
    %p32 = scmp.ne.s32.totalorder %s21, %s22
    %p33 = scmp.eq.s32.totalorder %s13, 0
    %p34 = por %p32, %p33
    %p35 = scmp.ne.s32.totalorder %s21, %s22
    %p36 = scmp.eq.s32.totalorder %s14, 25
    %p37 = por %p35, %p36
    %p39 = scmp.ne.s32.totalorder %s22, %s38
    %p40 = scmp.eq.s32.totalorder %s14, 0
    %p41 = por %p39, %p40
    %s43 = sadd.s32 %s42, 1
    %p46 = scmp.eq.s32.totalorder %s8, 25
    %p47 = scmp.ne.s32.totalorder %s42, %s44
    %p48 = scmp.eq.s32.totalorder %s8, 0
    %p49 = por %p47, %p48
    %p50 = scmp.ne.s32.totalorder %s42, %s44
    %p51 = scmp.eq.s32.totalorder %s13, 25
    %p52 = por %p50, %p51
    %p53 = scmp.ne.s32.totalorder %s44, %s45
    %p54 = scmp.eq.s32.totalorder %s13, 0
    %p55 = por %p53, %p54
    %p56 = scmp.ne.s32.totalorder %s44, %s45
    %p57 = scmp.eq.s32.totalorder %s14, 25
    %p58 = por %p56, %p57
    %p60 = scmp.ne.s32.totalorder %s45, %s59
    %p61 = scmp.eq.s32.totalorder %s14, 0
    %p62 = por %p60, %p61
    %s63 = ssub.s32 %s8, %s15
    %p64 = scmp.eq.s32.totalorder %s63, 0
    %s66 = sadd.s32 %s65, 1
    %s67 = scalar_select %p64, %s65, %s66
    %p70 = pneg %p64
    %p71 = scmp.eq.s32.totalorder %s8, 25
    %p72 = por %p70, %p71
    %p73 = scmp.ne.s32.totalorder %s65, %s68
    %p74 = scmp.eq.s32.totalorder %s8, 0
    %p75 = por %p73, %p74
    %p76 = scmp.ne.s32.totalorder %s65, %s68
    %p77 = scmp.eq.s32.totalorder %s13, 25
    %p78 = por %p76, %p77
    %p79 = scmp.ne.s32.totalorder %s68, %s69
    %p80 = scmp.eq.s32.totalorder %s13, 0
    %p81 = por %p79, %p80
    %p82 = scmp.ne.s32.totalorder %s68, %s69
    %p83 = scmp.eq.s32.totalorder %s14, 25
    %p84 = por %p82, %p83
    %p86 = scmp.ne.s32.totalorder %s69, %s85
    %p87 = scmp.eq.s32.totalorder %s14, 0
    %p88 = por %p86, %p87
    %p89 = scmp.le.s32.totalorder 1, %s8
    %p90 = scmp.lt.s32.totalorder %s8, 27
    %p91 = pnand %p89, %p90
    %p92 = pneg %p91
    // Predicated region
    $region9: #{tpu_custom_call.1} parent=5 // pred_check
      _
    $region10: #{tpu_custom_call.1} parent=5 // pred_check_branch
      %94 = sbr.rel (%p91) target = $region12
    $region11: #{tpu_custom_call.1} parent=5 // pred_region
      %s95 = ssub.s32 %s8, 1
      // Predicated region
      $region13: #{tpu_custom_call.1} parent=11 // pred_check
        %p96 = pneg %p55
      $region14: #{tpu_custom_call.1} parent=11 // pred_check_branch
        %98 = sbr.rel (%p96) target = $region16
      $region15: #{tpu_custom_call.1} parent=11 // pred_region
        _
      $region16: #{tpu_custom_call.1} parent=11 // pred_fallthru
        _
    $region12: #{tpu_custom_call.1} parent=5 // pred_fallthru
      _
    %p99 = scmp.lt.s32.totalorder %s8, 26
    // Predicated region
    $region17: #{tpu_custom_call.1} parent=5 // pred_check
      %p100 = pneg %p99
    $region18: #{tpu_custom_call.1} parent=5 // pred_check_branch
      %102 = sbr.rel (%p100) target = $region20
    $region19: #{tpu_custom_call.1} parent=5 // pred_region
      // Predicated region
      $region21: #{tpu_custom_call.1} parent=19 // pred_check
        %p103 = pneg %p28
      $region22: #{tpu_custom_call.1} parent=19 // pred_check_branch
        %105 = sbr.rel (%p103) target = $region24
      $region23: #{tpu_custom_call.1} parent=19 // pred_region
        %s106 = smul.u32 416, %s8
        %p107 = scmp.lt.s32.totalorder %s106, 10815
        %s108 = scalar_select %p107, %s106, 10815
        %s109 = smul.addr %s108, 4
        %s110 = scalar_lea.vmem %s0, %s109
        %s111 = smul.u32 416, %s8
      $region24: #{tpu_custom_call.1} parent=19 // pred_fallthru
        _
    $region20: #{tpu_custom_call.1} parent=5 // pred_fallthru
      _
    %p112 = scmp.le.s32.totalorder 1, %s8
    %p113 = scmp.lt.s32.totalorder %s8, 27
    %p114 = pnand %p112, %p113
    %p115 = pneg %p114
    // Predicated region
    $region25: #{tpu_custom_call.1} parent=5 // pred_check
      _
    $region26: #{tpu_custom_call.1} parent=5 // pred_check_branch
      %117 = sbr.rel (%p114) target = $region28
    $region27: #{tpu_custom_call.1} parent=5 // pred_region
      %s118 = ssub.s32 %s8, 1
      %s119 = smul.u32 416, %s13
      %p120 = scmp.lt.s32.totalorder %s119, 10815
      %s121 = scalar_select %p120, %s119, 10815
      %s122 = smul.addr %s121, 4
      %s123 = scalar_lea.vmem %s0, %s122
      %p124 = pneg %p34
      %p125 = pneg %p31
      %p126 = pneg %p55
      %p127 = pneg %p52
      %p128 = pneg %p81
      %p129 = pneg %p78
      %s130 = smul.u32 416, %s13
      %p131 = scmp.lt.s32.totalorder %s130, 10815
      %s132 = scalar_select %p131, %s130, 10815
      %s133 = smul.addr %s132, 8
      %s134 = scalar_lea.vmem %s2, %s133
      %s135 = smul.u32 416, %s13
      %p136 = scmp.lt.s32.totalorder %s135, 10815
      %s137 = scalar_select %p136, %s135, 10815
      %s138 = smul.addr %s137, 4
      %s139 = scalar_lea.vmem %s0, %s138
      %s140 = smul.u32 416, %s13
      %s141 = smul.u32 416, %s13
      %p142 = scmp.lt.s32.totalorder %s141, 10815
      %s143 = scalar_select %p142, %s141, 10815
      %s144 = smul.addr %s143, 8
      %s145 = scalar_lea.vmem %s2, %s144
      %s146 = smul.u32 416, %s13
      %v148 = vld [vmem:[%s139] sm:$0xf]
      %v149 = vld [vmem:[%s139 + $0x4] sm:$0xf]
      %v150 = vld [vmem:[%s139 + $0x8] sm:$0xf]
      %v151 = vld [vmem:[%s139 + $0xc] sm:$0xf]
      %v152 = vld [vmem:[%s139 + $0x10] sm:$0xf]
      %v153 = vld [vmem:[%s139 + $0x14] sm:$0xf]
      %v154 = vld [vmem:[%s139 + $0x18] sm:$0xf]
      %v155 = vld [vmem:[%s139 + $0x1c] sm:$0xf]
      %v156 = vld [vmem:[%s139 + $0x20] sm:$0xf]
      %v157 = vld [vmem:[%s139 + $0x24] sm:$0xf]
      %v158 = vld [vmem:[%s139 + $0x28] sm:$0xf]
      %v159 = vld [vmem:[%s139 + $0x2c] sm:$0xf]
      %v160 = vld [vmem:[%s139 + $0x30] sm:$0xf]
      %v161 = vld [vmem:[%s139 + $0x34] sm:$0xf]
      %v162 = vld [vmem:[%s139 + $0x38] sm:$0xf]
      %v163 = vld [vmem:[%s139 + $0x3c] sm:$0xf]
      %v164 = vld [vmem:[%s139 + $0x40] sm:$0xf]
      %v165 = vld [vmem:[%s139 + $0x44] sm:$0xf]
      %v166 = vld [vmem:[%s139 + $0x48] sm:$0xf]
      %v167 = vld [vmem:[%s139 + $0x4c] sm:$0xf]
      %v168 = vld [vmem:[%s139 + $0x50] sm:$0xf]
      %v169 = vld [vmem:[%s139 + $0x54] sm:$0xf]
      %v170 = vld [vmem:[%s139 + $0x58] sm:$0xf]
      %v171 = vld [vmem:[%s139 + $0x5c] sm:$0xf]
      %v172 = vld [vmem:[%s139 + $0x60] sm:$0xf]
      %v173 = vld [vmem:[%s139 + $0x64] sm:$0xf]
      %v174 = vld [vmem:[%s139 + $0x68] sm:$0xf]
      %v175 = vld [vmem:[%s139 + $0x6c] sm:$0xf]
      %v176 = vld [vmem:[%s139 + $0x70] sm:$0xf]
      %v177 = vld [vmem:[%s139 + $0x74] sm:$0xf]
      %v178 = vld [vmem:[%s139 + $0x78] sm:$0xf]
      %v179 = vld [vmem:[%s139 + $0x7c] sm:$0xf]
      %v180 = vld [vmem:[%s139 + $0x80] sm:$0xf]
      %v181 = vld [vmem:[%s139 + $0x84] sm:$0xf]
      %v182 = vld [vmem:[%s139 + $0x88] sm:$0xf]
      %v183 = vld [vmem:[%s139 + $0x8c] sm:$0xf]
      %v184 = vld [vmem:[%s139 + $0x90] sm:$0xf]
      %v185 = vld [vmem:[%s139 + $0x94] sm:$0xf]
      %v186 = vld [vmem:[%s139 + $0x98] sm:$0xf]
      %v187 = vld [vmem:[%s139 + $0x9c] sm:$0xf]
      %v188 = vld [vmem:[%s139 + $0xa0] sm:$0xf]
      %v189 = vld [vmem:[%s139 + $0xa4] sm:$0xf]
      %v190 = vld [vmem:[%s139 + $0xa8] sm:$0xf]
      %v191 = vld [vmem:[%s139 + $0xac] sm:$0xf]
      %v192 = vld [vmem:[%s139 + $0xb0] sm:$0xf]
      %v193 = vld [vmem:[%s139 + $0xb4] sm:$0xf]
      %v194 = vld [vmem:[%s139 + $0xb8] sm:$0xf]
      %v195 = vld [vmem:[%s139 + $0xbc] sm:$0xf]
      %v196 = vld [vmem:[%s139 + $0xc0] sm:$0xf]
      %v197 = vld [vmem:[%s139 + $0xc4] sm:$0xf]
      %v198 = vld [vmem:[%s139 + $0xc8] sm:$0xf]
      %v199 = vld [vmem:[%s139 + $0xcc] sm:$0xf]
      %v200 = vld [vmem:[%s139 + $0xd0] sm:$0xf]
      %v201 = vld [vmem:[%s139 + $0xd4] sm:$0xf]
      %v202 = vld [vmem:[%s139 + $0xd8] sm:$0xf]
      %v203 = vld [vmem:[%s139 + $0xdc] sm:$0xf]
      %v204 = vld [vmem:[%s139 + $0xe0] sm:$0xf]
      %v205 = vld [vmem:[%s139 + $0xe4] sm:$0xf]
      %v206 = vld [vmem:[%s139 + $0xe8] sm:$0xf]
      %v207 = vld [vmem:[%s139 + $0xec] sm:$0xf]
      %v208 = vld [vmem:[%s139 + $0xf0] sm:$0xf]
      %v209 = vld [vmem:[%s139 + $0xf4] sm:$0xf]
      %v210 = vld [vmem:[%s139 + $0xf8] sm:$0xf]
      %v211 = vld [vmem:[%s139 + $0xfc] sm:$0xf]
      %v212 = vld [vmem:[%s139 + $0x100] sm:$0xf]
      %v213 = vld [vmem:[%s139 + $0x104] sm:$0xf]
      %v214 = vld [vmem:[%s139 + $0x108] sm:$0xf]
      %v215 = vld [vmem:[%s139 + $0x10c] sm:$0xf]
      %v216 = vld [vmem:[%s139 + $0x110] sm:$0xf]
      %v217 = vld [vmem:[%s139 + $0x114] sm:$0xf]
      %v218 = vld [vmem:[%s139 + $0x118] sm:$0xf]
      %v219 = vld [vmem:[%s139 + $0x11c] sm:$0xf]
      %v220 = vld [vmem:[%s139 + $0x120] sm:$0xf]
      %v221 = vld [vmem:[%s139 + $0x124] sm:$0xf]
      %v222 = vld [vmem:[%s139 + $0x128] sm:$0xf]
      %v223 = vld [vmem:[%s139 + $0x12c] sm:$0xf]
      %v224 = vld [vmem:[%s139 + $0x130] sm:$0xf]
      %v225 = vld [vmem:[%s139 + $0x134] sm:$0xf]
      %v226 = vld [vmem:[%s139 + $0x138] sm:$0xf]
      %v227 = vld [vmem:[%s139 + $0x13c] sm:$0xf]
      %v228 = vld [vmem:[%s139 + $0x140] sm:$0xf]
      %v229 = vld [vmem:[%s139 + $0x144] sm:$0xf]
      %v230 = vld [vmem:[%s139 + $0x148] sm:$0xf]
      %v231 = vld [vmem:[%s139 + $0x14c] sm:$0xf]
      %v232 = vld [vmem:[%s139 + $0x150] sm:$0xf]
      %v233 = vld [vmem:[%s139 + $0x154] sm:$0xf]
      %v234 = vld [vmem:[%s139 + $0x158] sm:$0xf]
      %v235 = vld [vmem:[%s139 + $0x15c] sm:$0xf]
      %v236 = vld [vmem:[%s139 + $0x160] sm:$0xf]
      %v237 = vld [vmem:[%s139 + $0x164] sm:$0xf]
      %v238 = vld [vmem:[%s139 + $0x168] sm:$0xf]
      %v239 = vld [vmem:[%s139 + $0x16c] sm:$0xf]
      %v240 = vld [vmem:[%s139 + $0x170] sm:$0xf]
      %v241 = vld [vmem:[%s139 + $0x174] sm:$0xf]
      %v242 = vld [vmem:[%s139 + $0x178] sm:$0xf]
      %v243 = vld [vmem:[%s139 + $0x17c] sm:$0xf]
      %v244 = vld [vmem:[%s139 + $0x180] sm:$0xf]
      %v245 = vld [vmem:[%s139 + $0x184] sm:$0xf]
      %v246 = vld [vmem:[%s139 + $0x188] sm:$0xf]
      %v247 = vld [vmem:[%s139 + $0x18c] sm:$0xf]
      %v248 = vld [vmem:[%s139 + $0x190] sm:$0xf]
      %v249 = vld [vmem:[%s139 + $0x194] sm:$0xf]
      %v250 = vld [vmem:[%s139 + $0x198] sm:$0xf]
      %v251 = vld [vmem:[%s139 + $0x19c] sm:$0xf]
      %v252 = vld [vmem:[%s139 + $0x1a0] sm:$0xf]
      %v253 = vld [vmem:[%s139 + $0x1a4] sm:$0xf]
      %v254 = vld [vmem:[%s139 + $0x1a8] sm:$0xf]
      %v255 = vld [vmem:[%s139 + $0x1ac] sm:$0xf]
      %v256 = vld [vmem:[%s139 + $0x1b0] sm:$0xf]
      %v257 = vld [vmem:[%s139 + $0x1b4] sm:$0xf]
      %v258 = vld [vmem:[%s139 + $0x1b8] sm:$0xf]
      %v259 = vld [vmem:[%s139 + $0x1bc] sm:$0xf]
      %v260 = vld [vmem:[%s139 + $0x1c0] sm:$0xf]
      %v261 = vld [vmem:[%s139 + $0x1c4] sm:$0xf]
      %v262 = vld [vmem:[%s139 + $0x1c8] sm:$0xf]
      %v263 = vld [vmem:[%s139 + $0x1cc] sm:$0xf]
      %v264 = vld [vmem:[%s139 + $0x1d0] sm:$0xf]
      %v265 = vld [vmem:[%s139 + $0x1d4] sm:$0xf]
      %v266 = vld [vmem:[%s139 + $0x1d8] sm:$0xf]
      %v267 = vld [vmem:[%s139 + $0x1dc] sm:$0xf]
      %v268 = vld [vmem:[%s139 + $0x1e0] sm:$0xf]
      %v269 = vld [vmem:[%s139 + $0x1e4] sm:$0xf]
      %v270 = vld [vmem:[%s139 + $0x1e8] sm:$0xf]
      %v271 = vld [vmem:[%s139 + $0x1ec] sm:$0xf]
      %v272 = vld [vmem:[%s139 + $0x1f0] sm:$0xf]
      %v273 = vld [vmem:[%s139 + $0x1f4] sm:$0xf]
      %v274 = vld [vmem:[%s139 + $0x1f8] sm:$0xf]
      %v275 = vld [vmem:[%s139 + $0x1fc] sm:$0xf]
      %v276 = vld [vmem:[%s139 + $0x200] sm:$0xf]
      %v277 = vld [vmem:[%s139 + $0x204] sm:$0xf]
      %v278 = vld [vmem:[%s139 + $0x208] sm:$0xf]
      %v279 = vld [vmem:[%s139 + $0x20c] sm:$0xf]
      %v280 = vld [vmem:[%s139 + $0x210] sm:$0xf]
      %v281 = vld [vmem:[%s139 + $0x214] sm:$0xf]
      %v282 = vld [vmem:[%s139 + $0x218] sm:$0xf]
      %v283 = vld [vmem:[%s139 + $0x21c] sm:$0xf]
      %v284 = vld [vmem:[%s139 + $0x220] sm:$0xf]
      %v285 = vld [vmem:[%s139 + $0x224] sm:$0xf]
      %v286 = vld [vmem:[%s139 + $0x228] sm:$0xf]
      %v287 = vld [vmem:[%s139 + $0x22c] sm:$0xf]
      %v288 = vld [vmem:[%s139 + $0x230] sm:$0xf]
      %v289 = vld [vmem:[%s139 + $0x234] sm:$0xf]
      %v290 = vld [vmem:[%s139 + $0x238] sm:$0xf]
      %v291 = vld [vmem:[%s139 + $0x23c] sm:$0xf]
      %v292 = vld [vmem:[%s139 + $0x240] sm:$0xf]
      %v293 = vld [vmem:[%s139 + $0x244] sm:$0xf]
      %v294 = vld [vmem:[%s139 + $0x248] sm:$0xf]
      %v295 = vld [vmem:[%s139 + $0x24c] sm:$0xf]
      %v296 = vld [vmem:[%s139 + $0x250] sm:$0xf]
      %v297 = vld [vmem:[%s139 + $0x254] sm:$0xf]
      %v298 = vld [vmem:[%s139 + $0x258] sm:$0xf]
      %v299 = vld [vmem:[%s139 + $0x25c] sm:$0xf]
      %v300 = vld [vmem:[%s139 + $0x260] sm:$0xf]
      %v301 = vld [vmem:[%s139 + $0x264] sm:$0xf]
      %v302 = vld [vmem:[%s139 + $0x268] sm:$0xf]
      %v303 = vld [vmem:[%s139 + $0x26c] sm:$0xf]
      %v304 = vld [vmem:[%s139 + $0x270] sm:$0xf]
      %v305 = vld [vmem:[%s139 + $0x274] sm:$0xf]
      %v306 = vld [vmem:[%s139 + $0x278] sm:$0xf]
      %v307 = vld [vmem:[%s139 + $0x27c] sm:$0xf]
      %v308 = vld [vmem:[%s139 + $0x280] sm:$0xf]
      %v309 = vld [vmem:[%s139 + $0x284] sm:$0xf]
      %v310 = vld [vmem:[%s139 + $0x288] sm:$0xf]
      %v311 = vld [vmem:[%s139 + $0x28c] sm:$0xf]
      %v312 = vld [vmem:[%s139 + $0x290] sm:$0xf]
      %v313 = vld [vmem:[%s139 + $0x294] sm:$0xf]
      %v314 = vld [vmem:[%s139 + $0x298] sm:$0xf]
      %v315 = vld [vmem:[%s139 + $0x29c] sm:$0xf]
      %v316 = vld [vmem:[%s139 + $0x2a0] sm:$0xf]
      %v317 = vld [vmem:[%s139 + $0x2a4] sm:$0xf]
      %v318 = vld [vmem:[%s139 + $0x2a8] sm:$0xf]
      %v319 = vld [vmem:[%s139 + $0x2ac] sm:$0xf]
      %v320 = vld [vmem:[%s139 + $0x2b0] sm:$0xf]
      %v321 = vld [vmem:[%s139 + $0x2b4] sm:$0xf]
      %v322 = vld [vmem:[%s139 + $0x2b8] sm:$0xf]
      %v323 = vld [vmem:[%s139 + $0x2bc] sm:$0xf]
      %v324 = vld [vmem:[%s139 + $0x2c0] sm:$0xf]
      %v325 = vld [vmem:[%s139 + $0x2c4] sm:$0xf]
      %v326 = vld [vmem:[%s139 + $0x2c8] sm:$0xf]
      %v327 = vld [vmem:[%s139 + $0x2cc] sm:$0xf]
      %v328 = vld [vmem:[%s139 + $0x2d0] sm:$0xf]
      %v329 = vld [vmem:[%s139 + $0x2d4] sm:$0xf]
      %v330 = vld [vmem:[%s139 + $0x2d8] sm:$0xf]
      %v331 = vld [vmem:[%s139 + $0x2dc] sm:$0xf]
      %v332 = vld [vmem:[%s139 + $0x2e0] sm:$0xf]
      %v333 = vld [vmem:[%s139 + $0x2e4] sm:$0xf]
      %v334 = vld [vmem:[%s139 + $0x2e8] sm:$0xf]
      %v335 = vld [vmem:[%s139 + $0x2ec] sm:$0xf]
      %v336 = vld [vmem:[%s139 + $0x2f0] sm:$0xf]
      %v337 = vld [vmem:[%s139 + $0x2f4] sm:$0xf]
      %v338 = vld [vmem:[%s139 + $0x2f8] sm:$0xf]
      %v339 = vld [vmem:[%s139 + $0x2fc] sm:$0xf]
      %v340 = vld [vmem:[%s139 + $0x300] sm:$0xf]
      %v341 = vld [vmem:[%s139 + $0x304] sm:$0xf]
      %v342 = vld [vmem:[%s139 + $0x308] sm:$0xf]
      %v343 = vld [vmem:[%s139 + $0x30c] sm:$0xf]
      %v344 = vld [vmem:[%s139 + $0x310] sm:$0xf]
      %v345 = vld [vmem:[%s139 + $0x314] sm:$0xf]
      %v346 = vld [vmem:[%s139 + $0x318] sm:$0xf]
      %v347 = vld [vmem:[%s139 + $0x31c] sm:$0xf]
      %v348 = vld [vmem:[%s139 + $0x320] sm:$0xf]
      %v349 = vld [vmem:[%s139 + $0x324] sm:$0xf]
      %v350 = vld [vmem:[%s139 + $0x328] sm:$0xf]
      %v351 = vld [vmem:[%s139 + $0x32c] sm:$0xf]
      %v352 = vld [vmem:[%s139 + $0x330] sm:$0xf]
      %v353 = vld [vmem:[%s139 + $0x334] sm:$0xf]
      %v354 = vld [vmem:[%s139 + $0x338] sm:$0xf]
      %v355 = vld [vmem:[%s139 + $0x33c] sm:$0xf]
      %v356 = vld [vmem:[%s139 + $0x340] sm:$0xf]
      %v357 = vld [vmem:[%s139 + $0x344] sm:$0xf]
      %v358 = vld [vmem:[%s139 + $0x348] sm:$0xf]
      %v359 = vld [vmem:[%s139 + $0x34c] sm:$0xf]
      %v360 = vld [vmem:[%s139 + $0x350] sm:$0xf]
      %v361 = vld [vmem:[%s139 + $0x354] sm:$0xf]
      %v362 = vld [vmem:[%s139 + $0x358] sm:$0xf]
      %v363 = vld [vmem:[%s139 + $0x35c] sm:$0xf]
      %v364 = vld [vmem:[%s139 + $0x360] sm:$0xf]
      %v365 = vld [vmem:[%s139 + $0x364] sm:$0xf]
      %v366 = vld [vmem:[%s139 + $0x368] sm:$0xf]
      %v367 = vld [vmem:[%s139 + $0x36c] sm:$0xf]
      %v368 = vld [vmem:[%s139 + $0x370] sm:$0xf]
      %v369 = vld [vmem:[%s139 + $0x374] sm:$0xf]
      %v370 = vld [vmem:[%s139 + $0x378] sm:$0xf]
      %v371 = vld [vmem:[%s139 + $0x37c] sm:$0xf]
      %v372 = vld [vmem:[%s139 + $0x380] sm:$0xf]
      %v373 = vld [vmem:[%s139 + $0x384] sm:$0xf]
      %v374 = vld [vmem:[%s139 + $0x388] sm:$0xf]
      %v375 = vld [vmem:[%s139 + $0x38c] sm:$0xf]
      %v376 = vld [vmem:[%s139 + $0x390] sm:$0xf]
      %v377 = vld [vmem:[%s139 + $0x394] sm:$0xf]
      %v378 = vld [vmem:[%s139 + $0x398] sm:$0xf]
      %v379 = vld [vmem:[%s139 + $0x39c] sm:$0xf]
      %v380 = vld [vmem:[%s139 + $0x3a0] sm:$0xf]
      %v381 = vld [vmem:[%s139 + $0x3a4] sm:$0xf]
      %v382 = vld [vmem:[%s139 + $0x3a8] sm:$0xf]
      %v383 = vld [vmem:[%s139 + $0x3ac] sm:$0xf]
      %v384 = vld [vmem:[%s139 + $0x3b0] sm:$0xf]
      %v385 = vld [vmem:[%s139 + $0x3b4] sm:$0xf]
      %v386 = vld [vmem:[%s139 + $0x3b8] sm:$0xf]
      %v387 = vld [vmem:[%s139 + $0x3bc] sm:$0xf]
      %v388 = vld [vmem:[%s139 + $0x3c0] sm:$0xf]
      %v389 = vld [vmem:[%s139 + $0x3c4] sm:$0xf]
      %v390 = vld [vmem:[%s139 + $0x3c8] sm:$0xf]
      %v391 = vld [vmem:[%s139 + $0x3cc] sm:$0xf]
      %v392 = vld [vmem:[%s139 + $0x3d0] sm:$0xf]
      %v393 = vld [vmem:[%s139 + $0x3d4] sm:$0xf]
      %v394 = vld [vmem:[%s139 + $0x3d8] sm:$0xf]
      %v395 = vld [vmem:[%s139 + $0x3dc] sm:$0xf]
      %v396 = vld [vmem:[%s139 + $0x3e0] sm:$0xf]
      %v397 = vld [vmem:[%s139 + $0x3e4] sm:$0xf]
      %v398 = vld [vmem:[%s139 + $0x3e8] sm:$0xf]
      %v399 = vld [vmem:[%s139 + $0x3ec] sm:$0xf]
      %v400 = vld [vmem:[%s139 + $0x3f0] sm:$0xf]
      %v401 = vld [vmem:[%s139 + $0x3f4] sm:$0xf]
      %v402 = vld [vmem:[%s139 + $0x3f8] sm:$0xf]
      %v403 = vld [vmem:[%s139 + $0x3fc] sm:$0xf]
      %v404 = vld [vmem:[%s139 + $0x400] sm:$0xf]
      %v405 = vld [vmem:[%s139 + $0x404] sm:$0xf]
      %v406 = vld [vmem:[%s139 + $0x408] sm:$0xf]
      %v407 = vld [vmem:[%s139 + $0x40c] sm:$0xf]
      %v408 = vld [vmem:[%s139 + $0x410] sm:$0xf]
      %v409 = vld [vmem:[%s139 + $0x414] sm:$0xf]
      %v410 = vld [vmem:[%s139 + $0x418] sm:$0xf]
      %v411 = vld [vmem:[%s139 + $0x41c] sm:$0xf]
      %v412 = vld [vmem:[%s139 + $0x420] sm:$0xf]
      %v413 = vld [vmem:[%s139 + $0x424] sm:$0xf]
      %v414 = vld [vmem:[%s139 + $0x428] sm:$0xf]
      %v415 = vld [vmem:[%s139 + $0x42c] sm:$0xf]
      %v416 = vld [vmem:[%s139 + $0x430] sm:$0xf]
      %v417 = vld [vmem:[%s139 + $0x434] sm:$0xf]
      %v418 = vld [vmem:[%s139 + $0x438] sm:$0xf]
      %v419 = vld [vmem:[%s139 + $0x43c] sm:$0xf]
      %v420 = vld [vmem:[%s139 + $0x440] sm:$0xf]
      %v421 = vld [vmem:[%s139 + $0x444] sm:$0xf]
      %v422 = vld [vmem:[%s139 + $0x448] sm:$0xf]
      %v423 = vld [vmem:[%s139 + $0x44c] sm:$0xf]
      %v424 = vld [vmem:[%s139 + $0x450] sm:$0xf]
      %v425 = vld [vmem:[%s139 + $0x454] sm:$0xf]
      %v426 = vld [vmem:[%s139 + $0x458] sm:$0xf]
      %v427 = vld [vmem:[%s139 + $0x45c] sm:$0xf]
      %v428 = vld [vmem:[%s139 + $0x460] sm:$0xf]
      %v429 = vld [vmem:[%s139 + $0x464] sm:$0xf]
      %v430 = vld [vmem:[%s139 + $0x468] sm:$0xf]
      %v431 = vld [vmem:[%s139 + $0x46c] sm:$0xf]
      %v432 = vld [vmem:[%s139 + $0x470] sm:$0xf]
      %v433 = vld [vmem:[%s139 + $0x474] sm:$0xf]
      %v434 = vld [vmem:[%s139 + $0x478] sm:$0xf]
      %v435 = vld [vmem:[%s139 + $0x47c] sm:$0xf]
      %v436 = vld [vmem:[%s139 + $0x480] sm:$0xf]
      %v437 = vld [vmem:[%s139 + $0x484] sm:$0xf]
      %v438 = vld [vmem:[%s139 + $0x488] sm:$0xf]
      %v439 = vld [vmem:[%s139 + $0x48c] sm:$0xf]
      %v440 = vld [vmem:[%s139 + $0x490] sm:$0xf]
      %v441 = vld [vmem:[%s139 + $0x494] sm:$0xf]
      %v442 = vld [vmem:[%s139 + $0x498] sm:$0xf]
      %v443 = vld [vmem:[%s139 + $0x49c] sm:$0xf]
      %v444 = vld [vmem:[%s139 + $0x4a0] sm:$0xf]
      %v445 = vld [vmem:[%s139 + $0x4a4] sm:$0xf]
      %v446 = vld [vmem:[%s139 + $0x4a8] sm:$0xf]
      %v447 = vld [vmem:[%s139 + $0x4ac] sm:$0xf]
      %v448 = vld [vmem:[%s139 + $0x4b0] sm:$0xf]
      %v449 = vld [vmem:[%s139 + $0x4b4] sm:$0xf]
      %v450 = vld [vmem:[%s139 + $0x4b8] sm:$0xf]
      %v451 = vld [vmem:[%s139 + $0x4bc] sm:$0xf]
      %v452 = vld [vmem:[%s139 + $0x4c0] sm:$0xf]
      %v453 = vld [vmem:[%s139 + $0x4c4] sm:$0xf]
      %v454 = vld [vmem:[%s139 + $0x4c8] sm:$0xf]
      %v455 = vld [vmem:[%s139 + $0x4cc] sm:$0xf]
      %v456 = vld [vmem:[%s139 + $0x4d0] sm:$0xf]
      %v457 = vld [vmem:[%s139 + $0x4d4] sm:$0xf]
      %v458 = vld [vmem:[%s139 + $0x4d8] sm:$0xf]
      %v459 = vld [vmem:[%s139 + $0x4dc] sm:$0xf]
      %v460 = vld [vmem:[%s139 + $0x4e0] sm:$0xf]
      %v461 = vld [vmem:[%s139 + $0x4e4] sm:$0xf]
      %v462 = vld [vmem:[%s139 + $0x4e8] sm:$0xf]
      %v463 = vld [vmem:[%s139 + $0x4ec] sm:$0xf]
      %v464 = vld [vmem:[%s139 + $0x4f0] sm:$0xf]
      %v465 = vld [vmem:[%s139 + $0x4f4] sm:$0xf]
      %v466 = vld [vmem:[%s139 + $0x4f8] sm:$0xf]
      %v467 = vld [vmem:[%s139 + $0x4fc] sm:$0xf]
      %v468 = vld [vmem:[%s139 + $0x500] sm:$0xf]
      %v469 = vld [vmem:[%s139 + $0x504] sm:$0xf]
      %v470 = vld [vmem:[%s139 + $0x508] sm:$0xf]
      %v471 = vld [vmem:[%s139 + $0x50c] sm:$0xf]
      %v472 = vld [vmem:[%s139 + $0x510] sm:$0xf]
      %v473 = vld [vmem:[%s139 + $0x514] sm:$0xf]
      %v474 = vld [vmem:[%s139 + $0x518] sm:$0xf]
      %v475 = vld [vmem:[%s139 + $0x51c] sm:$0xf]
      %v476 = vld [vmem:[%s139 + $0x520] sm:$0xf]
      %v477 = vld [vmem:[%s139 + $0x524] sm:$0xf]
      %v478 = vld [vmem:[%s139 + $0x528] sm:$0xf]
      %v479 = vld [vmem:[%s139 + $0x52c] sm:$0xf]
      %v480 = vld [vmem:[%s139 + $0x530] sm:$0xf]
      %v481 = vld [vmem:[%s139 + $0x534] sm:$0xf]
      %v482 = vld [vmem:[%s139 + $0x538] sm:$0xf]
      %v483 = vld [vmem:[%s139 + $0x53c] sm:$0xf]
      %v484 = vld [vmem:[%s139 + $0x540] sm:$0xf]
      %v485 = vld [vmem:[%s139 + $0x544] sm:$0xf]
      %v486 = vld [vmem:[%s139 + $0x548] sm:$0xf]
      %v487 = vld [vmem:[%s139 + $0x54c] sm:$0xf]
      %v488 = vld [vmem:[%s139 + $0x550] sm:$0xf]
      %v489 = vld [vmem:[%s139 + $0x554] sm:$0xf]
      %v490 = vld [vmem:[%s139 + $0x558] sm:$0xf]
      %v491 = vld [vmem:[%s139 + $0x55c] sm:$0xf]
      %v492 = vld [vmem:[%s139 + $0x560] sm:$0xf]
      %v493 = vld [vmem:[%s139 + $0x564] sm:$0xf]
      %v494 = vld [vmem:[%s139 + $0x568] sm:$0xf]
      %v495 = vld [vmem:[%s139 + $0x56c] sm:$0xf]
      %v496 = vld [vmem:[%s139 + $0x570] sm:$0xf]
      %v497 = vld [vmem:[%s139 + $0x574] sm:$0xf]
      %v498 = vld [vmem:[%s139 + $0x578] sm:$0xf]
      %v499 = vld [vmem:[%s139 + $0x57c] sm:$0xf]
      %v500 = vld [vmem:[%s139 + $0x580] sm:$0xf]
      %v501 = vld [vmem:[%s139 + $0x584] sm:$0xf]
      %v502 = vld [vmem:[%s139 + $0x588] sm:$0xf]
      %v503 = vld [vmem:[%s139 + $0x58c] sm:$0xf]
      %v504 = vld [vmem:[%s139 + $0x590] sm:$0xf]
      %v505 = vld [vmem:[%s139 + $0x594] sm:$0xf]
      %v506 = vld [vmem:[%s139 + $0x598] sm:$0xf]
      %v507 = vld [vmem:[%s139 + $0x59c] sm:$0xf]
      %v508 = vld [vmem:[%s139 + $0x5a0] sm:$0xf]
      %v509 = vld [vmem:[%s139 + $0x5a4] sm:$0xf]
      %v510 = vld [vmem:[%s139 + $0x5a8] sm:$0xf]
      %v511 = vld [vmem:[%s139 + $0x5ac] sm:$0xf]
      %v512 = vld [vmem:[%s139 + $0x5b0] sm:$0xf]
      %v513 = vld [vmem:[%s139 + $0x5b4] sm:$0xf]
      %v514 = vld [vmem:[%s139 + $0x5b8] sm:$0xf]
      %v515 = vld [vmem:[%s139 + $0x5bc] sm:$0xf]
      %v516 = vld [vmem:[%s139 + $0x5c0] sm:$0xf]
      %v517 = vld [vmem:[%s139 + $0x5c4] sm:$0xf]
      %v518 = vld [vmem:[%s139 + $0x5c8] sm:$0xf]
      %v519 = vld [vmem:[%s139 + $0x5cc] sm:$0xf]
      %v520 = vld [vmem:[%s139 + $0x5d0] sm:$0xf]
      %v521 = vld [vmem:[%s139 + $0x5d4] sm:$0xf]
      %v522 = vld [vmem:[%s139 + $0x5d8] sm:$0xf]
      %v523 = vld [vmem:[%s139 + $0x5dc] sm:$0xf]
      %v524 = vld [vmem:[%s139 + $0x5e0] sm:$0xf]
      %v525 = vld [vmem:[%s139 + $0x5e4] sm:$0xf]
      %v526 = vld [vmem:[%s139 + $0x5e8] sm:$0xf]
      %v527 = vld [vmem:[%s139 + $0x5ec] sm:$0xf]
      %v528 = vld [vmem:[%s139 + $0x5f0] sm:$0xf]
      %v529 = vld [vmem:[%s139 + $0x5f4] sm:$0xf]
      %v530 = vld [vmem:[%s139 + $0x5f8] sm:$0xf]
      %v531 = vld [vmem:[%s139 + $0x5fc] sm:$0xf]
      %v532 = vld [vmem:[%s139 + $0x600] sm:$0xf]
      %v533 = vld [vmem:[%s139 + $0x604] sm:$0xf]
      %v534 = vld [vmem:[%s139 + $0x608] sm:$0xf]
      %v535 = vld [vmem:[%s139 + $0x60c] sm:$0xf]
      %v536 = vld [vmem:[%s139 + $0x610] sm:$0xf]
      %v537 = vld [vmem:[%s139 + $0x614] sm:$0xf]
      %v538 = vld [vmem:[%s139 + $0x618] sm:$0xf]
      %v539 = vld [vmem:[%s139 + $0x61c] sm:$0xf]
      %v540 = vld [vmem:[%s139 + $0x620] sm:$0xf]
      %v541 = vld [vmem:[%s139 + $0x624] sm:$0xf]
      %v542 = vld [vmem:[%s139 + $0x628] sm:$0xf]
      %v543 = vld [vmem:[%s139 + $0x62c] sm:$0xf]
      %v544 = vld [vmem:[%s139 + $0x630] sm:$0xf]
      %v545 = vld [vmem:[%s139 + $0x634] sm:$0xf]
      %v546 = vld [vmem:[%s139 + $0x638] sm:$0xf]
      %v547 = vld [vmem:[%s139 + $0x63c] sm:$0xf]
      %v548 = vld [vmem:[%s139 + $0x640] sm:$0xf]
      %v549 = vld [vmem:[%s139 + $0x644] sm:$0xf]
      %v550 = vld [vmem:[%s139 + $0x648] sm:$0xf]
      %v551 = vld [vmem:[%s139 + $0x64c] sm:$0xf]
      %v552 = vld [vmem:[%s139 + $0x650] sm:$0xf]
      %v553 = vld [vmem:[%s139 + $0x654] sm:$0xf]
      %v554 = vld [vmem:[%s139 + $0x658] sm:$0xf]
      %v555 = vld [vmem:[%s139 + $0x65c] sm:$0xf]
      %v556 = vld [vmem:[%s139 + $0x660] sm:$0xf]
      %v557 = vld [vmem:[%s139 + $0x664] sm:$0xf]
      %v558 = vld [vmem:[%s139 + $0x668] sm:$0xf]
      %v559 = vld [vmem:[%s139 + $0x66c] sm:$0xf]
      %v560 = vld [vmem:[%s139 + $0x670] sm:$0xf]
      %v561 = vld [vmem:[%s139 + $0x674] sm:$0xf]
      %v562 = vld [vmem:[%s139 + $0x678] sm:$0xf]
      %v563 = vld [vmem:[%s139 + $0x67c] sm:$0xf]
      %v564 = vld [vmem:[%s1] sm:$0xf]
      %v565 = vld [vmem:[%s1 + $0x4] sm:$0x1]
      %v982 = vunpack.c.l.b16 %v148
      %v983 = vunpack.c.l.b16 %v149
      %v984 = vunpack.c.l.b16 %v150
      %v985 = vunpack.c.l.b16 %v151
      %v986 = vunpack.c.l.b16 %v152
      %v987 = vunpack.c.l.b16 %v153
      %v988 = vunpack.c.l.b16 %v154
      %v989 = vunpack.c.l.b16 %v155
      %v990 = vunpack.c.l.b16 %v156
      %v991 = vunpack.c.l.b16 %v157
      %v992 = vunpack.c.l.b16 %v158
      %v993 = vunpack.c.l.b16 %v159
      %v994 = vunpack.c.l.b16 %v160
      %v995 = vunpack.c.l.b16 %v161
      %v996 = vunpack.c.l.b16 %v162
      %v997 = vunpack.c.l.b16 %v163
      %v998 = vunpack.c.l.b16 %v164
      %v999 = vunpack.c.l.b16 %v165
      %v1000 = vunpack.c.l.b16 %v166
      %v1001 = vunpack.c.l.b16 %v167
      %v1002 = vunpack.c.l.b16 %v168
      %v1003 = vunpack.c.l.b16 %v169
      %v1004 = vunpack.c.l.b16 %v170
      %v1005 = vunpack.c.l.b16 %v171
      %v1006 = vunpack.c.l.b16 %v172
      %v1007 = vunpack.c.l.b16 %v173
      %v1008 = vunpack.c.l.b16 %v174
      %v1009 = vunpack.c.l.b16 %v175
      %v1010 = vunpack.c.l.b16 %v176
      %v1011 = vunpack.c.l.b16 %v177
      %v1012 = vunpack.c.l.b16 %v178
      %v1013 = vunpack.c.l.b16 %v179
      %v1014 = vunpack.c.l.b16 %v180
      %v1015 = vunpack.c.l.b16 %v181
      %v1016 = vunpack.c.l.b16 %v182
      %v1017 = vunpack.c.l.b16 %v183
      %v1018 = vunpack.c.l.b16 %v184
      %v1019 = vunpack.c.l.b16 %v185
      %v1020 = vunpack.c.l.b16 %v186
      %v1021 = vunpack.c.l.b16 %v187
      %v1022 = vunpack.c.l.b16 %v188
      %v1023 = vunpack.c.l.b16 %v189
      %v1024 = vunpack.c.l.b16 %v190
      %v1025 = vunpack.c.l.b16 %v191
      %v1026 = vunpack.c.l.b16 %v192
      %v1027 = vunpack.c.l.b16 %v193
      %v1028 = vunpack.c.l.b16 %v194
      %v1029 = vunpack.c.l.b16 %v195
      %v1030 = vunpack.c.l.b16 %v196
      %v1031 = vunpack.c.l.b16 %v197
      %v1032 = vunpack.c.l.b16 %v198
      %v1033 = vunpack.c.l.b16 %v199
      %v1034 = vunpack.c.l.b16 %v200
      %v1035 = vunpack.c.l.b16 %v201
      %v1036 = vunpack.c.l.b16 %v202
      %v1037 = vunpack.c.l.b16 %v203
      %v1038 = vunpack.c.l.b16 %v204
      %v1039 = vunpack.c.l.b16 %v205
      %v1040 = vunpack.c.l.b16 %v206
      %v1041 = vunpack.c.l.b16 %v207
      %v1042 = vunpack.c.l.b16 %v208
      %v1043 = vunpack.c.l.b16 %v209
      %v1044 = vunpack.c.l.b16 %v210
      %v1045 = vunpack.c.l.b16 %v211
      %v1046 = vunpack.c.l.b16 %v212
      %v1047 = vunpack.c.l.b16 %v213
      %v1048 = vunpack.c.l.b16 %v214
      %v1049 = vunpack.c.l.b16 %v215
      %v1050 = vunpack.c.l.b16 %v216
      %v1051 = vunpack.c.l.b16 %v217
      %v1052 = vunpack.c.l.b16 %v218
      %v1053 = vunpack.c.l.b16 %v219
      %v1054 = vunpack.c.l.b16 %v220
      %v1055 = vunpack.c.l.b16 %v221
      %v1056 = vunpack.c.l.b16 %v222
      %v1057 = vunpack.c.l.b16 %v223
      %v1058 = vunpack.c.l.b16 %v224
      %v1059 = vunpack.c.l.b16 %v225
      %v1060 = vunpack.c.l.b16 %v226
      %v1061 = vunpack.c.l.b16 %v227
      %v1062 = vunpack.c.l.b16 %v228
      %v1063 = vunpack.c.l.b16 %v229
      %v1064 = vunpack.c.l.b16 %v230
      %v1065 = vunpack.c.l.b16 %v231
      %v1066 = vunpack.c.l.b16 %v232
      %v1067 = vunpack.c.l.b16 %v233
      %v1068 = vunpack.c.l.b16 %v234
      %v1069 = vunpack.c.l.b16 %v235
      %v1070 = vunpack.c.l.b16 %v236
      %v1071 = vunpack.c.l.b16 %v237
      %v1072 = vunpack.c.l.b16 %v238
      %v1073 = vunpack.c.l.b16 %v239
      %v1074 = vunpack.c.l.b16 %v240
      %v1075 = vunpack.c.l.b16 %v241
      %v1076 = vunpack.c.l.b16 %v242
      %v1077 = vunpack.c.l.b16 %v243
      %v1078 = vunpack.c.l.b16 %v244
      %v1079 = vunpack.c.l.b16 %v245
      %v1080 = vunpack.c.l.b16 %v246
      %v1081 = vunpack.c.l.b16 %v247
      %v1082 = vunpack.c.l.b16 %v248
      %v1083 = vunpack.c.l.b16 %v249
      %v1084 = vunpack.c.l.b16 %v250
      %v1085 = vunpack.c.l.b16 %v251
      %v1086 = vunpack.c.l.b16 %v252
      %v1087 = vunpack.c.l.b16 %v253
      %v1088 = vunpack.c.l.b16 %v254
      %v1089 = vunpack.c.l.b16 %v255
      %v1090 = vunpack.c.l.b16 %v256
      %v1091 = vunpack.c.l.b16 %v257
      %v1092 = vunpack.c.l.b16 %v258
      %v1093 = vunpack.c.l.b16 %v259
      %v1094 = vunpack.c.l.b16 %v260
      %v1095 = vunpack.c.l.b16 %v261
      %v1096 = vunpack.c.l.b16 %v262
      %v1097 = vunpack.c.l.b16 %v263
      %v1098 = vunpack.c.l.b16 %v264
      %v1099 = vunpack.c.l.b16 %v265
      %v1100 = vunpack.c.l.b16 %v266
      %v1101 = vunpack.c.l.b16 %v267
      %v1102 = vunpack.c.l.b16 %v268
      %v1103 = vunpack.c.l.b16 %v269
      %v1104 = vunpack.c.l.b16 %v270
      %v1105 = vunpack.c.l.b16 %v271
      %v1106 = vunpack.c.l.b16 %v272
      %v1107 = vunpack.c.l.b16 %v273
      %v1108 = vunpack.c.l.b16 %v274
      %v1109 = vunpack.c.l.b16 %v275
      %v1110 = vunpack.c.l.b16 %v276
      %v1111 = vunpack.c.l.b16 %v277
      %v1112 = vunpack.c.l.b16 %v278
      %v1113 = vunpack.c.l.b16 %v279
      %v1114 = vunpack.c.l.b16 %v280
      %v1115 = vunpack.c.l.b16 %v281
      %v1116 = vunpack.c.l.b16 %v282
      %v1117 = vunpack.c.l.b16 %v283
      %v1118 = vunpack.c.l.b16 %v284
      %v1119 = vunpack.c.l.b16 %v285
      %v1120 = vunpack.c.l.b16 %v286
      %v1121 = vunpack.c.l.b16 %v287
      %v1122 = vunpack.c.l.b16 %v288
      %v1123 = vunpack.c.l.b16 %v289
      %v1124 = vunpack.c.l.b16 %v290
      %v1125 = vunpack.c.l.b16 %v291
      %v1126 = vunpack.c.l.b16 %v292
      %v1127 = vunpack.c.l.b16 %v293
      %v1128 = vunpack.c.l.b16 %v294
      %v1129 = vunpack.c.l.b16 %v295
      %v1130 = vunpack.c.l.b16 %v296
      %v1131 = vunpack.c.l.b16 %v297
      %v1132 = vunpack.c.l.b16 %v298
      %v1133 = vunpack.c.l.b16 %v299
      %v1134 = vunpack.c.l.b16 %v300
      %v1135 = vunpack.c.l.b16 %v301
      %v1136 = vunpack.c.l.b16 %v302
      %v1137 = vunpack.c.l.b16 %v303
      %v1138 = vunpack.c.l.b16 %v304
      %v1139 = vunpack.c.l.b16 %v305
      %v1140 = vunpack.c.l.b16 %v306
      %v1141 = vunpack.c.l.b16 %v307
      %v1142 = vunpack.c.l.b16 %v308
      %v1143 = vunpack.c.l.b16 %v309
      %v1144 = vunpack.c.l.b16 %v310
      %v1145 = vunpack.c.l.b16 %v311
      %v1146 = vunpack.c.l.b16 %v312
      %v1147 = vunpack.c.l.b16 %v313
      %v1148 = vunpack.c.l.b16 %v314
      %v1149 = vunpack.c.l.b16 %v315
      %v1150 = vunpack.c.l.b16 %v316
      %v1151 = vunpack.c.l.b16 %v317
      %v1152 = vunpack.c.l.b16 %v318
      %v1153 = vunpack.c.l.b16 %v319
      %v1154 = vunpack.c.l.b16 %v320
      %v1155 = vunpack.c.l.b16 %v321
      %v1156 = vunpack.c.l.b16 %v322
      %v1157 = vunpack.c.l.b16 %v323
      %v1158 = vunpack.c.l.b16 %v324
      %v1159 = vunpack.c.l.b16 %v325
      %v1160 = vunpack.c.l.b16 %v326
      %v1161 = vunpack.c.l.b16 %v327
      %v1162 = vunpack.c.l.b16 %v328
      %v1163 = vunpack.c.l.b16 %v329
      %v1164 = vunpack.c.l.b16 %v330
      %v1165 = vunpack.c.l.b16 %v331
      %v1166 = vunpack.c.l.b16 %v332
      %v1167 = vunpack.c.l.b16 %v333
      %v1168 = vunpack.c.l.b16 %v334
      %v1169 = vunpack.c.l.b16 %v335
      %v1170 = vunpack.c.l.b16 %v336
      %v1171 = vunpack.c.l.b16 %v337
      %v1172 = vunpack.c.l.b16 %v338
      %v1173 = vunpack.c.l.b16 %v339
      %v1174 = vunpack.c.l.b16 %v340
      %v1175 = vunpack.c.l.b16 %v341
      %v1176 = vunpack.c.l.b16 %v342
      %v1177 = vunpack.c.l.b16 %v343
      %v1178 = vunpack.c.l.b16 %v344
      %v1179 = vunpack.c.l.b16 %v345
      %v1180 = vunpack.c.l.b16 %v346
      %v1181 = vunpack.c.l.b16 %v347
      %v1182 = vunpack.c.l.b16 %v348
      %v1183 = vunpack.c.l.b16 %v349
      %v1184 = vunpack.c.l.b16 %v350
      %v1185 = vunpack.c.l.b16 %v351
      %v1186 = vunpack.c.l.b16 %v352
      %v1187 = vunpack.c.l.b16 %v353
      %v1188 = vunpack.c.l.b16 %v354
      %v1189 = vunpack.c.l.b16 %v355
      %v1190 = vunpack.c.l.b16 %v356
      %v1191 = vunpack.c.l.b16 %v357
      %v1192 = vunpack.c.l.b16 %v358
      %v1193 = vunpack.c.l.b16 %v359
      %v1194 = vunpack.c.l.b16 %v360
      %v1195 = vunpack.c.l.b16 %v361
      %v1196 = vunpack.c.l.b16 %v362
      %v1197 = vunpack.c.l.b16 %v363
      %v1198 = vunpack.c.l.b16 %v364
      %v1199 = vunpack.c.l.b16 %v365
      %v1200 = vunpack.c.l.b16 %v366
      %v1201 = vunpack.c.l.b16 %v367
      %v1202 = vunpack.c.l.b16 %v368
      %v1203 = vunpack.c.l.b16 %v369
      %v1204 = vunpack.c.l.b16 %v370
      %v1205 = vunpack.c.l.b16 %v371
      %v1206 = vunpack.c.l.b16 %v372
      %v1207 = vunpack.c.l.b16 %v373
      %v1208 = vunpack.c.l.b16 %v374
      %v1209 = vunpack.c.l.b16 %v375
      %v1210 = vunpack.c.l.b16 %v376
      %v1211 = vunpack.c.l.b16 %v377
      %v1212 = vunpack.c.l.b16 %v378
      %v1213 = vunpack.c.l.b16 %v379
      %v1214 = vunpack.c.l.b16 %v380
      %v1215 = vunpack.c.l.b16 %v381
      %v1216 = vunpack.c.l.b16 %v382
      %v1217 = vunpack.c.l.b16 %v383
      %v1218 = vunpack.c.l.b16 %v384
      %v1219 = vunpack.c.l.b16 %v385
      %v1220 = vunpack.c.l.b16 %v386
      %v1221 = vunpack.c.l.b16 %v387
      %v1222 = vunpack.c.l.b16 %v388
      %v1223 = vunpack.c.l.b16 %v389
      %v1224 = vunpack.c.l.b16 %v390
      %v1225 = vunpack.c.l.b16 %v391
      %v1226 = vunpack.c.l.b16 %v392
      %v1227 = vunpack.c.l.b16 %v393
      %v1228 = vunpack.c.l.b16 %v394
      %v1229 = vunpack.c.l.b16 %v395
      %v1230 = vunpack.c.l.b16 %v396
      %v1231 = vunpack.c.l.b16 %v397
      %v1232 = vunpack.c.l.b16 %v398
      %v1233 = vunpack.c.l.b16 %v399
      %v1234 = vunpack.c.l.b16 %v400
      %v1235 = vunpack.c.l.b16 %v401
      %v1236 = vunpack.c.l.b16 %v402
      %v1237 = vunpack.c.l.b16 %v403
      %v1238 = vunpack.c.l.b16 %v404
      %v1239 = vunpack.c.l.b16 %v405
      %v1240 = vunpack.c.l.b16 %v406
      %v1241 = vunpack.c.l.b16 %v407
      %v1242 = vunpack.c.l.b16 %v408
      %v1243 = vunpack.c.l.b16 %v409
      %v1244 = vunpack.c.l.b16 %v410
      %v1245 = vunpack.c.l.b16 %v411
      %v1246 = vunpack.c.l.b16 %v412
      %v1247 = vunpack.c.l.b16 %v413
      %v1248 = vunpack.c.l.b16 %v414
      %v1249 = vunpack.c.l.b16 %v415
      %v1250 = vunpack.c.l.b16 %v416
      %v1251 = vunpack.c.l.b16 %v417
      %v1252 = vunpack.c.l.b16 %v418
      %v1253 = vunpack.c.l.b16 %v419
      %v1254 = vunpack.c.l.b16 %v420
      %v1255 = vunpack.c.l.b16 %v421
      %v1256 = vunpack.c.l.b16 %v422
      %v1257 = vunpack.c.l.b16 %v423
      %v1258 = vunpack.c.l.b16 %v424
      %v1259 = vunpack.c.l.b16 %v425
      %v1260 = vunpack.c.l.b16 %v426
      %v1261 = vunpack.c.l.b16 %v427
      %v1262 = vunpack.c.l.b16 %v428
      %v1263 = vunpack.c.l.b16 %v429
      %v1264 = vunpack.c.l.b16 %v430
      %v1265 = vunpack.c.l.b16 %v431
      %v1266 = vunpack.c.l.b16 %v432
      %v1267 = vunpack.c.l.b16 %v433
      %v1268 = vunpack.c.l.b16 %v434
      %v1269 = vunpack.c.l.b16 %v435
      %v1270 = vunpack.c.l.b16 %v436
      %v1271 = vunpack.c.l.b16 %v437
      %v1272 = vunpack.c.l.b16 %v438
      %v1273 = vunpack.c.l.b16 %v439
      %v1274 = vunpack.c.l.b16 %v440
      %v1275 = vunpack.c.l.b16 %v441
      %v1276 = vunpack.c.l.b16 %v442
      %v1277 = vunpack.c.l.b16 %v443
      %v1278 = vunpack.c.l.b16 %v444
      %v1279 = vunpack.c.l.b16 %v445
      %v1280 = vunpack.c.l.b16 %v446
      %v1281 = vunpack.c.l.b16 %v447
      %v1282 = vunpack.c.l.b16 %v448
      %v1283 = vunpack.c.l.b16 %v449
      %v1284 = vunpack.c.l.b16 %v450
      %v1285 = vunpack.c.l.b16 %v451
      %v1286 = vunpack.c.l.b16 %v452
      %v1287 = vunpack.c.l.b16 %v453
      %v1288 = vunpack.c.l.b16 %v454
      %v1289 = vunpack.c.l.b16 %v455
      %v1290 = vunpack.c.l.b16 %v456
      %v1291 = vunpack.c.l.b16 %v457
      %v1292 = vunpack.c.l.b16 %v458
      %v1293 = vunpack.c.l.b16 %v459
      %v1294 = vunpack.c.l.b16 %v460
      %v1295 = vunpack.c.l.b16 %v461
      %v1296 = vunpack.c.l.b16 %v462
      %v1297 = vunpack.c.l.b16 %v463
      %v1298 = vunpack.c.l.b16 %v464
      %v1299 = vunpack.c.l.b16 %v465
      %v1300 = vunpack.c.l.b16 %v466
      %v1301 = vunpack.c.l.b16 %v467
      %v1302 = vunpack.c.l.b16 %v468
      %v1303 = vunpack.c.l.b16 %v469
      %v1304 = vunpack.c.l.b16 %v470
      %v1305 = vunpack.c.l.b16 %v471
      %v1306 = vunpack.c.l.b16 %v472
      %v1307 = vunpack.c.l.b16 %v473
      %v1308 = vunpack.c.l.b16 %v474
      %v1309 = vunpack.c.l.b16 %v475
      %v1310 = vunpack.c.l.b16 %v476
      %v1311 = vunpack.c.l.b16 %v477
      %v1312 = vunpack.c.l.b16 %v478
      %v1313 = vunpack.c.l.b16 %v479
      %v1314 = vunpack.c.l.b16 %v480
      %v1315 = vunpack.c.l.b16 %v481
      %v1316 = vunpack.c.l.b16 %v482
      %v1317 = vunpack.c.l.b16 %v483
      %v1318 = vunpack.c.l.b16 %v484
      %v1319 = vunpack.c.l.b16 %v485
      %v1320 = vunpack.c.l.b16 %v486
      %v1321 = vunpack.c.l.b16 %v487
      %v1322 = vunpack.c.l.b16 %v488
      %v1323 = vunpack.c.l.b16 %v489
      %v1324 = vunpack.c.l.b16 %v490
      %v1325 = vunpack.c.l.b16 %v491
      %v1326 = vunpack.c.l.b16 %v492
      %v1327 = vunpack.c.l.b16 %v493
      %v1328 = vunpack.c.l.b16 %v494
      %v1329 = vunpack.c.l.b16 %v495
      %v1330 = vunpack.c.l.b16 %v496
      %v1331 = vunpack.c.l.b16 %v497
      %v1332 = vunpack.c.l.b16 %v498
      %v1333 = vunpack.c.l.b16 %v499
      %v1334 = vunpack.c.l.b16 %v500
      %v1335 = vunpack.c.l.b16 %v501
      %v1336 = vunpack.c.l.b16 %v502
      %v1337 = vunpack.c.l.b16 %v503
      %v1338 = vunpack.c.l.b16 %v504
      %v1339 = vunpack.c.l.b16 %v505
      %v1340 = vunpack.c.l.b16 %v506
      %v1341 = vunpack.c.l.b16 %v507
      %v1342 = vunpack.c.l.b16 %v508
      %v1343 = vunpack.c.l.b16 %v509
      %v1344 = vunpack.c.l.b16 %v510
      %v1345 = vunpack.c.l.b16 %v511
      %v1346 = vunpack.c.l.b16 %v512
      %v1347 = vunpack.c.l.b16 %v513
      %v1348 = vunpack.c.l.b16 %v514
      %v1349 = vunpack.c.l.b16 %v515
      %v1350 = vunpack.c.l.b16 %v516
      %v1351 = vunpack.c.l.b16 %v517
      %v1352 = vunpack.c.l.b16 %v518
      %v1353 = vunpack.c.l.b16 %v519
      %v1354 = vunpack.c.l.b16 %v520
      %v1355 = vunpack.c.l.b16 %v521
      %v1356 = vunpack.c.l.b16 %v522
      %v1357 = vunpack.c.l.b16 %v523
      %v1358 = vunpack.c.l.b16 %v524
      %v1359 = vunpack.c.l.b16 %v525
      %v1360 = vunpack.c.l.b16 %v526
      %v1361 = vunpack.c.l.b16 %v527
      %v1362 = vunpack.c.l.b16 %v528
      %v1363 = vunpack.c.l.b16 %v529
      %v1364 = vunpack.c.l.b16 %v530
      %v1365 = vunpack.c.l.b16 %v531
      %v1366 = vunpack.c.l.b16 %v532
      %v1367 = vunpack.c.l.b16 %v533
      %v1368 = vunpack.c.l.b16 %v534
      %v1369 = vunpack.c.l.b16 %v535
      %v1370 = vunpack.c.l.b16 %v536
      %v1371 = vunpack.c.l.b16 %v537
      %v1372 = vunpack.c.l.b16 %v538
      %v1373 = vunpack.c.l.b16 %v539
      %v1374 = vunpack.c.l.b16 %v540
      %v1375 = vunpack.c.l.b16 %v541
      %v1376 = vunpack.c.l.b16 %v542
      %v1377 = vunpack.c.l.b16 %v543
      %v1378 = vunpack.c.l.b16 %v544
      %v1379 = vunpack.c.l.b16 %v545
      %v1380 = vunpack.c.l.b16 %v546
      %v1381 = vunpack.c.l.b16 %v547
      %v1382 = vunpack.c.l.b16 %v548
      %v1383 = vunpack.c.l.b16 %v549
      %v1384 = vunpack.c.l.b16 %v550
      %v1385 = vunpack.c.l.b16 %v551
      %v1386 = vunpack.c.l.b16 %v552
      %v1387 = vunpack.c.l.b16 %v553
      %v1388 = vunpack.c.l.b16 %v554
      %v1389 = vunpack.c.l.b16 %v555
      %v1390 = vunpack.c.l.b16 %v556
      %v1391 = vunpack.c.l.b16 %v557
      %v1392 = vunpack.c.l.b16 %v558
      %v1393 = vunpack.c.l.b16 %v559
      %v1394 = vunpack.c.l.b16 %v560
      %v1395 = vunpack.c.l.b16 %v561
      %v1396 = vunpack.c.l.b16 %v562
      %v1397 = vunpack.c.l.b16 %v563
      %v1398 = vpack.c.b16 %v983, %v982
      %v1399 = vpack.c.b16 %v985, %v984
      %v1400 = vpack.c.b16 %v987, %v986
      %v1401 = vpack.c.b16 %v989, %v988
      %v1402 = vpack.c.b16 %v991, %v990
      %v1403 = vpack.c.b16 %v993, %v992
      %v1404 = vpack.c.b16 %v995, %v994
      %v1405 = vpack.c.b16 %v997, %v996
      %v1406 = vpack.c.b16 %v999, %v998
      %v1407 = vpack.c.b16 %v1001, %v1000
      %v1408 = vpack.c.b16 %v1003, %v1002
      %v1409 = vpack.c.b16 %v1005, %v1004
      %v1410 = vpack.c.b16 %v1007, %v1006
      %v1411 = vpack.c.b16 %v1009, %v1008
      %v1412 = vpack.c.b16 %v1011, %v1010
      %v1413 = vpack.c.b16 %v1013, %v1012
      %v1414 = vpack.c.b16 %v1015, %v1014
      %v1415 = vpack.c.b16 %v1017, %v1016
      %v1416 = vpack.c.b16 %v1019, %v1018
      %v1417 = vpack.c.b16 %v1021, %v1020
      %v1418 = vpack.c.b16 %v1023, %v1022
      %v1419 = vpack.c.b16 %v1025, %v1024
      %v1420 = vpack.c.b16 %v1027, %v1026
      %v1421 = vpack.c.b16 %v1029, %v1028
      %v1422 = vpack.c.b16 %v1031, %v1030
      %v1423 = vpack.c.b16 %v1033, %v1032
      %v1424 = vpack.c.b16 %v1035, %v1034
      %v1425 = vpack.c.b16 %v1037, %v1036
      %v1426 = vpack.c.b16 %v1039, %v1038
      %v1427 = vpack.c.b16 %v1041, %v1040
      %v1428 = vpack.c.b16 %v1043, %v1042
      %v1429 = vpack.c.b16 %v1045, %v1044
      %v1430 = vpack.c.b16 %v1047, %v1046
      %v1431 = vpack.c.b16 %v1049, %v1048
      %v1432 = vpack.c.b16 %v1051, %v1050
      %v1433 = vpack.c.b16 %v1053, %v1052
      %v1434 = vpack.c.b16 %v1055, %v1054
      %v1435 = vpack.c.b16 %v1057, %v1056
      %v1436 = vpack.c.b16 %v1059, %v1058
      %v1437 = vpack.c.b16 %v1061, %v1060
      %v1438 = vpack.c.b16 %v1063, %v1062
      %v1439 = vpack.c.b16 %v1065, %v1064
      %v1440 = vpack.c.b16 %v1067, %v1066
      %v1441 = vpack.c.b16 %v1069, %v1068
      %v1442 = vpack.c.b16 %v1071, %v1070
      %v1443 = vpack.c.b16 %v1073, %v1072
      %v1444 = vpack.c.b16 %v1075, %v1074
      %v1445 = vpack.c.b16 %v1077, %v1076
      %v1446 = vpack.c.b16 %v1079, %v1078
      %v1447 = vpack.c.b16 %v1081, %v1080
      %v1448 = vpack.c.b16 %v1083, %v1082
      %v1449 = vpack.c.b16 %v1085, %v1084
      %v1450 = vpack.c.b16 %v1087, %v1086
      %v1451 = vpack.c.b16 %v1089, %v1088
      %v1452 = vpack.c.b16 %v1091, %v1090
      %v1453 = vpack.c.b16 %v1093, %v1092
      %v1454 = vpack.c.b16 %v1095, %v1094
      %v1455 = vpack.c.b16 %v1097, %v1096
      %v1456 = vpack.c.b16 %v1099, %v1098
      %v1457 = vpack.c.b16 %v1101, %v1100
      %v1458 = vpack.c.b16 %v1103, %v1102
      %v1459 = vpack.c.b16 %v1105, %v1104
      %v1460 = vpack.c.b16 %v1107, %v1106
      %v1461 = vpack.c.b16 %v1109, %v1108
      %v1462 = vpack.c.b16 %v1111, %v1110
      %v1463 = vpack.c.b16 %v1113, %v1112
      %v1464 = vpack.c.b16 %v1115, %v1114
      %v1465 = vpack.c.b16 %v1117, %v1116
      %v1466 = vpack.c.b16 %v1119, %v1118
      %v1467 = vpack.c.b16 %v1121, %v1120
      %v1468 = vpack.c.b16 %v1123, %v1122
      %v1469 = vpack.c.b16 %v1125, %v1124
      %v1470 = vpack.c.b16 %v1127, %v1126
      %v1471 = vpack.c.b16 %v1129, %v1128
      %v1472 = vpack.c.b16 %v1131, %v1130
      %v1473 = vpack.c.b16 %v1133, %v1132
      %v1474 = vpack.c.b16 %v1135, %v1134
      %v1475 = vpack.c.b16 %v1137, %v1136
      %v1476 = vpack.c.b16 %v1139, %v1138
      %v1477 = vpack.c.b16 %v1141, %v1140
      %v1478 = vpack.c.b16 %v1143, %v1142
      %v1479 = vpack.c.b16 %v1145, %v1144
      %v1480 = vpack.c.b16 %v1147, %v1146
      %v1481 = vpack.c.b16 %v1149, %v1148
      %v1482 = vpack.c.b16 %v1151, %v1150
      %v1483 = vpack.c.b16 %v1153, %v1152
      %v1484 = vpack.c.b16 %v1155, %v1154
      %v1485 = vpack.c.b16 %v1157, %v1156
      %v1486 = vpack.c.b16 %v1159, %v1158
      %v1487 = vpack.c.b16 %v1161, %v1160
      %v1488 = vpack.c.b16 %v1163, %v1162
      %v1489 = vpack.c.b16 %v1165, %v1164
      %v1490 = vpack.c.b16 %v1167, %v1166
      %v1491 = vpack.c.b16 %v1169, %v1168
      %v1492 = vpack.c.b16 %v1171, %v1170
      %v1493 = vpack.c.b16 %v1173, %v1172
      %v1494 = vpack.c.b16 %v1175, %v1174
      %v1495 = vpack.c.b16 %v1177, %v1176
      %v1496 = vpack.c.b16 %v1179, %v1178
      %v1497 = vpack.c.b16 %v1181, %v1180
      %v1498 = vpack.c.b16 %v1183, %v1182
      %v1499 = vpack.c.b16 %v1185, %v1184
      %v1500 = vpack.c.b16 %v1187, %v1186
      %v1501 = vpack.c.b16 %v1189, %v1188
      %v1502 = vpack.c.b16 %v1191, %v1190
      %v1503 = vpack.c.b16 %v1193, %v1192
      %v1504 = vpack.c.b16 %v1195, %v1194
      %v1505 = vpack.c.b16 %v1197, %v1196
      %v1506 = vpack.c.b16 %v1199, %v1198
      %v1507 = vpack.c.b16 %v1201, %v1200
      %v1508 = vpack.c.b16 %v1203, %v1202
      %v1509 = vpack.c.b16 %v1205, %v1204
      %v1510 = vpack.c.b16 %v1207, %v1206
      %v1511 = vpack.c.b16 %v1209, %v1208
      %v1512 = vpack.c.b16 %v1211, %v1210
      %v1513 = vpack.c.b16 %v1213, %v1212
      %v1514 = vpack.c.b16 %v1215, %v1214
      %v1515 = vpack.c.b16 %v1217, %v1216
      %v1516 = vpack.c.b16 %v1219, %v1218
      %v1517 = vpack.c.b16 %v1221, %v1220
      %v1518 = vpack.c.b16 %v1223, %v1222
      %v1519 = vpack.c.b16 %v1225, %v1224
      %v1520 = vpack.c.b16 %v1227, %v1226
      %v1521 = vpack.c.b16 %v1229, %v1228
      %v1522 = vpack.c.b16 %v1231, %v1230
      %v1523 = vpack.c.b16 %v1233, %v1232
      %v1524 = vpack.c.b16 %v1235, %v1234
      %v1525 = vpack.c.b16 %v1237, %v1236
      %v1526 = vpack.c.b16 %v1239, %v1238
      %v1527 = vpack.c.b16 %v1241, %v1240
      %v1528 = vpack.c.b16 %v1243, %v1242
      %v1529 = vpack.c.b16 %v1245, %v1244
      %v1530 = vpack.c.b16 %v1247, %v1246
      %v1531 = vpack.c.b16 %v1249, %v1248
      %v1532 = vpack.c.b16 %v1251, %v1250
      %v1533 = vpack.c.b16 %v1253, %v1252
      %v1534 = vpack.c.b16 %v1255, %v1254
      %v1535 = vpack.c.b16 %v1257, %v1256
      %v1536 = vpack.c.b16 %v1259, %v1258
      %v1537 = vpack.c.b16 %v1261, %v1260
      %v1538 = vpack.c.b16 %v1263, %v1262
      %v1539 = vpack.c.b16 %v1265, %v1264
      %v1540 = vpack.c.b16 %v1267, %v1266
      %v1541 = vpack.c.b16 %v1269, %v1268
      %v1542 = vpack.c.b16 %v1271, %v1270
      %v1543 = vpack.c.b16 %v1273, %v1272
      %v1544 = vpack.c.b16 %v1275, %v1274
      %v1545 = vpack.c.b16 %v1277, %v1276
      %v1546 = vpack.c.b16 %v1279, %v1278
      %v1547 = vpack.c.b16 %v1281, %v1280
      %v1548 = vpack.c.b16 %v1283, %v1282
      %v1549 = vpack.c.b16 %v1285, %v1284
      %v1550 = vpack.c.b16 %v1287, %v1286
      %v1551 = vpack.c.b16 %v1289, %v1288
      %v1552 = vpack.c.b16 %v1291, %v1290
      %v1553 = vpack.c.b16 %v1293, %v1292
      %v1554 = vpack.c.b16 %v1295, %v1294
      %v1555 = vpack.c.b16 %v1297, %v1296
      %v1556 = vpack.c.b16 %v1299, %v1298
      %v1557 = vpack.c.b16 %v1301, %v1300
      %v1558 = vpack.c.b16 %v1303, %v1302
      %v1559 = vpack.c.b16 %v1305, %v1304
      %v1560 = vpack.c.b16 %v1307, %v1306
      %v1561 = vpack.c.b16 %v1309, %v1308
      %v1562 = vpack.c.b16 %v1311, %v1310
      %v1563 = vpack.c.b16 %v1313, %v1312
      %v1564 = vpack.c.b16 %v1315, %v1314
      %v1565 = vpack.c.b16 %v1317, %v1316
      %v1566 = vpack.c.b16 %v1319, %v1318
      %v1567 = vpack.c.b16 %v1321, %v1320
      %v1568 = vpack.c.b16 %v1323, %v1322
      %v1569 = vpack.c.b16 %v1325, %v1324
      %v1570 = vpack.c.b16 %v1327, %v1326
      %v1571 = vpack.c.b16 %v1329, %v1328
      %v1572 = vpack.c.b16 %v1331, %v1330
      %v1573 = vpack.c.b16 %v1333, %v1332
      %v1574 = vpack.c.b16 %v1335, %v1334
      %v1575 = vpack.c.b16 %v1337, %v1336
      %v1576 = vpack.c.b16 %v1339, %v1338
      %v1577 = vpack.c.b16 %v1341, %v1340
      %v1578 = vpack.c.b16 %v1343, %v1342
      %v1579 = vpack.c.b16 %v1345, %v1344
      %v1580 = vpack.c.b16 %v1347, %v1346
      %v1581 = vpack.c.b16 %v1349, %v1348
      %v1582 = vpack.c.b16 %v1351, %v1350
      %v1583 = vpack.c.b16 %v1353, %v1352
      %v1584 = vpack.c.b16 %v1355, %v1354
      %v1585 = vpack.c.b16 %v1357, %v1356
      %v1586 = vpack.c.b16 %v1359, %v1358
      %v1587 = vpack.c.b16 %v1361, %v1360
      %v1588 = vpack.c.b16 %v1363, %v1362
      %v1589 = vpack.c.b16 %v1365, %v1364
      %v1590 = vpack.c.b16 %v1367, %v1366
      %v1591 = vpack.c.b16 %v1369, %v1368
      %v1592 = vpack.c.b16 %v1371, %v1370
      %v1593 = vpack.c.b16 %v1373, %v1372
      %v1594 = vpack.c.b16 %v1375, %v1374
      %v1595 = vpack.c.b16 %v1377, %v1376
      %v1596 = vpack.c.b16 %v1379, %v1378
      %v1597 = vpack.c.b16 %v1381, %v1380
      %v1598 = vpack.c.b16 %v1383, %v1382
      %v1599 = vpack.c.b16 %v1385, %v1384
      %v1600 = vpack.c.b16 %v1387, %v1386
      %v1601 = vpack.c.b16 %v1389, %v1388
      %v1602 = vpack.c.b16 %v1391, %v1390
      %v1603 = vpack.c.b16 %v1393, %v1392
      %v1604 = vpack.c.b16 %v1395, %v1394
      %v1605 = vpack.c.b16 %v1397, %v1396
      %v1608 = vunpack.c.l.b16 %v564
      %v1609 = vunpack.c.l.b16 %v565
      %v1610 = vpack.c.b16 %v1609, %v1608
      %vm1611 = vcmask 72704
      %v1613 = vsel %vm1611, %v1398, 0
      %v1616 = vsel %vm1611, %v1399, 0
      %v1619 = vsel %vm1611, %v1400, 0
      %v1622 = vsel %vm1611, %v1401, 0
      %v1625 = vsel %vm1611, %v1402, 0
      %v1628 = vsel %vm1611, %v1403, 0
      %v1631 = vsel %vm1611, %v1404, 0
      %v1634 = vsel %vm1611, %v1405, 0
      %v1637 = vsel %vm1611, %v1406, 0
      %v1640 = vsel %vm1611, %v1407, 0
      %v1643 = vsel %vm1611, %v1408, 0
      %v1646 = vsel %vm1611, %v1409, 0
      %v1649 = vsel %vm1611, %v1410, 0
      %v1652 = vsel %vm1611, %v1411, 0
      %v1655 = vsel %vm1611, %v1412, 0
      %v1658 = vsel %vm1611, %v1413, 0
      %v1661 = vsel %vm1611, %v1414, 0
      %v1664 = vsel %vm1611, %v1415, 0
      %v1667 = vsel %vm1611, %v1416, 0
      %v1670 = vsel %vm1611, %v1417, 0
      %v1673 = vsel %vm1611, %v1418, 0
      %v1676 = vsel %vm1611, %v1419, 0
      %v1679 = vsel %vm1611, %v1420, 0
      %v1682 = vsel %vm1611, %v1421, 0
      %v1685 = vsel %vm1611, %v1422, 0
      %v1688 = vsel %vm1611, %v1423, 0
      %v1691 = vsel %vm1611, %v1424, 0
      %v1694 = vsel %vm1611, %v1425, 0
      %v1697 = vsel %vm1611, %v1426, 0
      %v1700 = vsel %vm1611, %v1427, 0
      %v1703 = vsel %vm1611, %v1428, 0
      %v1706 = vsel %vm1611, %v1429, 0
      %v1709 = vsel %vm1611, %v1430, 0
      %v1712 = vsel %vm1611, %v1431, 0
      %v1715 = vsel %vm1611, %v1432, 0
      %v1718 = vsel %vm1611, %v1433, 0
      %v1721 = vsel %vm1611, %v1434, 0
      %v1724 = vsel %vm1611, %v1435, 0
      %v1727 = vsel %vm1611, %v1436, 0
      %v1730 = vsel %vm1611, %v1437, 0
      %v1733 = vsel %vm1611, %v1438, 0
      %v1736 = vsel %vm1611, %v1439, 0
      %v1739 = vsel %vm1611, %v1440, 0
      %v1742 = vsel %vm1611, %v1441, 0
      %v1745 = vsel %vm1611, %v1442, 0
      %v1748 = vsel %vm1611, %v1443, 0
      %v1751 = vsel %vm1611, %v1444, 0
      %v1754 = vsel %vm1611, %v1445, 0
      %v1757 = vsel %vm1611, %v1446, 0
      %v1760 = vsel %vm1611, %v1447, 0
      %v1763 = vsel %vm1611, %v1448, 0
      %v1766 = vsel %vm1611, %v1449, 0
      %v1769 = vsel %vm1611, %v1450, 0
      %v1772 = vsel %vm1611, %v1451, 0
      %v1775 = vsel %vm1611, %v1452, 0
      %v1778 = vsel %vm1611, %v1453, 0
      %v1781 = vsel %vm1611, %v1454, 0
      %v1784 = vsel %vm1611, %v1455, 0
      %v1787 = vsel %vm1611, %v1456, 0
      %v1790 = vsel %vm1611, %v1457, 0
      %v1793 = vsel %vm1611, %v1458, 0
      %v1796 = vsel %vm1611, %v1459, 0
      %v1799 = vsel %vm1611, %v1460, 0
      %v1802 = vsel %vm1611, %v1461, 0
      %v1805 = vsel %vm1611, %v1462, 0
      %v1808 = vsel %vm1611, %v1463, 0
      %v1811 = vsel %vm1611, %v1464, 0
      %v1814 = vsel %vm1611, %v1465, 0
      %v1817 = vsel %vm1611, %v1466, 0
      %v1820 = vsel %vm1611, %v1467, 0
      %v1823 = vsel %vm1611, %v1468, 0
      %v1826 = vsel %vm1611, %v1469, 0
      %v1829 = vsel %vm1611, %v1470, 0
      %v1832 = vsel %vm1611, %v1471, 0
      %v1835 = vsel %vm1611, %v1472, 0
      %v1838 = vsel %vm1611, %v1473, 0
      %v1841 = vsel %vm1611, %v1474, 0
      %v1844 = vsel %vm1611, %v1475, 0
      %v1847 = vsel %vm1611, %v1476, 0
      %v1850 = vsel %vm1611, %v1477, 0
      %v1853 = vsel %vm1611, %v1478, 0
      %v1856 = vsel %vm1611, %v1479, 0
      %v1859 = vsel %vm1611, %v1480, 0
      %v1862 = vsel %vm1611, %v1481, 0
      %v1865 = vsel %vm1611, %v1482, 0
      %v1868 = vsel %vm1611, %v1483, 0
      %v1871 = vsel %vm1611, %v1484, 0
      %v1874 = vsel %vm1611, %v1485, 0
      %v1877 = vsel %vm1611, %v1486, 0
      %v1880 = vsel %vm1611, %v1487, 0
      %v1883 = vsel %vm1611, %v1488, 0
      %v1886 = vsel %vm1611, %v1489, 0
      %v1889 = vsel %vm1611, %v1490, 0
      %v1892 = vsel %vm1611, %v1491, 0
      %v1895 = vsel %vm1611, %v1492, 0
      %v1898 = vsel %vm1611, %v1493, 0
      %v1901 = vsel %vm1611, %v1494, 0
      %v1904 = vsel %vm1611, %v1495, 0
      %v1907 = vsel %vm1611, %v1496, 0
      %v1910 = vsel %vm1611, %v1497, 0
      %v1913 = vsel %vm1611, %v1498, 0
      %v1916 = vsel %vm1611, %v1499, 0
      %v1919 = vsel %vm1611, %v1500, 0
      %v1922 = vsel %vm1611, %v1501, 0
      %v1925 = vsel %vm1611, %v1502, 0
      %v1928 = vsel %vm1611, %v1503, 0
      %v1931 = vsel %vm1611, %v1504, 0
      %v1934 = vsel %vm1611, %v1505, 0
      %v1937 = vsel %vm1611, %v1506, 0
      %v1940 = vsel %vm1611, %v1507, 0
      %v1943 = vsel %vm1611, %v1508, 0
      %v1946 = vsel %vm1611, %v1509, 0
      %v1949 = vsel %vm1611, %v1510, 0
      %v1952 = vsel %vm1611, %v1511, 0
      %v1955 = vsel %vm1611, %v1512, 0
      %v1958 = vsel %vm1611, %v1513, 0
      %v1961 = vsel %vm1611, %v1514, 0
      %v1964 = vsel %vm1611, %v1515, 0
      %v1967 = vsel %vm1611, %v1516, 0
      %v1970 = vsel %vm1611, %v1517, 0
      %v1973 = vsel %vm1611, %v1518, 0
      %v1976 = vsel %vm1611, %v1519, 0
      %v1979 = vsel %vm1611, %v1520, 0
      %v1982 = vsel %vm1611, %v1521, 0
      %v1985 = vsel %vm1611, %v1522, 0
      %v1988 = vsel %vm1611, %v1523, 0
      %v1991 = vsel %vm1611, %v1524, 0
      %v1994 = vsel %vm1611, %v1525, 0
      %v1997 = vsel %vm1611, %v1526, 0
      %v2000 = vsel %vm1611, %v1527, 0
      %v2003 = vsel %vm1611, %v1528, 0
      %v2006 = vsel %vm1611, %v1529, 0
      %v2009 = vsel %vm1611, %v1530, 0
      %v2012 = vsel %vm1611, %v1531, 0
      %v2015 = vsel %vm1611, %v1532, 0
      %v2018 = vsel %vm1611, %v1533, 0
      %v2021 = vsel %vm1611, %v1534, 0
      %v2024 = vsel %vm1611, %v1535, 0
      %v2027 = vsel %vm1611, %v1536, 0
      %v2030 = vsel %vm1611, %v1537, 0
      %v2033 = vsel %vm1611, %v1538, 0
      %v2036 = vsel %vm1611, %v1539, 0
      %v2039 = vsel %vm1611, %v1540, 0
      %v2042 = vsel %vm1611, %v1541, 0
      %v2045 = vsel %vm1611, %v1542, 0
      %v2048 = vsel %vm1611, %v1543, 0
      %v2051 = vsel %vm1611, %v1544, 0
      %v2054 = vsel %vm1611, %v1545, 0
      %v2057 = vsel %vm1611, %v1546, 0
      %v2060 = vsel %vm1611, %v1547, 0
      %v2063 = vsel %vm1611, %v1548, 0
      %v2066 = vsel %vm1611, %v1549, 0
      %v2069 = vsel %vm1611, %v1550, 0
      %v2072 = vsel %vm1611, %v1551, 0
      %v2075 = vsel %vm1611, %v1552, 0
      %v2078 = vsel %vm1611, %v1553, 0
      %v2081 = vsel %vm1611, %v1554, 0
      %v2084 = vsel %vm1611, %v1555, 0
      %v2087 = vsel %vm1611, %v1556, 0
      %v2090 = vsel %vm1611, %v1557, 0
      %v2093 = vsel %vm1611, %v1558, 0
      %v2096 = vsel %vm1611, %v1559, 0
      %v2099 = vsel %vm1611, %v1560, 0
      %v2102 = vsel %vm1611, %v1561, 0
      %v2105 = vsel %vm1611, %v1562, 0
      %v2108 = vsel %vm1611, %v1563, 0
      %v2111 = vsel %vm1611, %v1564, 0
      %v2114 = vsel %vm1611, %v1565, 0
      %v2117 = vsel %vm1611, %v1566, 0
      %v2120 = vsel %vm1611, %v1567, 0
      %v2123 = vsel %vm1611, %v1568, 0
      %v2126 = vsel %vm1611, %v1569, 0
      %v2129 = vsel %vm1611, %v1570, 0
      %v2132 = vsel %vm1611, %v1571, 0
      %v2135 = vsel %vm1611, %v1572, 0
      %v2138 = vsel %vm1611, %v1573, 0
      %v2141 = vsel %vm1611, %v1574, 0
      %v2144 = vsel %vm1611, %v1575, 0
      %v2147 = vsel %vm1611, %v1576, 0
      %v2150 = vsel %vm1611, %v1577, 0
      %v2153 = vsel %vm1611, %v1578, 0
      %v2156 = vsel %vm1611, %v1579, 0
      %v2159 = vsel %vm1611, %v1580, 0
      %v2162 = vsel %vm1611, %v1581, 0
      %v2165 = vsel %vm1611, %v1582, 0
      %v2168 = vsel %vm1611, %v1583, 0
      %v2171 = vsel %vm1611, %v1584, 0
      %v2174 = vsel %vm1611, %v1585, 0
      %v2177 = vsel %vm1611, %v1586, 0
      %v2180 = vsel %vm1611, %v1587, 0
      %v2183 = vsel %vm1611, %v1588, 0
      %v2186 = vsel %vm1611, %v1589, 0
      %v2189 = vsel %vm1611, %v1590, 0
      %v2192 = vsel %vm1611, %v1591, 0
      %v2195 = vsel %vm1611, %v1592, 0
      %v2198 = vsel %vm1611, %v1593, 0
      %v2201 = vsel %vm1611, %v1594, 0
      %v2204 = vsel %vm1611, %v1595, 0
      %v2207 = vsel %vm1611, %v1596, 0
      %v2210 = vsel %vm1611, %v1597, 0
      %v2213 = vsel %vm1611, %v1598, 0
      %v2216 = vsel %vm1611, %v1599, 0
      %v2219 = vsel %vm1611, %v1600, 0
      %v2222 = vsel %vm1611, %v1601, 0
      %v2225 = vsel %vm1611, %v1602, 0
      %v2228 = vsel %vm1611, %v1603, 0
      %v2231 = vsel %vm1611, %v1604, 0
      %v2234 = vsel %vm1611, %v1605, 0
      %vm2236 = vcmask 1043456
      %vm2237 = vcmask 1044480
      %v2238 = vsel %vm2236, 4294967295, 65535
      %v2239 = vsel %vm2237, %v2238, 0
      %v2241 = vand.u32 %v1610, %v2239
      %2243 = vmatprep.subr.bf16.mxu0 0
      %2244 = vmatpush1.bf16.msra.mxu0 0
      %2245 = vmatprep.subr.bf16.mxu0 0
      %2246 = vmatpush1.bf16.msra.mxu0 0
      %2247 = vmatprep.subr.bf16.mxu0 0
      %2248 = vmatpush1.bf16.msra.mxu0 0
      %2249 = vmatprep.subr.bf16.mxu0 0
      %2250 = vmatpush1.bf16.msra.mxu0 0
      %2251 = vmatprep.subr.bf16.mxu0 0
      %2252 = vmatpush1.bf16.msra.mxu0 0
      %2253 = vmatprep.subr.bf16.mxu0 0
      %2254 = vmatpush1.bf16.msra.mxu0 0
      %2255 = vmatprep.subr.bf16.mxu0 0
      %2256 = vmatpush1.bf16.msra.mxu0 0
      %2257 = vmatprep.subr.bf16.mxu0 0
      %2258 = vmatpush1.bf16.msra.mxu0 %v2241
      %2259 = vmatprep.subr.bf16.mxu0 0
      %2260 = vmatpush2.bf16.msra.mxu0 0
      %2261 = vmatprep.subr.bf16.mxu0 0
      %2262 = vmatpush2.bf16.msra.mxu0 0
      %2263 = vmatprep.subr.bf16.mxu0 0
      %2264 = vmatpush2.bf16.msra.mxu0 0
      %2265 = vmatprep.subr.bf16.mxu0 0
      %2266 = vmatpush2.bf16.msra.mxu0 0
      %2267 = vmatprep.subr.bf16.mxu0 0
      %2268 = vmatpush2.bf16.msra.mxu0 0
      %2269 = vmatprep.subr.bf16.mxu0 0
      %2270 = vmatpush2.bf16.msra.mxu0 0
      %2271 = vmatprep.subr.bf16.mxu0 0
      %2272 = vmatpush2.bf16.msra.mxu0 0
      %2273 = vmatprep.subr.bf16.mxu0 0
      %2274 = vmatpush2.bf16.msra.mxu0 0
      %2275 = vmatprep.mubr.bf16.mxu0 0
      %2276 = vmatmul.mubr.bf16.gmra.mxu0 %v1613
      %v2277 = vpop.f32.mrf.mxu0
      %v2278 = vadd.f32 0.0, %v2277
      %v2279 = vpop.f32.mrf.mxu0
      %v2280 = vpop.f32.mrf.mxu0
      %v2281 = vadd.f32 0.0, %v2280
      %v2282 = vpop.f32.mrf.mxu0
      %2283 = vmatprep.mubr.bf16.mxu0 0
      %2284 = vmatmul.mubr.bf16.gmra.mxu0 %v1616
      %v2285 = vpop.f32.mrf.mxu0
      %v2286 = vadd.f32 0.0, %v2285
      %v2287 = vpop.f32.mrf.mxu0
      %v2288 = vpop.f32.mrf.mxu0
      %v2289 = vadd.f32 0.0, %v2288
      %v2290 = vpop.f32.mrf.mxu0
      %2291 = vmatprep.mubr.bf16.mxu0 0
      %2292 = vmatmul.mubr.bf16.gmra.mxu0 %v1619
      %v2293 = vpop.f32.mrf.mxu0
      %v2294 = vadd.f32 0.0, %v2293
      %v2295 = vpop.f32.mrf.mxu0
      %v2296 = vpop.f32.mrf.mxu0
      %v2297 = vadd.f32 0.0, %v2296
      %v2298 = vpop.f32.mrf.mxu0
      %2299 = vmatprep.mubr.bf16.mxu0 0
      %2300 = vmatmul.mubr.bf16.gmra.mxu0 %v1622
      %v2301 = vpop.f32.mrf.mxu0
      %v2302 = vadd.f32 0.0, %v2301
      %v2303 = vpop.f32.mrf.mxu0
      %v2304 = vpop.f32.mrf.mxu0
      %v2305 = vadd.f32 0.0, %v2304
      %v2306 = vpop.f32.mrf.mxu0
      %2307 = vmatprep.mubr.bf16.mxu0 0
      %2308 = vmatmul.mubr.bf16.gmra.mxu0 %v1625
      %v2309 = vpop.f32.mrf.mxu0
      %v2310 = vadd.f32 0.0, %v2309
      %v2311 = vpop.f32.mrf.mxu0
      %v2312 = vpop.f32.mrf.mxu0
      %v2313 = vadd.f32 0.0, %v2312
      %v2314 = vpop.f32.mrf.mxu0
      %2315 = vmatprep.mubr.bf16.mxu0 0
      %2316 = vmatmul.mubr.bf16.gmra.mxu0 %v1628
      %v2317 = vpop.f32.mrf.mxu0
      %v2318 = vadd.f32 0.0, %v2317
      %v2319 = vpop.f32.mrf.mxu0
      %v2320 = vpop.f32.mrf.mxu0
      %v2321 = vadd.f32 0.0, %v2320
      %v2322 = vpop.f32.mrf.mxu0
      %2323 = vmatprep.mubr.bf16.mxu0 0
      %2324 = vmatmul.mubr.bf16.gmra.mxu0 %v1631
      %v2325 = vpop.f32.mrf.mxu0
      %v2326 = vadd.f32 0.0, %v2325
      %v2327 = vpop.f32.mrf.mxu0
      %v2328 = vpop.f32.mrf.mxu0
      %v2329 = vadd.f32 0.0, %v2328
      %v2330 = vpop.f32.mrf.mxu0
      %2331 = vmatprep.mubr.bf16.mxu0 0
      %2332 = vmatmul.mubr.bf16.gmra.mxu0 %v1634
      %v2333 = vpop.f32.mrf.mxu0
      %v2334 = vadd.f32 0.0, %v2333
      %v2335 = vpop.f32.mrf.mxu0
      %v2336 = vpop.f32.mrf.mxu0
      %v2337 = vadd.f32 0.0, %v2336
      %v2338 = vpop.f32.mrf.mxu0
      %2339 = vmatprep.mubr.bf16.mxu0 0
      %2340 = vmatmul.mubr.bf16.gmra.mxu0 %v1637
      %v2341 = vpop.f32.mrf.mxu0
      %v2342 = vadd.f32 0.0, %v2341
      %v2343 = vpop.f32.mrf.mxu0
      %v2344 = vpop.f32.mrf.mxu0
      %v2345 = vadd.f32 0.0, %v2344
      %v2346 = vpop.f32.mrf.mxu0
      %2347 = vmatprep.mubr.bf16.mxu0 0
      %2348 = vmatmul.mubr.bf16.gmra.mxu0 %v1640
      %v2349 = vpop.f32.mrf.mxu0
      %v2350 = vadd.f32 0.0, %v2349
      %v2351 = vpop.f32.mrf.mxu0
      %v2352 = vpop.f32.mrf.mxu0
      %v2353 = vadd.f32 0.0, %v2352
      %v2354 = vpop.f32.mrf.mxu0
      %2355 = vmatprep.mubr.bf16.mxu0 0
      %2356 = vmatmul.mubr.bf16.gmra.mxu0 %v1643
      %v2357 = vpop.f32.mrf.mxu0
      %v2358 = vadd.f32 0.0, %v2357
      %v2359 = vpop.f32.mrf.mxu0
      %v2360 = vpop.f32.mrf.mxu0
      %v2361 = vadd.f32 0.0, %v2360
      %v2362 = vpop.f32.mrf.mxu0
      %2363 = vmatprep.mubr.bf16.mxu0 0
      %2364 = vmatmul.mubr.bf16.gmra.mxu0 %v1646
      %v2365 = vpop.f32.mrf.mxu0
      %v2366 = vadd.f32 0.0, %v2365
      %v2367 = vpop.f32.mrf.mxu0
      %v2368 = vpop.f32.mrf.mxu0
      %v2369 = vadd.f32 0.0, %v2368
      %v2370 = vpop.f32.mrf.mxu0
      %2371 = vmatprep.mubr.bf16.mxu0 0
      %2372 = vmatmul.mubr.bf16.gmra.mxu0 %v1649
      %v2373 = vpop.f32.mrf.mxu0
      %v2374 = vadd.f32 0.0, %v2373
      %v2375 = vpop.f32.mrf.mxu0
      %v2376 = vpop.f32.mrf.mxu0
      %v2377 = vadd.f32 0.0, %v2376
      %v2378 = vpop.f32.mrf.mxu0
      %2379 = vmatprep.mubr.bf16.mxu0 0
      %2380 = vmatmul.mubr.bf16.gmra.mxu0 %v1652
      %v2381 = vpop.f32.mrf.mxu0
      %v2382 = vadd.f32 0.0, %v2381
      %v2383 = vpop.f32.mrf.mxu0
      %v2384 = vpop.f32.mrf.mxu0
      %v2385 = vadd.f32 0.0, %v2384
      %v2386 = vpop.f32.mrf.mxu0
      %2387 = vmatprep.mubr.bf16.mxu0 0
      %2388 = vmatmul.mubr.bf16.gmra.mxu0 %v1655
      %v2389 = vpop.f32.mrf.mxu0
      %v2390 = vadd.f32 0.0, %v2389
      %v2391 = vpop.f32.mrf.mxu0
      %v2392 = vpop.f32.mrf.mxu0
      %v2393 = vadd.f32 0.0, %v2392
      %v2394 = vpop.f32.mrf.mxu0
      %2395 = vmatprep.mubr.bf16.mxu0 0
      %2396 = vmatmul.mubr.bf16.gmra.mxu0 %v1658
      %v2397 = vpop.f32.mrf.mxu0
      %v2398 = vadd.f32 0.0, %v2397
      %v2399 = vpop.f32.mrf.mxu0
      %v2400 = vpop.f32.mrf.mxu0
      %v2401 = vadd.f32 0.0, %v2400
      %v2402 = vpop.f32.mrf.mxu0
      %2403 = vmatprep.mubr.bf16.mxu0 0
      %2404 = vmatmul.mubr.bf16.gmra.mxu0 %v1661
      %v2405 = vpop.f32.mrf.mxu0
      %v2406 = vadd.f32 0.0, %v2405
      %v2407 = vpop.f32.mrf.mxu0
      %v2408 = vpop.f32.mrf.mxu0
      %v2409 = vadd.f32 0.0, %v2408
      %v2410 = vpop.f32.mrf.mxu0
      %2411 = vmatprep.mubr.bf16.mxu0 0
      %2412 = vmatmul.mubr.bf16.gmra.mxu0 %v1664
      %v2413 = vpop.f32.mrf.mxu0
      %v2414 = vadd.f32 0.0, %v2413
      %v2415 = vpop.f32.mrf.mxu0
      %v2416 = vpop.f32.mrf.mxu0
      %v2417 = vadd.f32 0.0, %v2416
      %v2418 = vpop.f32.mrf.mxu0
      %2419 = vmatprep.mubr.bf16.mxu0 0
      %2420 = vmatmul.mubr.bf16.gmra.mxu0 %v1667
      %v2421 = vpop.f32.mrf.mxu0
      %v2422 = vadd.f32 0.0, %v2421
      %v2423 = vpop.f32.mrf.mxu0
      %v2424 = vpop.f32.mrf.mxu0
      %v2425 = vadd.f32 0.0, %v2424
      %v2426 = vpop.f32.mrf.mxu0
      %2427 = vmatprep.mubr.bf16.mxu0 0
      %2428 = vmatmul.mubr.bf16.gmra.mxu0 %v1670
      %v2429 = vpop.f32.mrf.mxu0
      %v2430 = vadd.f32 0.0, %v2429
      %v2431 = vpop.f32.mrf.mxu0
      %v2432 = vpop.f32.mrf.mxu0
      %v2433 = vadd.f32 0.0, %v2432
      %v2434 = vpop.f32.mrf.mxu0
      %2435 = vmatprep.mubr.bf16.mxu0 0
      %2436 = vmatmul.mubr.bf16.gmra.mxu0 %v1673
      %v2437 = vpop.f32.mrf.mxu0
      %v2438 = vadd.f32 0.0, %v2437
      %v2439 = vpop.f32.mrf.mxu0
      %v2440 = vpop.f32.mrf.mxu0
      %v2441 = vadd.f32 0.0, %v2440
      %v2442 = vpop.f32.mrf.mxu0
      %2443 = vmatprep.mubr.bf16.mxu0 0
      %2444 = vmatmul.mubr.bf16.gmra.mxu0 %v1676
      %v2445 = vpop.f32.mrf.mxu0
      %v2446 = vadd.f32 0.0, %v2445
      %v2447 = vpop.f32.mrf.mxu0
      %v2448 = vpop.f32.mrf.mxu0
      %v2449 = vadd.f32 0.0, %v2448
      %v2450 = vpop.f32.mrf.mxu0
      %2451 = vmatprep.mubr.bf16.mxu0 0
      %2452 = vmatmul.mubr.bf16.gmra.mxu0 %v1679
      %v2453 = vpop.f32.mrf.mxu0
      %v2454 = vadd.f32 0.0, %v2453
      %v2455 = vpop.f32.mrf.mxu0
      %v2456 = vpop.f32.mrf.mxu0
      %v2457 = vadd.f32 0.0, %v2456
      %v2458 = vpop.f32.mrf.mxu0
      %2459 = vmatprep.mubr.bf16.mxu0 0
      %2460 = vmatmul.mubr.bf16.gmra.mxu0 %v1682
      %v2461 = vpop.f32.mrf.mxu0
      %v2462 = vadd.f32 0.0, %v2461
      %v2463 = vpop.f32.mrf.mxu0
      %v2464 = vpop.f32.mrf.mxu0
      %v2465 = vadd.f32 0.0, %v2464
      %v2466 = vpop.f32.mrf.mxu0
      %2467 = vmatprep.mubr.bf16.mxu0 0
      %2468 = vmatmul.mubr.bf16.gmra.mxu0 %v1685
      %v2469 = vpop.f32.mrf.mxu0
      %v2470 = vadd.f32 0.0, %v2469
      %v2471 = vpop.f32.mrf.mxu0
      %v2472 = vpop.f32.mrf.mxu0
      %v2473 = vadd.f32 0.0, %v2472
      %v2474 = vpop.f32.mrf.mxu0
      %2475 = vmatprep.mubr.bf16.mxu0 0
      %2476 = vmatmul.mubr.bf16.gmra.mxu0 %v1688
      %v2477 = vpop.f32.mrf.mxu0
      %v2478 = vadd.f32 0.0, %v2477
      %v2479 = vpop.f32.mrf.mxu0
      %v2480 = vpop.f32.mrf.mxu0
      %v2481 = vadd.f32 0.0, %v2480
      %v2482 = vpop.f32.mrf.mxu0
      %2483 = vmatprep.mubr.bf16.mxu0 0
      %2484 = vmatmul.mubr.bf16.gmra.mxu0 %v1691
      %v2485 = vpop.f32.mrf.mxu0
      %v2486 = vadd.f32 0.0, %v2485
      %v2487 = vpop.f32.mrf.mxu0
      %v2488 = vpop.f32.mrf.mxu0
      %v2489 = vadd.f32 0.0, %v2488
      %v2490 = vpop.f32.mrf.mxu0
      %2491 = vmatprep.mubr.bf16.mxu0 0
      %2492 = vmatmul.mubr.bf16.gmra.mxu0 %v1694
      %v2493 = vpop.f32.mrf.mxu0
      %v2494 = vadd.f32 0.0, %v2493
      %v2495 = vpop.f32.mrf.mxu0
      %v2496 = vpop.f32.mrf.mxu0
      %v2497 = vadd.f32 0.0, %v2496
      %v2498 = vpop.f32.mrf.mxu0
      %2499 = vmatprep.mubr.bf16.mxu0 0
      %2500 = vmatmul.mubr.bf16.gmra.mxu0 %v1697
      %v2501 = vpop.f32.mrf.mxu0
      %v2502 = vadd.f32 0.0, %v2501
      %v2503 = vpop.f32.mrf.mxu0
      %v2504 = vpop.f32.mrf.mxu0
      %v2505 = vadd.f32 0.0, %v2504
      %v2506 = vpop.f32.mrf.mxu0
      %2507 = vmatprep.mubr.bf16.mxu0 0
      %2508 = vmatmul.mubr.bf16.gmra.mxu0 %v1700
      %v2509 = vpop.f32.mrf.mxu0
      %v2510 = vadd.f32 0.0, %v2509
      %v2511 = vpop.f32.mrf.mxu0
      %v2512 = vpop.f32.mrf.mxu0
      %v2513 = vadd.f32 0.0, %v2512
      %v2514 = vpop.f32.mrf.mxu0
      %2515 = vmatprep.mubr.bf16.mxu0 0
      %2516 = vmatmul.mubr.bf16.gmra.mxu0 %v1703
      %v2517 = vpop.f32.mrf.mxu0
      %v2518 = vadd.f32 0.0, %v2517
      %v2519 = vpop.f32.mrf.mxu0
      %v2520 = vpop.f32.mrf.mxu0
      %v2521 = vadd.f32 0.0, %v2520
      %v2522 = vpop.f32.mrf.mxu0
      %2523 = vmatprep.mubr.bf16.mxu0 0
      %2524 = vmatmul.mubr.bf16.gmra.mxu0 %v1706
      %v2525 = vpop.f32.mrf.mxu0
      %v2526 = vadd.f32 0.0, %v2525
      %v2527 = vpop.f32.mrf.mxu0
      %v2528 = vpop.f32.mrf.mxu0
      %v2529 = vadd.f32 0.0, %v2528
      %v2530 = vpop.f32.mrf.mxu0
      %2531 = vmatprep.mubr.bf16.mxu0 0
      %2532 = vmatmul.mubr.bf16.gmra.mxu0 %v1709
      %v2533 = vpop.f32.mrf.mxu0
      %v2534 = vadd.f32 0.0, %v2533
      %v2535 = vpop.f32.mrf.mxu0
      %v2536 = vpop.f32.mrf.mxu0
      %v2537 = vadd.f32 0.0, %v2536
      %v2538 = vpop.f32.mrf.mxu0
      %2539 = vmatprep.mubr.bf16.mxu0 0
      %2540 = vmatmul.mubr.bf16.gmra.mxu0 %v1712
      %v2541 = vpop.f32.mrf.mxu0
      %v2542 = vadd.f32 0.0, %v2541
      %v2543 = vpop.f32.mrf.mxu0
      %v2544 = vpop.f32.mrf.mxu0
      %v2545 = vadd.f32 0.0, %v2544
      %v2546 = vpop.f32.mrf.mxu0
      %2547 = vmatprep.mubr.bf16.mxu0 0
      %2548 = vmatmul.mubr.bf16.gmra.mxu0 %v1715
      %v2549 = vpop.f32.mrf.mxu0
      %v2550 = vadd.f32 0.0, %v2549
      %v2551 = vpop.f32.mrf.mxu0
      %v2552 = vpop.f32.mrf.mxu0
      %v2553 = vadd.f32 0.0, %v2552
      %v2554 = vpop.f32.mrf.mxu0
      %2555 = vmatprep.mubr.bf16.mxu0 0
      %2556 = vmatmul.mubr.bf16.gmra.mxu0 %v1718
      %v2557 = vpop.f32.mrf.mxu0
      %v2558 = vadd.f32 0.0, %v2557
      %v2559 = vpop.f32.mrf.mxu0
      %v2560 = vpop.f32.mrf.mxu0
      %v2561 = vadd.f32 0.0, %v2560
      %v2562 = vpop.f32.mrf.mxu0
      %2563 = vmatprep.mubr.bf16.mxu0 0
      %2564 = vmatmul.mubr.bf16.gmra.mxu0 %v1721
      %v2565 = vpop.f32.mrf.mxu0
      %v2566 = vadd.f32 0.0, %v2565
      %v2567 = vpop.f32.mrf.mxu0
      %v2568 = vpop.f32.mrf.mxu0
      %v2569 = vadd.f32 0.0, %v2568
      %v2570 = vpop.f32.mrf.mxu0
      %2571 = vmatprep.mubr.bf16.mxu0 0
      %2572 = vmatmul.mubr.bf16.gmra.mxu0 %v1724
      %v2573 = vpop.f32.mrf.mxu0
      %v2574 = vadd.f32 0.0, %v2573
      %v2575 = vpop.f32.mrf.mxu0
      %v2576 = vpop.f32.mrf.mxu0
      %v2577 = vadd.f32 0.0, %v2576
      %v2578 = vpop.f32.mrf.mxu0
      %2579 = vmatprep.mubr.bf16.mxu0 0
      %2580 = vmatmul.mubr.bf16.gmra.mxu0 %v1727
      %v2581 = vpop.f32.mrf.mxu0
      %v2582 = vadd.f32 0.0, %v2581
      %v2583 = vpop.f32.mrf.mxu0
      %v2584 = vpop.f32.mrf.mxu0
      %v2585 = vadd.f32 0.0, %v2584
      %v2586 = vpop.f32.mrf.mxu0
      %2587 = vmatprep.mubr.bf16.mxu0 0
      %2588 = vmatmul.mubr.bf16.gmra.mxu0 %v1730
      %v2589 = vpop.f32.mrf.mxu0
      %v2590 = vadd.f32 0.0, %v2589
      %v2591 = vpop.f32.mrf.mxu0
      %v2592 = vpop.f32.mrf.mxu0
      %v2593 = vadd.f32 0.0, %v2592
      %v2594 = vpop.f32.mrf.mxu0
      %2595 = vmatprep.mubr.bf16.mxu0 0
      %2596 = vmatmul.mubr.bf16.gmra.mxu0 %v1733
      %v2597 = vpop.f32.mrf.mxu0
      %v2598 = vadd.f32 0.0, %v2597
      %v2599 = vpop.f32.mrf.mxu0
      %v2600 = vpop.f32.mrf.mxu0
      %v2601 = vadd.f32 0.0, %v2600
      %v2602 = vpop.f32.mrf.mxu0
      %2603 = vmatprep.mubr.bf16.mxu0 0
      %2604 = vmatmul.mubr.bf16.gmra.mxu0 %v1736
      %v2605 = vpop.f32.mrf.mxu0
      %v2606 = vadd.f32 0.0, %v2605
      %v2607 = vpop.f32.mrf.mxu0
      %v2608 = vpop.f32.mrf.mxu0
      %v2609 = vadd.f32 0.0, %v2608
      %v2610 = vpop.f32.mrf.mxu0
      %2611 = vmatprep.mubr.bf16.mxu0 0
      %2612 = vmatmul.mubr.bf16.gmra.mxu0 %v1739
      %v2613 = vpop.f32.mrf.mxu0
      %v2614 = vadd.f32 0.0, %v2613
      %v2615 = vpop.f32.mrf.mxu0
      %v2616 = vpop.f32.mrf.mxu0
      %v2617 = vadd.f32 0.0, %v2616
      %v2618 = vpop.f32.mrf.mxu0
      %2619 = vmatprep.mubr.bf16.mxu0 0
      %2620 = vmatmul.mubr.bf16.gmra.mxu0 %v1742
      %v2621 = vpop.f32.mrf.mxu0
      %v2622 = vadd.f32 0.0, %v2621
      %v2623 = vpop.f32.mrf.mxu0
      %v2624 = vpop.f32.mrf.mxu0
      %v2625 = vadd.f32 0.0, %v2624
      %v2626 = vpop.f32.mrf.mxu0
      %2627 = vmatprep.mubr.bf16.mxu0 0
      %2628 = vmatmul.mubr.bf16.gmra.mxu0 %v1745
      %v2629 = vpop.f32.mrf.mxu0
      %v2630 = vadd.f32 0.0, %v2629
      %v2631 = vpop.f32.mrf.mxu0
      %v2632 = vpop.f32.mrf.mxu0
      %v2633 = vadd.f32 0.0, %v2632
      %v2634 = vpop.f32.mrf.mxu0
      %2635 = vmatprep.mubr.bf16.mxu0 0
      %2636 = vmatmul.mubr.bf16.gmra.mxu0 %v1748
      %v2637 = vpop.f32.mrf.mxu0
      %v2638 = vadd.f32 0.0, %v2637
      %v2639 = vpop.f32.mrf.mxu0
      %v2640 = vpop.f32.mrf.mxu0
      %v2641 = vadd.f32 0.0, %v2640
      %v2642 = vpop.f32.mrf.mxu0
      %2643 = vmatprep.mubr.bf16.mxu0 0
      %2644 = vmatmul.mubr.bf16.gmra.mxu0 %v1751
      %v2645 = vpop.f32.mrf.mxu0
      %v2646 = vadd.f32 0.0, %v2645
      %v2647 = vpop.f32.mrf.mxu0
      %v2648 = vpop.f32.mrf.mxu0
      %v2649 = vadd.f32 0.0, %v2648
      %v2650 = vpop.f32.mrf.mxu0
      %2651 = vmatprep.mubr.bf16.mxu0 0
      %2652 = vmatmul.mubr.bf16.gmra.mxu0 %v1754
      %v2653 = vpop.f32.mrf.mxu0
      %v2654 = vadd.f32 0.0, %v2653
      %v2655 = vpop.f32.mrf.mxu0
      %v2656 = vpop.f32.mrf.mxu0
      %v2657 = vadd.f32 0.0, %v2656
      %v2658 = vpop.f32.mrf.mxu0
      %2659 = vmatprep.mubr.bf16.mxu0 0
      %2660 = vmatmul.mubr.bf16.gmra.mxu0 %v1757
      %v2661 = vpop.f32.mrf.mxu0
      %v2662 = vadd.f32 0.0, %v2661
      %v2663 = vpop.f32.mrf.mxu0
      %v2664 = vpop.f32.mrf.mxu0
      %v2665 = vadd.f32 0.0, %v2664
      %v2666 = vpop.f32.mrf.mxu0
      %2667 = vmatprep.mubr.bf16.mxu0 0
      %2668 = vmatmul.mubr.bf16.gmra.mxu0 %v1760
      %v2669 = vpop.f32.mrf.mxu0
      %v2670 = vadd.f32 0.0, %v2669
      %v2671 = vpop.f32.mrf.mxu0
      %v2672 = vpop.f32.mrf.mxu0
      %v2673 = vadd.f32 0.0, %v2672
      %v2674 = vpop.f32.mrf.mxu0
      %2675 = vmatprep.mubr.bf16.mxu0 0
      %2676 = vmatmul.mubr.bf16.gmra.mxu0 %v1763
      %v2677 = vpop.f32.mrf.mxu0
      %v2678 = vadd.f32 0.0, %v2677
      %v2679 = vpop.f32.mrf.mxu0
      %v2680 = vpop.f32.mrf.mxu0
      %v2681 = vadd.f32 0.0, %v2680
      %v2682 = vpop.f32.mrf.mxu0
      %2683 = vmatprep.mubr.bf16.mxu0 0
      %2684 = vmatmul.mubr.bf16.gmra.mxu0 %v1766
      %v2685 = vpop.f32.mrf.mxu0
      %v2686 = vadd.f32 0.0, %v2685
      %v2687 = vpop.f32.mrf.mxu0
      %v2688 = vpop.f32.mrf.mxu0
      %v2689 = vadd.f32 0.0, %v2688
      %v2690 = vpop.f32.mrf.mxu0
      %2691 = vmatprep.mubr.bf16.mxu0 0
      %2692 = vmatmul.mubr.bf16.gmra.mxu0 %v1769
      %v2693 = vpop.f32.mrf.mxu0
      %v2694 = vadd.f32 0.0, %v2693
      %v2695 = vpop.f32.mrf.mxu0
      %v2696 = vpop.f32.mrf.mxu0
      %v2697 = vadd.f32 0.0, %v2696
      %v2698 = vpop.f32.mrf.mxu0
      %2699 = vmatprep.mubr.bf16.mxu0 0
      %2700 = vmatmul.mubr.bf16.gmra.mxu0 %v1772
      %v2701 = vpop.f32.mrf.mxu0
      %v2702 = vadd.f32 0.0, %v2701
      %v2703 = vpop.f32.mrf.mxu0
      %v2704 = vpop.f32.mrf.mxu0
      %v2705 = vadd.f32 0.0, %v2704
      %v2706 = vpop.f32.mrf.mxu0
      %2707 = vmatprep.mubr.bf16.mxu0 0
      %2708 = vmatmul.mubr.bf16.gmra.mxu0 %v1775
      %v2709 = vpop.f32.mrf.mxu0
      %v2710 = vadd.f32 0.0, %v2709
      %v2711 = vpop.f32.mrf.mxu0
      %v2712 = vpop.f32.mrf.mxu0
      %v2713 = vadd.f32 0.0, %v2712
      %v2714 = vpop.f32.mrf.mxu0
      %2715 = vmatprep.mubr.bf16.mxu0 0
      %2716 = vmatmul.mubr.bf16.gmra.mxu0 %v1778
      %v2717 = vpop.f32.mrf.mxu0
      %v2718 = vadd.f32 0.0, %v2717
      %v2719 = vpop.f32.mrf.mxu0
      %v2720 = vpop.f32.mrf.mxu0
      %v2721 = vadd.f32 0.0, %v2720
      %v2722 = vpop.f32.mrf.mxu0
      %2723 = vmatprep.mubr.bf16.mxu0 0
      %2724 = vmatmul.mubr.bf16.gmra.mxu0 %v1781
      %v2725 = vpop.f32.mrf.mxu0
      %v2726 = vadd.f32 0.0, %v2725
      %v2727 = vpop.f32.mrf.mxu0
      %v2728 = vpop.f32.mrf.mxu0
      %v2729 = vadd.f32 0.0, %v2728
      %v2730 = vpop.f32.mrf.mxu0
      %2731 = vmatprep.mubr.bf16.mxu0 0
      %2732 = vmatmul.mubr.bf16.gmra.mxu0 %v1784
      %v2733 = vpop.f32.mrf.mxu0
      %v2734 = vadd.f32 0.0, %v2733
      %v2735 = vpop.f32.mrf.mxu0
      %v2736 = vpop.f32.mrf.mxu0
      %v2737 = vadd.f32 0.0, %v2736
      %v2738 = vpop.f32.mrf.mxu0
      %2739 = vmatprep.mubr.bf16.mxu0 0
      %2740 = vmatmul.mubr.bf16.gmra.mxu0 %v1787
      %v2741 = vpop.f32.mrf.mxu0
      %v2742 = vadd.f32 0.0, %v2741
      %v2743 = vpop.f32.mrf.mxu0
      %v2744 = vpop.f32.mrf.mxu0
      %v2745 = vadd.f32 0.0, %v2744
      %v2746 = vpop.f32.mrf.mxu0
      %2747 = vmatprep.mubr.bf16.mxu0 0
      %2748 = vmatmul.mubr.bf16.gmra.mxu0 %v1790
      %v2749 = vpop.f32.mrf.mxu0
      %v2750 = vadd.f32 0.0, %v2749
      %v2751 = vpop.f32.mrf.mxu0
      %v2752 = vpop.f32.mrf.mxu0
      %v2753 = vadd.f32 0.0, %v2752
      %v2754 = vpop.f32.mrf.mxu0
      %2755 = vmatprep.mubr.bf16.mxu0 0
      %2756 = vmatmul.mubr.bf16.gmra.mxu0 %v1793
      %v2757 = vpop.f32.mrf.mxu0
      %v2758 = vadd.f32 0.0, %v2757
      %v2759 = vpop.f32.mrf.mxu0
      %v2760 = vpop.f32.mrf.mxu0
      %v2761 = vadd.f32 0.0, %v2760
      %v2762 = vpop.f32.mrf.mxu0
      %2763 = vmatprep.mubr.bf16.mxu0 0
      %2764 = vmatmul.mubr.bf16.gmra.mxu0 %v1796
      %v2765 = vpop.f32.mrf.mxu0
      %v2766 = vadd.f32 0.0, %v2765
      %v2767 = vpop.f32.mrf.mxu0
      %v2768 = vpop.f32.mrf.mxu0
      %v2769 = vadd.f32 0.0, %v2768
      %v2770 = vpop.f32.mrf.mxu0
      %2771 = vmatprep.mubr.bf16.mxu0 0
      %2772 = vmatmul.mubr.bf16.gmra.mxu0 %v1799
      %v2773 = vpop.f32.mrf.mxu0
      %v2774 = vadd.f32 0.0, %v2773
      %v2775 = vpop.f32.mrf.mxu0
      %v2776 = vpop.f32.mrf.mxu0
      %v2777 = vadd.f32 0.0, %v2776
      %v2778 = vpop.f32.mrf.mxu0
      %2779 = vmatprep.mubr.bf16.mxu0 0
      %2780 = vmatmul.mubr.bf16.gmra.mxu0 %v1802
      %v2781 = vpop.f32.mrf.mxu0
      %v2782 = vadd.f32 0.0, %v2781
      %v2783 = vpop.f32.mrf.mxu0
      %v2784 = vpop.f32.mrf.mxu0
      %v2785 = vadd.f32 0.0, %v2784
      %v2786 = vpop.f32.mrf.mxu0
      %2787 = vmatprep.mubr.bf16.mxu0 0
      %2788 = vmatmul.mubr.bf16.gmra.mxu0 %v1805
      %v2789 = vpop.f32.mrf.mxu0
      %v2790 = vadd.f32 0.0, %v2789
      %v2791 = vpop.f32.mrf.mxu0
      %v2792 = vpop.f32.mrf.mxu0
      %v2793 = vadd.f32 0.0, %v2792
      %v2794 = vpop.f32.mrf.mxu0
      %2795 = vmatprep.mubr.bf16.mxu0 0
      %2796 = vmatmul.mubr.bf16.gmra.mxu0 %v1808
      %v2797 = vpop.f32.mrf.mxu0
      %v2798 = vadd.f32 0.0, %v2797
      %v2799 = vpop.f32.mrf.mxu0
      %v2800 = vpop.f32.mrf.mxu0
      %v2801 = vadd.f32 0.0, %v2800
      %v2802 = vpop.f32.mrf.mxu0
      %2803 = vmatprep.mubr.bf16.mxu0 0
      %2804 = vmatmul.mubr.bf16.gmra.mxu0 %v1811
      %v2805 = vpop.f32.mrf.mxu0
      %v2806 = vadd.f32 0.0, %v2805
      %v2807 = vpop.f32.mrf.mxu0
      %v2808 = vpop.f32.mrf.mxu0
      %v2809 = vadd.f32 0.0, %v2808
      %v2810 = vpop.f32.mrf.mxu0
      %2811 = vmatprep.mubr.bf16.mxu0 0
      %2812 = vmatmul.mubr.bf16.gmra.mxu0 %v1814
      %v2813 = vpop.f32.mrf.mxu0
      %v2814 = vadd.f32 0.0, %v2813
      %v2815 = vpop.f32.mrf.mxu0
      %v2816 = vpop.f32.mrf.mxu0
      %v2817 = vadd.f32 0.0, %v2816
      %v2818 = vpop.f32.mrf.mxu0
      %2819 = vmatprep.mubr.bf16.mxu0 0
      %2820 = vmatmul.mubr.bf16.gmra.mxu0 %v1817
      %v2821 = vpop.f32.mrf.mxu0
      %v2822 = vadd.f32 0.0, %v2821
      %v2823 = vpop.f32.mrf.mxu0
      %v2824 = vpop.f32.mrf.mxu0
      %v2825 = vadd.f32 0.0, %v2824
      %v2826 = vpop.f32.mrf.mxu0
      %2827 = vmatprep.mubr.bf16.mxu0 0
      %2828 = vmatmul.mubr.bf16.gmra.mxu0 %v1820
      %v2829 = vpop.f32.mrf.mxu0
      %v2830 = vadd.f32 0.0, %v2829
      %v2831 = vpop.f32.mrf.mxu0
      %v2832 = vpop.f32.mrf.mxu0
      %v2833 = vadd.f32 0.0, %v2832
      %v2834 = vpop.f32.mrf.mxu0
      %2835 = vmatprep.mubr.bf16.mxu0 0
      %2836 = vmatmul.mubr.bf16.gmra.mxu0 %v1823
      %v2837 = vpop.f32.mrf.mxu0
      %v2838 = vadd.f32 0.0, %v2837
      %v2839 = vpop.f32.mrf.mxu0
      %v2840 = vpop.f32.mrf.mxu0
      %v2841 = vadd.f32 0.0, %v2840
      %v2842 = vpop.f32.mrf.mxu0
      %2843 = vmatprep.mubr.bf16.mxu0 0
      %2844 = vmatmul.mubr.bf16.gmra.mxu0 %v1826
      %v2845 = vpop.f32.mrf.mxu0
      %v2846 = vadd.f32 0.0, %v2845
      %v2847 = vpop.f32.mrf.mxu0
      %v2848 = vpop.f32.mrf.mxu0
      %v2849 = vadd.f32 0.0, %v2848
      %v2850 = vpop.f32.mrf.mxu0
      %2851 = vmatprep.mubr.bf16.mxu0 0
      %2852 = vmatmul.mubr.bf16.gmra.mxu0 %v1829
      %v2853 = vpop.f32.mrf.mxu0
      %v2854 = vadd.f32 0.0, %v2853
      %v2855 = vpop.f32.mrf.mxu0
      %v2856 = vpop.f32.mrf.mxu0
      %v2857 = vadd.f32 0.0, %v2856
      %v2858 = vpop.f32.mrf.mxu0
      %2859 = vmatprep.mubr.bf16.mxu0 0
      %2860 = vmatmul.mubr.bf16.gmra.mxu0 %v1832
      %v2861 = vpop.f32.mrf.mxu0
      %v2862 = vadd.f32 0.0, %v2861
      %v2863 = vpop.f32.mrf.mxu0
      %v2864 = vpop.f32.mrf.mxu0
      %v2865 = vadd.f32 0.0, %v2864
      %v2866 = vpop.f32.mrf.mxu0
      %2867 = vmatprep.mubr.bf16.mxu0 0
      %2868 = vmatmul.mubr.bf16.gmra.mxu0 %v1835
      %v2869 = vpop.f32.mrf.mxu0
      %v2870 = vadd.f32 0.0, %v2869
      %v2871 = vpop.f32.mrf.mxu0
      %v2872 = vpop.f32.mrf.mxu0
      %v2873 = vadd.f32 0.0, %v2872
      %v2874 = vpop.f32.mrf.mxu0
      %2875 = vmatprep.mubr.bf16.mxu0 0
      %2876 = vmatmul.mubr.bf16.gmra.mxu0 %v1838
      %v2877 = vpop.f32.mrf.mxu0
      %v2878 = vadd.f32 0.0, %v2877
      %v2879 = vpop.f32.mrf.mxu0
      %v2880 = vpop.f32.mrf.mxu0
      %v2881 = vadd.f32 0.0, %v2880
      %v2882 = vpop.f32.mrf.mxu0
      %2883 = vmatprep.mubr.bf16.mxu0 0
      %2884 = vmatmul.mubr.bf16.gmra.mxu0 %v1841
      %v2885 = vpop.f32.mrf.mxu0
      %v2886 = vadd.f32 0.0, %v2885
      %v2887 = vpop.f32.mrf.mxu0
      %v2888 = vpop.f32.mrf.mxu0
      %v2889 = vadd.f32 0.0, %v2888
      %v2890 = vpop.f32.mrf.mxu0
      %2891 = vmatprep.mubr.bf16.mxu0 0
      %2892 = vmatmul.mubr.bf16.gmra.mxu0 %v1844
      %v2893 = vpop.f32.mrf.mxu0
      %v2894 = vadd.f32 0.0, %v2893
      %v2895 = vpop.f32.mrf.mxu0
      %v2896 = vpop.f32.mrf.mxu0
      %v2897 = vadd.f32 0.0, %v2896
      %v2898 = vpop.f32.mrf.mxu0
      %2899 = vmatprep.mubr.bf16.mxu0 0
      %2900 = vmatmul.mubr.bf16.gmra.mxu0 %v1847
      %v2901 = vpop.f32.mrf.mxu0
      %v2902 = vadd.f32 0.0, %v2901
      %v2903 = vpop.f32.mrf.mxu0
      %v2904 = vpop.f32.mrf.mxu0
      %v2905 = vadd.f32 0.0, %v2904
      %v2906 = vpop.f32.mrf.mxu0
      %2907 = vmatprep.mubr.bf16.mxu0 0
      %2908 = vmatmul.mubr.bf16.gmra.mxu0 %v1850
      %v2909 = vpop.f32.mrf.mxu0
      %v2910 = vadd.f32 0.0, %v2909
      %v2911 = vpop.f32.mrf.mxu0
      %v2912 = vpop.f32.mrf.mxu0
      %v2913 = vadd.f32 0.0, %v2912
      %v2914 = vpop.f32.mrf.mxu0
      %2915 = vmatprep.mubr.bf16.mxu0 0
      %2916 = vmatmul.mubr.bf16.gmra.mxu0 %v1853
      %v2917 = vpop.f32.mrf.mxu0
      %v2918 = vadd.f32 0.0, %v2917
      %v2919 = vpop.f32.mrf.mxu0
      %v2920 = vpop.f32.mrf.mxu0
      %v2921 = vadd.f32 0.0, %v2920
      %v2922 = vpop.f32.mrf.mxu0
      %2923 = vmatprep.mubr.bf16.mxu0 0
      %2924 = vmatmul.mubr.bf16.gmra.mxu0 %v1856
      %v2925 = vpop.f32.mrf.mxu0
      %v2926 = vadd.f32 0.0, %v2925
      %v2927 = vpop.f32.mrf.mxu0
      %v2928 = vpop.f32.mrf.mxu0
      %v2929 = vadd.f32 0.0, %v2928
      %v2930 = vpop.f32.mrf.mxu0
      %2931 = vmatprep.mubr.bf16.mxu0 0
      %2932 = vmatmul.mubr.bf16.gmra.mxu0 %v1859
      %v2933 = vpop.f32.mrf.mxu0
      %v2934 = vadd.f32 0.0, %v2933
      %v2935 = vpop.f32.mrf.mxu0
      %v2936 = vpop.f32.mrf.mxu0
      %v2937 = vadd.f32 0.0, %v2936
      %v2938 = vpop.f32.mrf.mxu0
      %2939 = vmatprep.mubr.bf16.mxu0 0
      %2940 = vmatmul.mubr.bf16.gmra.mxu0 %v1862
      %v2941 = vpop.f32.mrf.mxu0
      %v2942 = vadd.f32 0.0, %v2941
      %v2943 = vpop.f32.mrf.mxu0
      %v2944 = vpop.f32.mrf.mxu0
      %v2945 = vadd.f32 0.0, %v2944
      %v2946 = vpop.f32.mrf.mxu0
      %2947 = vmatprep.mubr.bf16.mxu0 0
      %2948 = vmatmul.mubr.bf16.gmra.mxu0 %v1865
      %v2949 = vpop.f32.mrf.mxu0
      %v2950 = vadd.f32 0.0, %v2949
      %v2951 = vpop.f32.mrf.mxu0
      %v2952 = vpop.f32.mrf.mxu0
      %v2953 = vadd.f32 0.0, %v2952
      %v2954 = vpop.f32.mrf.mxu0
      %2955 = vmatprep.mubr.bf16.mxu0 0
      %2956 = vmatmul.mubr.bf16.gmra.mxu0 %v1868
      %v2957 = vpop.f32.mrf.mxu0
      %v2958 = vadd.f32 0.0, %v2957
      %v2959 = vpop.f32.mrf.mxu0
      %v2960 = vpop.f32.mrf.mxu0
      %v2961 = vadd.f32 0.0, %v2960
      %v2962 = vpop.f32.mrf.mxu0
      %2963 = vmatprep.mubr.bf16.mxu0 0
      %2964 = vmatmul.mubr.bf16.gmra.mxu0 %v1871
      %v2965 = vpop.f32.mrf.mxu0
      %v2966 = vadd.f32 0.0, %v2965
      %v2967 = vpop.f32.mrf.mxu0
      %v2968 = vpop.f32.mrf.mxu0
      %v2969 = vadd.f32 0.0, %v2968
      %v2970 = vpop.f32.mrf.mxu0
      %2971 = vmatprep.mubr.bf16.mxu0 0
      %2972 = vmatmul.mubr.bf16.gmra.mxu0 %v1874
      %v2973 = vpop.f32.mrf.mxu0
      %v2974 = vadd.f32 0.0, %v2973
      %v2975 = vpop.f32.mrf.mxu0
      %v2976 = vpop.f32.mrf.mxu0
      %v2977 = vadd.f32 0.0, %v2976
      %v2978 = vpop.f32.mrf.mxu0
      %2979 = vmatprep.mubr.bf16.mxu0 0
      %2980 = vmatmul.mubr.bf16.gmra.mxu0 %v1877
      %v2981 = vpop.f32.mrf.mxu0
      %v2982 = vadd.f32 0.0, %v2981
      %v2983 = vpop.f32.mrf.mxu0
      %v2984 = vpop.f32.mrf.mxu0
      %v2985 = vadd.f32 0.0, %v2984
      %v2986 = vpop.f32.mrf.mxu0
      %2987 = vmatprep.mubr.bf16.mxu0 0
      %2988 = vmatmul.mubr.bf16.gmra.mxu0 %v1880
      %v2989 = vpop.f32.mrf.mxu0
      %v2990 = vadd.f32 0.0, %v2989
      %v2991 = vpop.f32.mrf.mxu0
      %v2992 = vpop.f32.mrf.mxu0
      %v2993 = vadd.f32 0.0, %v2992
      %v2994 = vpop.f32.mrf.mxu0
      %2995 = vmatprep.mubr.bf16.mxu0 0
      %2996 = vmatmul.mubr.bf16.gmra.mxu0 %v1883
      %v2997 = vpop.f32.mrf.mxu0
      %v2998 = vadd.f32 0.0, %v2997
      %v2999 = vpop.f32.mrf.mxu0
      %v3000 = vpop.f32.mrf.mxu0
      %v3001 = vadd.f32 0.0, %v3000
      %v3002 = vpop.f32.mrf.mxu0
      %3003 = vmatprep.mubr.bf16.mxu0 0
      %3004 = vmatmul.mubr.bf16.gmra.mxu0 %v1886
      %v3005 = vpop.f32.mrf.mxu0
      %v3006 = vadd.f32 0.0, %v3005
      %v3007 = vpop.f32.mrf.mxu0
      %v3008 = vpop.f32.mrf.mxu0
      %v3009 = vadd.f32 0.0, %v3008
      %v3010 = vpop.f32.mrf.mxu0
      %3011 = vmatprep.mubr.bf16.mxu0 0
      %3012 = vmatmul.mubr.bf16.gmra.mxu0 %v1889
      %v3013 = vpop.f32.mrf.mxu0
      %v3014 = vadd.f32 0.0, %v3013
      %v3015 = vpop.f32.mrf.mxu0
      %v3016 = vpop.f32.mrf.mxu0
      %v3017 = vadd.f32 0.0, %v3016
      %v3018 = vpop.f32.mrf.mxu0
      %3019 = vmatprep.mubr.bf16.mxu0 0
      %3020 = vmatmul.mubr.bf16.gmra.mxu0 %v1892
      %v3021 = vpop.f32.mrf.mxu0
      %v3022 = vadd.f32 0.0, %v3021
      %v3023 = vpop.f32.mrf.mxu0
      %v3024 = vpop.f32.mrf.mxu0
      %v3025 = vadd.f32 0.0, %v3024
      %v3026 = vpop.f32.mrf.mxu0
      %3027 = vmatprep.mubr.bf16.mxu0 0
      %3028 = vmatmul.mubr.bf16.gmra.mxu0 %v1895
      %v3029 = vpop.f32.mrf.mxu0
      %v3030 = vadd.f32 0.0, %v3029
      %v3031 = vpop.f32.mrf.mxu0
      %v3032 = vpop.f32.mrf.mxu0
      %v3033 = vadd.f32 0.0, %v3032
      %v3034 = vpop.f32.mrf.mxu0
      %3035 = vmatprep.mubr.bf16.mxu0 0
      %3036 = vmatmul.mubr.bf16.gmra.mxu0 %v1898
      %v3037 = vpop.f32.mrf.mxu0
      %v3038 = vadd.f32 0.0, %v3037
      %v3039 = vpop.f32.mrf.mxu0
      %v3040 = vpop.f32.mrf.mxu0
      %v3041 = vadd.f32 0.0, %v3040
      %v3042 = vpop.f32.mrf.mxu0
      %3043 = vmatprep.mubr.bf16.mxu0 0
      %3044 = vmatmul.mubr.bf16.gmra.mxu0 %v1901
      %v3045 = vpop.f32.mrf.mxu0
      %v3046 = vadd.f32 0.0, %v3045
      %v3047 = vpop.f32.mrf.mxu0
      %v3048 = vpop.f32.mrf.mxu0
      %v3049 = vadd.f32 0.0, %v3048
      %v3050 = vpop.f32.mrf.mxu0
      %3051 = vmatprep.mubr.bf16.mxu0 0
      %3052 = vmatmul.mubr.bf16.gmra.mxu0 %v1904
      %v3053 = vpop.f32.mrf.mxu0
      %v3054 = vadd.f32 0.0, %v3053
      %v3055 = vpop.f32.mrf.mxu0
      %v3056 = vpop.f32.mrf.mxu0
      %v3057 = vadd.f32 0.0, %v3056
      %v3058 = vpop.f32.mrf.mxu0
      %3059 = vmatprep.mubr.bf16.mxu0 0
      %3060 = vmatmul.mubr.bf16.gmra.mxu0 %v1907
      %v3061 = vpop.f32.mrf.mxu0
      %v3062 = vadd.f32 0.0, %v3061
      %v3063 = vpop.f32.mrf.mxu0
      %v3064 = vpop.f32.mrf.mxu0
      %v3065 = vadd.f32 0.0, %v3064
      %v3066 = vpop.f32.mrf.mxu0
      %3067 = vmatprep.mubr.bf16.mxu0 0
      %3068 = vmatmul.mubr.bf16.gmra.mxu0 %v1910
      %v3069 = vpop.f32.mrf.mxu0
      %v3070 = vadd.f32 0.0, %v3069
      %v3071 = vpop.f32.mrf.mxu0
      %v3072 = vpop.f32.mrf.mxu0
      %v3073 = vadd.f32 0.0, %v3072
      %v3074 = vpop.f32.mrf.mxu0
      %3075 = vmatprep.mubr.bf16.mxu0 0
      %3076 = vmatmul.mubr.bf16.gmra.mxu0 %v1913
      %v3077 = vpop.f32.mrf.mxu0
      %v3078 = vadd.f32 0.0, %v3077
      %v3079 = vpop.f32.mrf.mxu0
      %v3080 = vpop.f32.mrf.mxu0
      %v3081 = vadd.f32 0.0, %v3080
      %v3082 = vpop.f32.mrf.mxu0
      %3083 = vmatprep.mubr.bf16.mxu0 0
      %3084 = vmatmul.mubr.bf16.gmra.mxu0 %v1916
      %v3085 = vpop.f32.mrf.mxu0
      %v3086 = vadd.f32 0.0, %v3085
      %v3087 = vpop.f32.mrf.mxu0
      %v3088 = vpop.f32.mrf.mxu0
      %v3089 = vadd.f32 0.0, %v3088
      %v3090 = vpop.f32.mrf.mxu0
      %3091 = vmatprep.mubr.bf16.mxu0 0
      %3092 = vmatmul.mubr.bf16.gmra.mxu0 %v1919
      %v3093 = vpop.f32.mrf.mxu0
      %v3094 = vadd.f32 0.0, %v3093
      %v3095 = vpop.f32.mrf.mxu0
      %v3096 = vpop.f32.mrf.mxu0
      %v3097 = vadd.f32 0.0, %v3096
      %v3098 = vpop.f32.mrf.mxu0
      %3099 = vmatprep.mubr.bf16.mxu0 0
      %3100 = vmatmul.mubr.bf16.gmra.mxu0 %v1922
      %v3101 = vpop.f32.mrf.mxu0
      %v3102 = vadd.f32 0.0, %v3101
      %v3103 = vpop.f32.mrf.mxu0
      %v3104 = vpop.f32.mrf.mxu0
      %v3105 = vadd.f32 0.0, %v3104
      %v3106 = vpop.f32.mrf.mxu0
      %3107 = vmatprep.mubr.bf16.mxu0 0
      %3108 = vmatmul.mubr.bf16.gmra.mxu0 %v1925
      %v3109 = vpop.f32.mrf.mxu0
      %v3110 = vadd.f32 0.0, %v3109
      %v3111 = vpop.f32.mrf.mxu0
      %v3112 = vpop.f32.mrf.mxu0
      %v3113 = vadd.f32 0.0, %v3112
      %v3114 = vpop.f32.mrf.mxu0
      %3115 = vmatprep.mubr.bf16.mxu0 0
      %3116 = vmatmul.mubr.bf16.gmra.mxu0 %v1928
      %v3117 = vpop.f32.mrf.mxu0
      %v3118 = vadd.f32 0.0, %v3117
      %v3119 = vpop.f32.mrf.mxu0
      %v3120 = vpop.f32.mrf.mxu0
      %v3121 = vadd.f32 0.0, %v3120
      %v3122 = vpop.f32.mrf.mxu0
      %3123 = vmatprep.mubr.bf16.mxu0 0
      %3124 = vmatmul.mubr.bf16.gmra.mxu0 %v1931
      %v3125 = vpop.f32.mrf.mxu0
      %v3126 = vadd.f32 0.0, %v3125
      %v3127 = vpop.f32.mrf.mxu0
      %v3128 = vpop.f32.mrf.mxu0
      %v3129 = vadd.f32 0.0, %v3128
      %v3130 = vpop.f32.mrf.mxu0
      %3131 = vmatprep.mubr.bf16.mxu0 0
      %3132 = vmatmul.mubr.bf16.gmra.mxu0 %v1934
      %v3133 = vpop.f32.mrf.mxu0
      %v3134 = vadd.f32 0.0, %v3133
      %v3135 = vpop.f32.mrf.mxu0
      %v3136 = vpop.f32.mrf.mxu0
      %v3137 = vadd.f32 0.0, %v3136
      %v3138 = vpop.f32.mrf.mxu0
      %3139 = vmatprep.mubr.bf16.mxu0 0
      %3140 = vmatmul.mubr.bf16.gmra.mxu0 %v1937
      %v3141 = vpop.f32.mrf.mxu0
      %v3142 = vadd.f32 0.0, %v3141
      %v3143 = vpop.f32.mrf.mxu0
      %v3144 = vpop.f32.mrf.mxu0
      %v3145 = vadd.f32 0.0, %v3144
      %v3146 = vpop.f32.mrf.mxu0
      %3147 = vmatprep.mubr.bf16.mxu0 0
      %3148 = vmatmul.mubr.bf16.gmra.mxu0 %v1940
      %v3149 = vpop.f32.mrf.mxu0
      %v3150 = vadd.f32 0.0, %v3149
      %v3151 = vpop.f32.mrf.mxu0
      %v3152 = vpop.f32.mrf.mxu0
      %v3153 = vadd.f32 0.0, %v3152
      %v3154 = vpop.f32.mrf.mxu0
      %3155 = vmatprep.mubr.bf16.mxu0 0
      %3156 = vmatmul.mubr.bf16.gmra.mxu0 %v1943
      %v3157 = vpop.f32.mrf.mxu0
      %v3158 = vadd.f32 0.0, %v3157
      %v3159 = vpop.f32.mrf.mxu0
      %v3160 = vpop.f32.mrf.mxu0
      %v3161 = vadd.f32 0.0, %v3160
      %v3162 = vpop.f32.mrf.mxu0
      %3163 = vmatprep.mubr.bf16.mxu0 0
      %3164 = vmatmul.mubr.bf16.gmra.mxu0 %v1946
      %v3165 = vpop.f32.mrf.mxu0
      %v3166 = vadd.f32 0.0, %v3165
      %v3167 = vpop.f32.mrf.mxu0
      %v3168 = vpop.f32.mrf.mxu0
      %v3169 = vadd.f32 0.0, %v3168
      %v3170 = vpop.f32.mrf.mxu0
      %3171 = vmatprep.mubr.bf16.mxu0 0
      %3172 = vmatmul.mubr.bf16.gmra.mxu0 %v1949
      %v3173 = vpop.f32.mrf.mxu0
      %v3174 = vadd.f32 0.0, %v3173
      %v3175 = vpop.f32.mrf.mxu0
      %v3176 = vpop.f32.mrf.mxu0
      %v3177 = vadd.f32 0.0, %v3176
      %v3178 = vpop.f32.mrf.mxu0
      %3179 = vmatprep.mubr.bf16.mxu0 0
      %3180 = vmatmul.mubr.bf16.gmra.mxu0 %v1952
      %v3181 = vpop.f32.mrf.mxu0
      %v3182 = vadd.f32 0.0, %v3181
      %v3183 = vpop.f32.mrf.mxu0
      %v3184 = vpop.f32.mrf.mxu0
      %v3185 = vadd.f32 0.0, %v3184
      %v3186 = vpop.f32.mrf.mxu0
      %3187 = vmatprep.mubr.bf16.mxu0 0
      %3188 = vmatmul.mubr.bf16.gmra.mxu0 %v1955
      %v3189 = vpop.f32.mrf.mxu0
      %v3190 = vadd.f32 0.0, %v3189
      %v3191 = vpop.f32.mrf.mxu0
      %v3192 = vpop.f32.mrf.mxu0
      %v3193 = vadd.f32 0.0, %v3192
      %v3194 = vpop.f32.mrf.mxu0
      %3195 = vmatprep.mubr.bf16.mxu0 0
      %3196 = vmatmul.mubr.bf16.gmra.mxu0 %v1958
      %v3197 = vpop.f32.mrf.mxu0
      %v3198 = vadd.f32 0.0, %v3197
      %v3199 = vpop.f32.mrf.mxu0
      %v3200 = vpop.f32.mrf.mxu0
      %v3201 = vadd.f32 0.0, %v3200
      %v3202 = vpop.f32.mrf.mxu0
      %3203 = vmatprep.mubr.bf16.mxu0 0
      %3204 = vmatmul.mubr.bf16.gmra.mxu0 %v1961
      %v3205 = vpop.f32.mrf.mxu0
      %v3206 = vadd.f32 0.0, %v3205
      %v3207 = vpop.f32.mrf.mxu0
      %v3208 = vpop.f32.mrf.mxu0
      %v3209 = vadd.f32 0.0, %v3208
      %v3210 = vpop.f32.mrf.mxu0
      %3211 = vmatprep.mubr.bf16.mxu0 0
      %3212 = vmatmul.mubr.bf16.gmra.mxu0 %v1964
      %v3213 = vpop.f32.mrf.mxu0
      %v3214 = vadd.f32 0.0, %v3213
      %v3215 = vpop.f32.mrf.mxu0
      %v3216 = vpop.f32.mrf.mxu0
      %v3217 = vadd.f32 0.0, %v3216
      %v3218 = vpop.f32.mrf.mxu0
      %3219 = vmatprep.mubr.bf16.mxu0 0
      %3220 = vmatmul.mubr.bf16.gmra.mxu0 %v1967
      %v3221 = vpop.f32.mrf.mxu0
      %v3222 = vadd.f32 0.0, %v3221
      %v3223 = vpop.f32.mrf.mxu0
      %v3224 = vpop.f32.mrf.mxu0
      %v3225 = vadd.f32 0.0, %v3224
      %v3226 = vpop.f32.mrf.mxu0
      %3227 = vmatprep.mubr.bf16.mxu0 0
      %3228 = vmatmul.mubr.bf16.gmra.mxu0 %v1970
      %v3229 = vpop.f32.mrf.mxu0
      %v3230 = vadd.f32 0.0, %v3229
      %v3231 = vpop.f32.mrf.mxu0
      %v3232 = vpop.f32.mrf.mxu0
      %v3233 = vadd.f32 0.0, %v3232
      %v3234 = vpop.f32.mrf.mxu0
      %3235 = vmatprep.mubr.bf16.mxu0 0
      %3236 = vmatmul.mubr.bf16.gmra.mxu0 %v1973
      %v3237 = vpop.f32.mrf.mxu0
      %v3238 = vadd.f32 0.0, %v3237
      %v3239 = vpop.f32.mrf.mxu0
      %v3240 = vpop.f32.mrf.mxu0
      %v3241 = vadd.f32 0.0, %v3240
      %v3242 = vpop.f32.mrf.mxu0
      %3243 = vmatprep.mubr.bf16.mxu0 0
      %3244 = vmatmul.mubr.bf16.gmra.mxu0 %v1976
      %v3245 = vpop.f32.mrf.mxu0
      %v3246 = vadd.f32 0.0, %v3245
      %v3247 = vpop.f32.mrf.mxu0
      %v3248 = vpop.f32.mrf.mxu0
      %v3249 = vadd.f32 0.0, %v3248
      %v3250 = vpop.f32.mrf.mxu0
      %3251 = vmatprep.mubr.bf16.mxu0 0
      %3252 = vmatmul.mubr.bf16.gmra.mxu0 %v1979
      %v3253 = vpop.f32.mrf.mxu0
      %v3254 = vadd.f32 0.0, %v3253
      %v3255 = vpop.f32.mrf.mxu0
      %v3256 = vpop.f32.mrf.mxu0
      %v3257 = vadd.f32 0.0, %v3256
      %v3258 = vpop.f32.mrf.mxu0
      %3259 = vmatprep.mubr.bf16.mxu0 0
      %3260 = vmatmul.mubr.bf16.gmra.mxu0 %v1982
      %v3261 = vpop.f32.mrf.mxu0
      %v3262 = vadd.f32 0.0, %v3261
      %v3263 = vpop.f32.mrf.mxu0
      %v3264 = vpop.f32.mrf.mxu0
      %v3265 = vadd.f32 0.0, %v3264
      %v3266 = vpop.f32.mrf.mxu0
      %3267 = vmatprep.mubr.bf16.mxu0 0
      %3268 = vmatmul.mubr.bf16.gmra.mxu0 %v1985
      %v3269 = vpop.f32.mrf.mxu0
      %v3270 = vadd.f32 0.0, %v3269
      %v3271 = vpop.f32.mrf.mxu0
      %v3272 = vpop.f32.mrf.mxu0
      %v3273 = vadd.f32 0.0, %v3272
      %v3274 = vpop.f32.mrf.mxu0
      %3275 = vmatprep.mubr.bf16.mxu0 0
      %3276 = vmatmul.mubr.bf16.gmra.mxu0 %v1988
      %v3277 = vpop.f32.mrf.mxu0
      %v3278 = vadd.f32 0.0, %v3277
      %v3279 = vpop.f32.mrf.mxu0
      %v3280 = vpop.f32.mrf.mxu0
      %v3281 = vadd.f32 0.0, %v3280
      %v3282 = vpop.f32.mrf.mxu0
      %3283 = vmatprep.mubr.bf16.mxu0 0
      %3284 = vmatmul.mubr.bf16.gmra.mxu0 %v1991
      %v3285 = vpop.f32.mrf.mxu0
      %v3286 = vadd.f32 0.0, %v3285
      %v3287 = vpop.f32.mrf.mxu0
      %v3288 = vpop.f32.mrf.mxu0
      %v3289 = vadd.f32 0.0, %v3288
      %v3290 = vpop.f32.mrf.mxu0
      %3291 = vmatprep.mubr.bf16.mxu0 0
      %3292 = vmatmul.mubr.bf16.gmra.mxu0 %v1994
      %v3293 = vpop.f32.mrf.mxu0
      %v3294 = vadd.f32 0.0, %v3293
      %v3295 = vpop.f32.mrf.mxu0
      %v3296 = vpop.f32.mrf.mxu0
      %v3297 = vadd.f32 0.0, %v3296
      %v3298 = vpop.f32.mrf.mxu0
      %3299 = vmatprep.mubr.bf16.mxu0 0
      %3300 = vmatmul.mubr.bf16.gmra.mxu0 %v1997
      %v3301 = vpop.f32.mrf.mxu0
      %v3302 = vadd.f32 0.0, %v3301
      %v3303 = vpop.f32.mrf.mxu0
      %v3304 = vpop.f32.mrf.mxu0
      %v3305 = vadd.f32 0.0, %v3304
      %v3306 = vpop.f32.mrf.mxu0
      %3307 = vmatprep.mubr.bf16.mxu0 0
      %3308 = vmatmul.mubr.bf16.gmra.mxu0 %v2000
      %v3309 = vpop.f32.mrf.mxu0
      %v3310 = vadd.f32 0.0, %v3309
      %v3311 = vpop.f32.mrf.mxu0
      %v3312 = vpop.f32.mrf.mxu0
      %v3313 = vadd.f32 0.0, %v3312
      %v3314 = vpop.f32.mrf.mxu0
      %3315 = vmatprep.mubr.bf16.mxu0 0
      %3316 = vmatmul.mubr.bf16.gmra.mxu0 %v2003
      %v3317 = vpop.f32.mrf.mxu0
      %v3318 = vadd.f32 0.0, %v3317
      %v3319 = vpop.f32.mrf.mxu0
      %v3320 = vpop.f32.mrf.mxu0
      %v3321 = vadd.f32 0.0, %v3320
      %v3322 = vpop.f32.mrf.mxu0
      %3323 = vmatprep.mubr.bf16.mxu0 0
      %3324 = vmatmul.mubr.bf16.gmra.mxu0 %v2006
      %v3325 = vpop.f32.mrf.mxu0
      %v3326 = vadd.f32 0.0, %v3325
      %v3327 = vpop.f32.mrf.mxu0
      %v3328 = vpop.f32.mrf.mxu0
      %v3329 = vadd.f32 0.0, %v3328
      %v3330 = vpop.f32.mrf.mxu0
      %3331 = vmatprep.mubr.bf16.mxu0 0
      %3332 = vmatmul.mubr.bf16.gmra.mxu0 %v2009
      %v3333 = vpop.f32.mrf.mxu0
      %v3334 = vadd.f32 0.0, %v3333
      %v3335 = vpop.f32.mrf.mxu0
      %v3336 = vpop.f32.mrf.mxu0
      %v3337 = vadd.f32 0.0, %v3336
      %v3338 = vpop.f32.mrf.mxu0
      %3339 = vmatprep.mubr.bf16.mxu0 0
      %3340 = vmatmul.mubr.bf16.gmra.mxu0 %v2012
      %v3341 = vpop.f32.mrf.mxu0
      %v3342 = vadd.f32 0.0, %v3341
      %v3343 = vpop.f32.mrf.mxu0
      %v3344 = vpop.f32.mrf.mxu0
      %v3345 = vadd.f32 0.0, %v3344
      %v3346 = vpop.f32.mrf.mxu0
      %3347 = vmatprep.mubr.bf16.mxu0 0
      %3348 = vmatmul.mubr.bf16.gmra.mxu0 %v2015
      %v3349 = vpop.f32.mrf.mxu0
      %v3350 = vadd.f32 0.0, %v3349
      %v3351 = vpop.f32.mrf.mxu0
      %v3352 = vpop.f32.mrf.mxu0
      %v3353 = vadd.f32 0.0, %v3352
      %v3354 = vpop.f32.mrf.mxu0
      %3355 = vmatprep.mubr.bf16.mxu0 0
      %3356 = vmatmul.mubr.bf16.gmra.mxu0 %v2018
      %v3357 = vpop.f32.mrf.mxu0
      %v3358 = vadd.f32 0.0, %v3357
      %v3359 = vpop.f32.mrf.mxu0
      %v3360 = vpop.f32.mrf.mxu0
      %v3361 = vadd.f32 0.0, %v3360
      %v3362 = vpop.f32.mrf.mxu0
      %3363 = vmatprep.mubr.bf16.mxu0 0
      %3364 = vmatmul.mubr.bf16.gmra.mxu0 %v2021
      %v3365 = vpop.f32.mrf.mxu0
      %v3366 = vadd.f32 0.0, %v3365
      %v3367 = vpop.f32.mrf.mxu0
      %v3368 = vpop.f32.mrf.mxu0
      %v3369 = vadd.f32 0.0, %v3368
      %v3370 = vpop.f32.mrf.mxu0
      %3371 = vmatprep.mubr.bf16.mxu0 0
      %3372 = vmatmul.mubr.bf16.gmra.mxu0 %v2024
      %v3373 = vpop.f32.mrf.mxu0
      %v3374 = vadd.f32 0.0, %v3373
      %v3375 = vpop.f32.mrf.mxu0
      %v3376 = vpop.f32.mrf.mxu0
      %v3377 = vadd.f32 0.0, %v3376
      %v3378 = vpop.f32.mrf.mxu0
      %3379 = vmatprep.mubr.bf16.mxu0 0
      %3380 = vmatmul.mubr.bf16.gmra.mxu0 %v2027
      %v3381 = vpop.f32.mrf.mxu0
      %v3382 = vadd.f32 0.0, %v3381
      %v3383 = vpop.f32.mrf.mxu0
      %v3384 = vpop.f32.mrf.mxu0
      %v3385 = vadd.f32 0.0, %v3384
      %v3386 = vpop.f32.mrf.mxu0
      %3387 = vmatprep.mubr.bf16.mxu0 0
      %3388 = vmatmul.mubr.bf16.gmra.mxu0 %v2030
      %v3389 = vpop.f32.mrf.mxu0
      %v3390 = vadd.f32 0.0, %v3389
      %v3391 = vpop.f32.mrf.mxu0
      %v3392 = vpop.f32.mrf.mxu0
      %v3393 = vadd.f32 0.0, %v3392
      %v3394 = vpop.f32.mrf.mxu0
      %3395 = vmatprep.mubr.bf16.mxu0 0
      %3396 = vmatmul.mubr.bf16.gmra.mxu0 %v2033
      %v3397 = vpop.f32.mrf.mxu0
      %v3398 = vadd.f32 0.0, %v3397
      %v3399 = vpop.f32.mrf.mxu0
      %v3400 = vpop.f32.mrf.mxu0
      %v3401 = vadd.f32 0.0, %v3400
      %v3402 = vpop.f32.mrf.mxu0
      %3403 = vmatprep.mubr.bf16.mxu0 0
      %3404 = vmatmul.mubr.bf16.gmra.mxu0 %v2036
      %v3405 = vpop.f32.mrf.mxu0
      %v3406 = vadd.f32 0.0, %v3405
      %v3407 = vpop.f32.mrf.mxu0
      %v3408 = vpop.f32.mrf.mxu0
      %v3409 = vadd.f32 0.0, %v3408
      %v3410 = vpop.f32.mrf.mxu0
      %3411 = vmatprep.mubr.bf16.mxu0 0
      %3412 = vmatmul.mubr.bf16.gmra.mxu0 %v2039
      %v3413 = vpop.f32.mrf.mxu0
      %v3414 = vadd.f32 0.0, %v3413
      %v3415 = vpop.f32.mrf.mxu0
      %v3416 = vpop.f32.mrf.mxu0
      %v3417 = vadd.f32 0.0, %v3416
      %v3418 = vpop.f32.mrf.mxu0
      %3419 = vmatprep.mubr.bf16.mxu0 0
      %3420 = vmatmul.mubr.bf16.gmra.mxu0 %v2042
      %v3421 = vpop.f32.mrf.mxu0
      %v3422 = vadd.f32 0.0, %v3421
      %v3423 = vpop.f32.mrf.mxu0
      %v3424 = vpop.f32.mrf.mxu0
      %v3425 = vadd.f32 0.0, %v3424
      %v3426 = vpop.f32.mrf.mxu0
      %3427 = vmatprep.mubr.bf16.mxu0 0
      %3428 = vmatmul.mubr.bf16.gmra.mxu0 %v2045
      %v3429 = vpop.f32.mrf.mxu0
      %v3430 = vadd.f32 0.0, %v3429
      %v3431 = vpop.f32.mrf.mxu0
      %v3432 = vpop.f32.mrf.mxu0
      %v3433 = vadd.f32 0.0, %v3432
      %v3434 = vpop.f32.mrf.mxu0
      %3435 = vmatprep.mubr.bf16.mxu0 0
      %3436 = vmatmul.mubr.bf16.gmra.mxu0 %v2048
      %v3437 = vpop.f32.mrf.mxu0
      %v3438 = vadd.f32 0.0, %v3437
      %v3439 = vpop.f32.mrf.mxu0
      %v3440 = vpop.f32.mrf.mxu0
      %v3441 = vadd.f32 0.0, %v3440
      %v3442 = vpop.f32.mrf.mxu0
      %3443 = vmatprep.mubr.bf16.mxu0 0
      %3444 = vmatmul.mubr.bf16.gmra.mxu0 %v2051
      %v3445 = vpop.f32.mrf.mxu0
      %v3446 = vadd.f32 0.0, %v3445
      %v3447 = vpop.f32.mrf.mxu0
      %v3448 = vpop.f32.mrf.mxu0
      %v3449 = vadd.f32 0.0, %v3448
      %v3450 = vpop.f32.mrf.mxu0
      %3451 = vmatprep.mubr.bf16.mxu0 0
      %3452 = vmatmul.mubr.bf16.gmra.mxu0 %v2054
      %v3453 = vpop.f32.mrf.mxu0
      %v3454 = vadd.f32 0.0, %v3453
      %v3455 = vpop.f32.mrf.mxu0
      %v3456 = vpop.f32.mrf.mxu0
      %v3457 = vadd.f32 0.0, %v3456
      %v3458 = vpop.f32.mrf.mxu0
      %3459 = vmatprep.mubr.bf16.mxu0 0
      %3460 = vmatmul.mubr.bf16.gmra.mxu0 %v2057
      %v3461 = vpop.f32.mrf.mxu0
      %v3462 = vadd.f32 0.0, %v3461
      %v3463 = vpop.f32.mrf.mxu0
      %v3464 = vpop.f32.mrf.mxu0
      %v3465 = vadd.f32 0.0, %v3464
      %v3466 = vpop.f32.mrf.mxu0
      %3467 = vmatprep.mubr.bf16.mxu0 0
      %3468 = vmatmul.mubr.bf16.gmra.mxu0 %v2060
      %v3469 = vpop.f32.mrf.mxu0
      %v3470 = vadd.f32 0.0, %v3469
      %v3471 = vpop.f32.mrf.mxu0
      %v3472 = vpop.f32.mrf.mxu0
      %v3473 = vadd.f32 0.0, %v3472
      %v3474 = vpop.f32.mrf.mxu0
      %3475 = vmatprep.mubr.bf16.mxu0 0
      %3476 = vmatmul.mubr.bf16.gmra.mxu0 %v2063
      %v3477 = vpop.f32.mrf.mxu0
      %v3478 = vadd.f32 0.0, %v3477
      %v3479 = vpop.f32.mrf.mxu0
      %v3480 = vpop.f32.mrf.mxu0
      %v3481 = vadd.f32 0.0, %v3480
      %v3482 = vpop.f32.mrf.mxu0
      %3483 = vmatprep.mubr.bf16.mxu0 0
      %3484 = vmatmul.mubr.bf16.gmra.mxu0 %v2066
      %v3485 = vpop.f32.mrf.mxu0
      %v3486 = vadd.f32 0.0, %v3485
      %v3487 = vpop.f32.mrf.mxu0
      %v3488 = vpop.f32.mrf.mxu0
      %v3489 = vadd.f32 0.0, %v3488
      %v3490 = vpop.f32.mrf.mxu0
      %3491 = vmatprep.mubr.bf16.mxu0 0
      %3492 = vmatmul.mubr.bf16.gmra.mxu0 %v2069
      %v3493 = vpop.f32.mrf.mxu0
      %v3494 = vadd.f32 0.0, %v3493
      %v3495 = vpop.f32.mrf.mxu0
      %v3496 = vpop.f32.mrf.mxu0
      %v3497 = vadd.f32 0.0, %v3496
      %v3498 = vpop.f32.mrf.mxu0
      %3499 = vmatprep.mubr.bf16.mxu0 0
      %3500 = vmatmul.mubr.bf16.gmra.mxu0 %v2072
      %v3501 = vpop.f32.mrf.mxu0
      %v3502 = vadd.f32 0.0, %v3501
      %v3503 = vpop.f32.mrf.mxu0
      %v3504 = vpop.f32.mrf.mxu0
      %v3505 = vadd.f32 0.0, %v3504
      %v3506 = vpop.f32.mrf.mxu0
      %3507 = vmatprep.mubr.bf16.mxu0 0
      %3508 = vmatmul.mubr.bf16.gmra.mxu0 %v2075
      %v3509 = vpop.f32.mrf.mxu0
      %v3510 = vadd.f32 0.0, %v3509
      %v3511 = vpop.f32.mrf.mxu0
      %v3512 = vpop.f32.mrf.mxu0
      %v3513 = vadd.f32 0.0, %v3512
      %v3514 = vpop.f32.mrf.mxu0
      %3515 = vmatprep.mubr.bf16.mxu0 0
      %3516 = vmatmul.mubr.bf16.gmra.mxu0 %v2078
      %v3517 = vpop.f32.mrf.mxu0
      %v3518 = vadd.f32 0.0, %v3517
      %v3519 = vpop.f32.mrf.mxu0
      %v3520 = vpop.f32.mrf.mxu0
      %v3521 = vadd.f32 0.0, %v3520
      %v3522 = vpop.f32.mrf.mxu0
      %3523 = vmatprep.mubr.bf16.mxu0 0
      %3524 = vmatmul.mubr.bf16.gmra.mxu0 %v2081
      %v3525 = vpop.f32.mrf.mxu0
      %v3526 = vadd.f32 0.0, %v3525
      %v3527 = vpop.f32.mrf.mxu0
      %v3528 = vpop.f32.mrf.mxu0
      %v3529 = vadd.f32 0.0, %v3528
      %v3530 = vpop.f32.mrf.mxu0
      %3531 = vmatprep.mubr.bf16.mxu0 0
      %3532 = vmatmul.mubr.bf16.gmra.mxu0 %v2084
      %v3533 = vpop.f32.mrf.mxu0
      %v3534 = vadd.f32 0.0, %v3533
      %v3535 = vpop.f32.mrf.mxu0
      %v3536 = vpop.f32.mrf.mxu0
      %v3537 = vadd.f32 0.0, %v3536
      %v3538 = vpop.f32.mrf.mxu0
      %3539 = vmatprep.mubr.bf16.mxu0 0
      %3540 = vmatmul.mubr.bf16.gmra.mxu0 %v2087
      %v3541 = vpop.f32.mrf.mxu0
      %v3542 = vadd.f32 0.0, %v3541
      %v3543 = vpop.f32.mrf.mxu0
      %v3544 = vpop.f32.mrf.mxu0
      %v3545 = vadd.f32 0.0, %v3544
      %v3546 = vpop.f32.mrf.mxu0
      %3547 = vmatprep.mubr.bf16.mxu0 0
      %3548 = vmatmul.mubr.bf16.gmra.mxu0 %v2090
      %v3549 = vpop.f32.mrf.mxu0
      %v3550 = vadd.f32 0.0, %v3549
      %v3551 = vpop.f32.mrf.mxu0
      %v3552 = vpop.f32.mrf.mxu0
      %v3553 = vadd.f32 0.0, %v3552
      %v3554 = vpop.f32.mrf.mxu0
      %3555 = vmatprep.mubr.bf16.mxu0 0
      %3556 = vmatmul.mubr.bf16.gmra.mxu0 %v2093
      %v3557 = vpop.f32.mrf.mxu0
      %v3558 = vadd.f32 0.0, %v3557
      %v3559 = vpop.f32.mrf.mxu0
      %v3560 = vpop.f32.mrf.mxu0
      %v3561 = vadd.f32 0.0, %v3560
      %v3562 = vpop.f32.mrf.mxu0
      %3563 = vmatprep.mubr.bf16.mxu0 0
      %3564 = vmatmul.mubr.bf16.gmra.mxu0 %v2096
      %v3565 = vpop.f32.mrf.mxu0
      %v3566 = vadd.f32 0.0, %v3565
      %v3567 = vpop.f32.mrf.mxu0
      %v3568 = vpop.f32.mrf.mxu0
      %v3569 = vadd.f32 0.0, %v3568
      %v3570 = vpop.f32.mrf.mxu0
      %3571 = vmatprep.mubr.bf16.mxu0 0
      %3572 = vmatmul.mubr.bf16.gmra.mxu0 %v2099
      %v3573 = vpop.f32.mrf.mxu0
      %v3574 = vadd.f32 0.0, %v3573
      %v3575 = vpop.f32.mrf.mxu0
      %v3576 = vpop.f32.mrf.mxu0
      %v3577 = vadd.f32 0.0, %v3576
      %v3578 = vpop.f32.mrf.mxu0
      %3579 = vmatprep.mubr.bf16.mxu0 0
      %3580 = vmatmul.mubr.bf16.gmra.mxu0 %v2102
      %v3581 = vpop.f32.mrf.mxu0
      %v3582 = vadd.f32 0.0, %v3581
      %v3583 = vpop.f32.mrf.mxu0
      %v3584 = vpop.f32.mrf.mxu0
      %v3585 = vadd.f32 0.0, %v3584
      %v3586 = vpop.f32.mrf.mxu0
      %3587 = vmatprep.mubr.bf16.mxu0 0
      %3588 = vmatmul.mubr.bf16.gmra.mxu0 %v2105
      %v3589 = vpop.f32.mrf.mxu0
      %v3590 = vadd.f32 0.0, %v3589
      %v3591 = vpop.f32.mrf.mxu0
      %v3592 = vpop.f32.mrf.mxu0
      %v3593 = vadd.f32 0.0, %v3592
      %v3594 = vpop.f32.mrf.mxu0
      %3595 = vmatprep.mubr.bf16.mxu0 0
      %3596 = vmatmul.mubr.bf16.gmra.mxu0 %v2108
      %v3597 = vpop.f32.mrf.mxu0
      %v3598 = vadd.f32 0.0, %v3597
      %v3599 = vpop.f32.mrf.mxu0
      %v3600 = vpop.f32.mrf.mxu0
      %v3601 = vadd.f32 0.0, %v3600
      %v3602 = vpop.f32.mrf.mxu0
      %3603 = vmatprep.mubr.bf16.mxu0 0
      %3604 = vmatmul.mubr.bf16.gmra.mxu0 %v2111
      %v3605 = vpop.f32.mrf.mxu0
      %v3606 = vadd.f32 0.0, %v3605
      %v3607 = vpop.f32.mrf.mxu0
      %v3608 = vpop.f32.mrf.mxu0
      %v3609 = vadd.f32 0.0, %v3608
      %v3610 = vpop.f32.mrf.mxu0
      %3611 = vmatprep.mubr.bf16.mxu0 0
      %3612 = vmatmul.mubr.bf16.gmra.mxu0 %v2114
      %v3613 = vpop.f32.mrf.mxu0
      %v3614 = vadd.f32 0.0, %v3613
      %v3615 = vpop.f32.mrf.mxu0
      %v3616 = vpop.f32.mrf.mxu0
      %v3617 = vadd.f32 0.0, %v3616
      %v3618 = vpop.f32.mrf.mxu0
      %3619 = vmatprep.mubr.bf16.mxu0 0
      %3620 = vmatmul.mubr.bf16.gmra.mxu0 %v2117
      %v3621 = vpop.f32.mrf.mxu0
      %v3622 = vadd.f32 0.0, %v3621
      %v3623 = vpop.f32.mrf.mxu0
      %v3624 = vpop.f32.mrf.mxu0
      %v3625 = vadd.f32 0.0, %v3624
      %v3626 = vpop.f32.mrf.mxu0
      %3627 = vmatprep.mubr.bf16.mxu0 0
      %3628 = vmatmul.mubr.bf16.gmra.mxu0 %v2120
      %v3629 = vpop.f32.mrf.mxu0
      %v3630 = vadd.f32 0.0, %v3629
      %v3631 = vpop.f32.mrf.mxu0
      %v3632 = vpop.f32.mrf.mxu0
      %v3633 = vadd.f32 0.0, %v3632
      %v3634 = vpop.f32.mrf.mxu0
      %3635 = vmatprep.mubr.bf16.mxu0 0
      %3636 = vmatmul.mubr.bf16.gmra.mxu0 %v2123
      %v3637 = vpop.f32.mrf.mxu0
      %v3638 = vadd.f32 0.0, %v3637
      %v3639 = vpop.f32.mrf.mxu0
      %v3640 = vpop.f32.mrf.mxu0
      %v3641 = vadd.f32 0.0, %v3640
      %v3642 = vpop.f32.mrf.mxu0
      %3643 = vmatprep.mubr.bf16.mxu0 0
      %3644 = vmatmul.mubr.bf16.gmra.mxu0 %v2126
      %v3645 = vpop.f32.mrf.mxu0
      %v3646 = vadd.f32 0.0, %v3645
      %v3647 = vpop.f32.mrf.mxu0
      %v3648 = vpop.f32.mrf.mxu0
      %v3649 = vadd.f32 0.0, %v3648
      %v3650 = vpop.f32.mrf.mxu0
      %3651 = vmatprep.mubr.bf16.mxu0 0
      %3652 = vmatmul.mubr.bf16.gmra.mxu0 %v2129
      %v3653 = vpop.f32.mrf.mxu0
      %v3654 = vadd.f32 0.0, %v3653
      %v3655 = vpop.f32.mrf.mxu0
      %v3656 = vpop.f32.mrf.mxu0
      %v3657 = vadd.f32 0.0, %v3656
      %v3658 = vpop.f32.mrf.mxu0
      %3659 = vmatprep.mubr.bf16.mxu0 0
      %3660 = vmatmul.mubr.bf16.gmra.mxu0 %v2132
      %v3661 = vpop.f32.mrf.mxu0
      %v3662 = vadd.f32 0.0, %v3661
      %v3663 = vpop.f32.mrf.mxu0
      %v3664 = vpop.f32.mrf.mxu0
      %v3665 = vadd.f32 0.0, %v3664
      %v3666 = vpop.f32.mrf.mxu0
      %3667 = vmatprep.mubr.bf16.mxu0 0
      %3668 = vmatmul.mubr.bf16.gmra.mxu0 %v2135
      %v3669 = vpop.f32.mrf.mxu0
      %v3670 = vadd.f32 0.0, %v3669
      %v3671 = vpop.f32.mrf.mxu0
      %v3672 = vpop.f32.mrf.mxu0
      %v3673 = vadd.f32 0.0, %v3672
      %v3674 = vpop.f32.mrf.mxu0
      %3675 = vmatprep.mubr.bf16.mxu0 0
      %3676 = vmatmul.mubr.bf16.gmra.mxu0 %v2138
      %v3677 = vpop.f32.mrf.mxu0
      %v3678 = vadd.f32 0.0, %v3677
      %v3679 = vpop.f32.mrf.mxu0
      %v3680 = vpop.f32.mrf.mxu0
      %v3681 = vadd.f32 0.0, %v3680
      %v3682 = vpop.f32.mrf.mxu0
      %3683 = vmatprep.mubr.bf16.mxu0 0
      %3684 = vmatmul.mubr.bf16.gmra.mxu0 %v2141
      %v3685 = vpop.f32.mrf.mxu0
      %v3686 = vadd.f32 0.0, %v3685
      %v3687 = vpop.f32.mrf.mxu0
      %v3688 = vpop.f32.mrf.mxu0
      %v3689 = vadd.f32 0.0, %v3688
      %v3690 = vpop.f32.mrf.mxu0
      %3691 = vmatprep.mubr.bf16.mxu0 0
      %3692 = vmatmul.mubr.bf16.gmra.mxu0 %v2144
      %v3693 = vpop.f32.mrf.mxu0
      %v3694 = vadd.f32 0.0, %v3693
      %v3695 = vpop.f32.mrf.mxu0
      %v3696 = vpop.f32.mrf.mxu0
      %v3697 = vadd.f32 0.0, %v3696
      %v3698 = vpop.f32.mrf.mxu0
      %3699 = vmatprep.mubr.bf16.mxu0 0
      %3700 = vmatmul.mubr.bf16.gmra.mxu0 %v2147
      %v3701 = vpop.f32.mrf.mxu0
      %v3702 = vadd.f32 0.0, %v3701
      %v3703 = vpop.f32.mrf.mxu0
      %v3704 = vpop.f32.mrf.mxu0
      %v3705 = vadd.f32 0.0, %v3704
      %v3706 = vpop.f32.mrf.mxu0
      %3707 = vmatprep.mubr.bf16.mxu0 0
      %3708 = vmatmul.mubr.bf16.gmra.mxu0 %v2150
      %v3709 = vpop.f32.mrf.mxu0
      %v3710 = vadd.f32 0.0, %v3709
      %v3711 = vpop.f32.mrf.mxu0
      %v3712 = vpop.f32.mrf.mxu0
      %v3713 = vadd.f32 0.0, %v3712
      %v3714 = vpop.f32.mrf.mxu0
      %3715 = vmatprep.mubr.bf16.mxu0 0
      %3716 = vmatmul.mubr.bf16.gmra.mxu0 %v2153
      %v3717 = vpop.f32.mrf.mxu0
      %v3718 = vadd.f32 0.0, %v3717
      %v3719 = vpop.f32.mrf.mxu0
      %v3720 = vpop.f32.mrf.mxu0
      %v3721 = vadd.f32 0.0, %v3720
      %v3722 = vpop.f32.mrf.mxu0
      %3723 = vmatprep.mubr.bf16.mxu0 0
      %3724 = vmatmul.mubr.bf16.gmra.mxu0 %v2156
      %v3725 = vpop.f32.mrf.mxu0
      %v3726 = vadd.f32 0.0, %v3725
      %v3727 = vpop.f32.mrf.mxu0
      %v3728 = vpop.f32.mrf.mxu0
      %v3729 = vadd.f32 0.0, %v3728
      %v3730 = vpop.f32.mrf.mxu0
      %3731 = vmatprep.mubr.bf16.mxu0 0
      %3732 = vmatmul.mubr.bf16.gmra.mxu0 %v2159
      %v3733 = vpop.f32.mrf.mxu0
      %v3734 = vadd.f32 0.0, %v3733
      %v3735 = vpop.f32.mrf.mxu0
      %v3736 = vpop.f32.mrf.mxu0
      %v3737 = vadd.f32 0.0, %v3736
      %v3738 = vpop.f32.mrf.mxu0
      %3739 = vmatprep.mubr.bf16.mxu0 0
      %3740 = vmatmul.mubr.bf16.gmra.mxu0 %v2162
      %v3741 = vpop.f32.mrf.mxu0
      %v3742 = vadd.f32 0.0, %v3741
      %v3743 = vpop.f32.mrf.mxu0
      %v3744 = vpop.f32.mrf.mxu0
      %v3745 = vadd.f32 0.0, %v3744
      %v3746 = vpop.f32.mrf.mxu0
      %3747 = vmatprep.mubr.bf16.mxu0 0
      %3748 = vmatmul.mubr.bf16.gmra.mxu0 %v2165
      %v3749 = vpop.f32.mrf.mxu0
      %v3750 = vadd.f32 0.0, %v3749
      %v3751 = vpop.f32.mrf.mxu0
      %v3752 = vpop.f32.mrf.mxu0
      %v3753 = vadd.f32 0.0, %v3752
      %v3754 = vpop.f32.mrf.mxu0
      %3755 = vmatprep.mubr.bf16.mxu0 0
      %3756 = vmatmul.mubr.bf16.gmra.mxu0 %v2168
      %v3757 = vpop.f32.mrf.mxu0
      %v3758 = vadd.f32 0.0, %v3757
      %v3759 = vpop.f32.mrf.mxu0
      %v3760 = vpop.f32.mrf.mxu0
      %v3761 = vadd.f32 0.0, %v3760
      %v3762 = vpop.f32.mrf.mxu0
      %3763 = vmatprep.mubr.bf16.mxu0 0
      %3764 = vmatmul.mubr.bf16.gmra.mxu0 %v2171
      %v3765 = vpop.f32.mrf.mxu0
      %v3766 = vadd.f32 0.0, %v3765
      %v3767 = vpop.f32.mrf.mxu0
      %v3768 = vpop.f32.mrf.mxu0
      %v3769 = vadd.f32 0.0, %v3768
      %v3770 = vpop.f32.mrf.mxu0
      %3771 = vmatprep.mubr.bf16.mxu0 0
      %3772 = vmatmul.mubr.bf16.gmra.mxu0 %v2174
      %v3773 = vpop.f32.mrf.mxu0
      %v3774 = vadd.f32 0.0, %v3773
      %v3775 = vpop.f32.mrf.mxu0
      %v3776 = vpop.f32.mrf.mxu0
      %v3777 = vadd.f32 0.0, %v3776
      %v3778 = vpop.f32.mrf.mxu0
      %3779 = vmatprep.mubr.bf16.mxu0 0
      %3780 = vmatmul.mubr.bf16.gmra.mxu0 %v2177
      %v3781 = vpop.f32.mrf.mxu0
      %v3782 = vadd.f32 0.0, %v3781
      %v3783 = vpop.f32.mrf.mxu0
      %v3784 = vpop.f32.mrf.mxu0
      %v3785 = vadd.f32 0.0, %v3784
      %v3786 = vpop.f32.mrf.mxu0
      %3787 = vmatprep.mubr.bf16.mxu0 0
      %3788 = vmatmul.mubr.bf16.gmra.mxu0 %v2180
      %v3789 = vpop.f32.mrf.mxu0
      %v3790 = vadd.f32 0.0, %v3789
      %v3791 = vpop.f32.mrf.mxu0
      %v3792 = vpop.f32.mrf.mxu0
      %v3793 = vadd.f32 0.0, %v3792
      %v3794 = vpop.f32.mrf.mxu0
      %3795 = vmatprep.mubr.bf16.mxu0 0
      %3796 = vmatmul.mubr.bf16.gmra.mxu0 %v2183
      %v3797 = vpop.f32.mrf.mxu0
      %v3798 = vadd.f32 0.0, %v3797
      %v3799 = vpop.f32.mrf.mxu0
      %v3800 = vpop.f32.mrf.mxu0
      %v3801 = vadd.f32 0.0, %v3800
      %v3802 = vpop.f32.mrf.mxu0
      %3803 = vmatprep.mubr.bf16.mxu0 0
      %3804 = vmatmul.mubr.bf16.gmra.mxu0 %v2186
      %v3805 = vpop.f32.mrf.mxu0
      %v3806 = vadd.f32 0.0, %v3805
      %v3807 = vpop.f32.mrf.mxu0
      %v3808 = vpop.f32.mrf.mxu0
      %v3809 = vadd.f32 0.0, %v3808
      %v3810 = vpop.f32.mrf.mxu0
      %3811 = vmatprep.mubr.bf16.mxu0 0
      %3812 = vmatmul.mubr.bf16.gmra.mxu0 %v2189
      %v3813 = vpop.f32.mrf.mxu0
      %v3814 = vadd.f32 0.0, %v3813
      %v3815 = vpop.f32.mrf.mxu0
      %v3816 = vpop.f32.mrf.mxu0
      %v3817 = vadd.f32 0.0, %v3816
      %v3818 = vpop.f32.mrf.mxu0
      %3819 = vmatprep.mubr.bf16.mxu0 0
      %3820 = vmatmul.mubr.bf16.gmra.mxu0 %v2192
      %v3821 = vpop.f32.mrf.mxu0
      %v3822 = vadd.f32 0.0, %v3821
      %v3823 = vpop.f32.mrf.mxu0
      %v3824 = vpop.f32.mrf.mxu0
      %v3825 = vadd.f32 0.0, %v3824
      %v3826 = vpop.f32.mrf.mxu0
      %3827 = vmatprep.mubr.bf16.mxu0 0
      %3828 = vmatmul.mubr.bf16.gmra.mxu0 %v2195
      %v3829 = vpop.f32.mrf.mxu0
      %v3830 = vadd.f32 0.0, %v3829
      %v3831 = vpop.f32.mrf.mxu0
      %v3832 = vpop.f32.mrf.mxu0
      %v3833 = vadd.f32 0.0, %v3832
      %v3834 = vpop.f32.mrf.mxu0
      %3835 = vmatprep.mubr.bf16.mxu0 0
      %3836 = vmatmul.mubr.bf16.gmra.mxu0 %v2198
      %v3837 = vpop.f32.mrf.mxu0
      %v3838 = vadd.f32 0.0, %v3837
      %v3839 = vpop.f32.mrf.mxu0
      %v3840 = vpop.f32.mrf.mxu0
      %v3841 = vadd.f32 0.0, %v3840
      %v3842 = vpop.f32.mrf.mxu0
      %3843 = vmatprep.mubr.bf16.mxu0 0
      %3844 = vmatmul.mubr.bf16.gmra.mxu0 %v2201
      %v3845 = vpop.f32.mrf.mxu0
      %v3846 = vadd.f32 0.0, %v3845
      %v3847 = vpop.f32.mrf.mxu0
      %v3848 = vpop.f32.mrf.mxu0
      %v3849 = vadd.f32 0.0, %v3848
      %v3850 = vpop.f32.mrf.mxu0
      %3851 = vmatprep.mubr.bf16.mxu0 0
      %3852 = vmatmul.mubr.bf16.gmra.mxu0 %v2204
      %v3853 = vpop.f32.mrf.mxu0
      %v3854 = vadd.f32 0.0, %v3853
      %v3855 = vpop.f32.mrf.mxu0
      %v3856 = vpop.f32.mrf.mxu0
      %v3857 = vadd.f32 0.0, %v3856
      %v3858 = vpop.f32.mrf.mxu0
      %3859 = vmatprep.mubr.bf16.mxu0 0
      %3860 = vmatmul.mubr.bf16.gmra.mxu0 %v2207
      %v3861 = vpop.f32.mrf.mxu0
      %v3862 = vadd.f32 0.0, %v3861
      %v3863 = vpop.f32.mrf.mxu0
      %v3864 = vpop.f32.mrf.mxu0
      %v3865 = vadd.f32 0.0, %v3864
      %v3866 = vpop.f32.mrf.mxu0
      %3867 = vmatprep.mubr.bf16.mxu0 0
      %3868 = vmatmul.mubr.bf16.gmra.mxu0 %v2210
      %v3869 = vpop.f32.mrf.mxu0
      %v3870 = vadd.f32 0.0, %v3869
      %v3871 = vpop.f32.mrf.mxu0
      %v3872 = vpop.f32.mrf.mxu0
      %v3873 = vadd.f32 0.0, %v3872
      %v3874 = vpop.f32.mrf.mxu0
      %3875 = vmatprep.mubr.bf16.mxu0 0
      %3876 = vmatmul.mubr.bf16.gmra.mxu0 %v2213
      %v3877 = vpop.f32.mrf.mxu0
      %v3878 = vadd.f32 0.0, %v3877
      %v3879 = vpop.f32.mrf.mxu0
      %v3880 = vpop.f32.mrf.mxu0
      %v3881 = vadd.f32 0.0, %v3880
      %v3882 = vpop.f32.mrf.mxu0
      %3883 = vmatprep.mubr.bf16.mxu0 0
      %3884 = vmatmul.mubr.bf16.gmra.mxu0 %v2216
      %v3885 = vpop.f32.mrf.mxu0
      %v3886 = vadd.f32 0.0, %v3885
      %v3887 = vpop.f32.mrf.mxu0
      %v3888 = vpop.f32.mrf.mxu0
      %v3889 = vadd.f32 0.0, %v3888
      %v3890 = vpop.f32.mrf.mxu0
      %3891 = vmatprep.mubr.bf16.mxu0 0
      %3892 = vmatmul.mubr.bf16.gmra.mxu0 %v2219
      %v3893 = vpop.f32.mrf.mxu0
      %v3894 = vadd.f32 0.0, %v3893
      %v3895 = vpop.f32.mrf.mxu0
      %v3896 = vpop.f32.mrf.mxu0
      %v3897 = vadd.f32 0.0, %v3896
      %v3898 = vpop.f32.mrf.mxu0
      %3899 = vmatprep.mubr.bf16.mxu0 0
      %3900 = vmatmul.mubr.bf16.gmra.mxu0 %v2222
      %v3901 = vpop.f32.mrf.mxu0
      %v3902 = vadd.f32 0.0, %v3901
      %v3903 = vpop.f32.mrf.mxu0
      %v3904 = vpop.f32.mrf.mxu0
      %v3905 = vadd.f32 0.0, %v3904
      %v3906 = vpop.f32.mrf.mxu0
      %3907 = vmatprep.mubr.bf16.mxu0 0
      %3908 = vmatmul.mubr.bf16.gmra.mxu0 %v2225
      %v3909 = vpop.f32.mrf.mxu0
      %v3910 = vadd.f32 0.0, %v3909
      %v3911 = vpop.f32.mrf.mxu0
      %v3912 = vpop.f32.mrf.mxu0
      %v3913 = vadd.f32 0.0, %v3912
      %v3914 = vpop.f32.mrf.mxu0
      %3915 = vmatprep.mubr.bf16.mxu0 0
      %3916 = vmatmul.mubr.bf16.gmra.mxu0 %v2228
      %v3917 = vpop.f32.mrf.mxu0
      %v3918 = vadd.f32 0.0, %v3917
      %v3919 = vpop.f32.mrf.mxu0
      %v3920 = vpop.f32.mrf.mxu0
      %v3921 = vadd.f32 0.0, %v3920
      %v3922 = vpop.f32.mrf.mxu0
      %3923 = vmatprep.mubr.bf16.mxu0 0
      %3924 = vmatmul.mubr.bf16.gmra.mxu0 %v2231
      %v3925 = vpop.f32.mrf.mxu0
      %v3926 = vadd.f32 0.0, %v3925
      %v3927 = vpop.f32.mrf.mxu0
      %v3928 = vpop.f32.mrf.mxu0
      %v3929 = vadd.f32 0.0, %v3928
      %v3930 = vpop.f32.mrf.mxu0
      %3931 = vmatprep.mubr.bf16.mxu0 0
      %3932 = vmatmul.mubr.bf16.gmra.mxu0 %v2234
      %v3933 = vpop.f32.mrf.mxu0
      %v3934 = vadd.f32 0.0, %v3933
      %v3935 = vpop.f32.mrf.mxu0
      %v3936 = vpop.f32.mrf.mxu0
      %v3937 = vadd.f32 0.0, %v3936
      %v3938 = vpop.f32.mrf.mxu0
      %3939 = vdwg.mxu0
      %vm3940 = vcmask 31744
      %3941 = vst.msk [vmem:[%s145] sm:$0xff] %vm3940, %v2278
      %3942 = vst.msk [vmem:[%s145 + $0x8] sm:$0xff] %vm3940, %v2281
      %3943 = vst.msk [vmem:[%s145 + $0x10] sm:$0xff] %vm3940, %v2286
      %3944 = vst.msk [vmem:[%s145 + $0x18] sm:$0xff] %vm3940, %v2289
      %3945 = vst.msk [vmem:[%s145 + $0x20] sm:$0xff] %vm3940, %v2294
      %3946 = vst.msk [vmem:[%s145 + $0x28] sm:$0xff] %vm3940, %v2297
      %3947 = vst.msk [vmem:[%s145 + $0x30] sm:$0xff] %vm3940, %v2302
      %3948 = vst.msk [vmem:[%s145 + $0x38] sm:$0xff] %vm3940, %v2305
      %3949 = vst.msk [vmem:[%s145 + $0x40] sm:$0xff] %vm3940, %v2310
      %3950 = vst.msk [vmem:[%s145 + $0x48] sm:$0xff] %vm3940, %v2313
      %3951 = vst.msk [vmem:[%s145 + $0x50] sm:$0xff] %vm3940, %v2318
      %3952 = vst.msk [vmem:[%s145 + $0x58] sm:$0xff] %vm3940, %v2321
      %3953 = vst.msk [vmem:[%s145 + $0x60] sm:$0xff] %vm3940, %v2326
      %3954 = vst.msk [vmem:[%s145 + $0x68] sm:$0xff] %vm3940, %v2329
      %3955 = vst.msk [vmem:[%s145 + $0x70] sm:$0xff] %vm3940, %v2334
      %3956 = vst.msk [vmem:[%s145 + $0x78] sm:$0xff] %vm3940, %v2337
      %3957 = vst.msk [vmem:[%s145 + $0x80] sm:$0xff] %vm3940, %v2342
      %3958 = vst.msk [vmem:[%s145 + $0x88] sm:$0xff] %vm3940, %v2345
      %3959 = vst.msk [vmem:[%s145 + $0x90] sm:$0xff] %vm3940, %v2350
      %3960 = vst.msk [vmem:[%s145 + $0x98] sm:$0xff] %vm3940, %v2353
      %3961 = vst.msk [vmem:[%s145 + $0xa0] sm:$0xff] %vm3940, %v2358
      %3962 = vst.msk [vmem:[%s145 + $0xa8] sm:$0xff] %vm3940, %v2361
      %3963 = vst.msk [vmem:[%s145 + $0xb0] sm:$0xff] %vm3940, %v2366
      %3964 = vst.msk [vmem:[%s145 + $0xb8] sm:$0xff] %vm3940, %v2369
      %3965 = vst.msk [vmem:[%s145 + $0xc0] sm:$0xff] %vm3940, %v2374
      %3966 = vst.msk [vmem:[%s145 + $0xc8] sm:$0xff] %vm3940, %v2377
      %3967 = vst.msk [vmem:[%s145 + $0xd0] sm:$0xff] %vm3940, %v2382
      %3968 = vst.msk [vmem:[%s145 + $0xd8] sm:$0xff] %vm3940, %v2385
      %3969 = vst.msk [vmem:[%s145 + $0xe0] sm:$0xff] %vm3940, %v2390
      %3970 = vst.msk [vmem:[%s145 + $0xe8] sm:$0xff] %vm3940, %v2393
      %3971 = vst.msk [vmem:[%s145 + $0xf0] sm:$0xff] %vm3940, %v2398
      %3972 = vst.msk [vmem:[%s145 + $0xf8] sm:$0xff] %vm3940, %v2401
      %3973 = vst.msk [vmem:[%s145 + $0x100] sm:$0xff] %vm3940, %v2406
      %3974 = vst.msk [vmem:[%s145 + $0x108] sm:$0xff] %vm3940, %v2409
      %3975 = vst.msk [vmem:[%s145 + $0x110] sm:$0xff] %vm3940, %v2414
      %3976 = vst.msk [vmem:[%s145 + $0x118] sm:$0xff] %vm3940, %v2417
      %3977 = vst.msk [vmem:[%s145 + $0x120] sm:$0xff] %vm3940, %v2422
      %3978 = vst.msk [vmem:[%s145 + $0x128] sm:$0xff] %vm3940, %v2425
      %3979 = vst.msk [vmem:[%s145 + $0x130] sm:$0xff] %vm3940, %v2430
      %3980 = vst.msk [vmem:[%s145 + $0x138] sm:$0xff] %vm3940, %v2433
      %3981 = vst.msk [vmem:[%s145 + $0x140] sm:$0xff] %vm3940, %v2438
      %3982 = vst.msk [vmem:[%s145 + $0x148] sm:$0xff] %vm3940, %v2441
      %3983 = vst.msk [vmem:[%s145 + $0x150] sm:$0xff] %vm3940, %v2446
      %3984 = vst.msk [vmem:[%s145 + $0x158] sm:$0xff] %vm3940, %v2449
      %3985 = vst.msk [vmem:[%s145 + $0x160] sm:$0xff] %vm3940, %v2454
      %3986 = vst.msk [vmem:[%s145 + $0x168] sm:$0xff] %vm3940, %v2457
      %3987 = vst.msk [vmem:[%s145 + $0x170] sm:$0xff] %vm3940, %v2462
      %3988 = vst.msk [vmem:[%s145 + $0x178] sm:$0xff] %vm3940, %v2465
      %3989 = vst.msk [vmem:[%s145 + $0x180] sm:$0xff] %vm3940, %v2470
      %3990 = vst.msk [vmem:[%s145 + $0x188] sm:$0xff] %vm3940, %v2473
      %3991 = vst.msk [vmem:[%s145 + $0x190] sm:$0xff] %vm3940, %v2478
      %3992 = vst.msk [vmem:[%s145 + $0x198] sm:$0xff] %vm3940, %v2481
      %3993 = vst.msk [vmem:[%s145 + $0x1a0] sm:$0xff] %vm3940, %v2486
      %3994 = vst.msk [vmem:[%s145 + $0x1a8] sm:$0xff] %vm3940, %v2489
      %3995 = vst.msk [vmem:[%s145 + $0x1b0] sm:$0xff] %vm3940, %v2494
      %3996 = vst.msk [vmem:[%s145 + $0x1b8] sm:$0xff] %vm3940, %v2497
      %3997 = vst.msk [vmem:[%s145 + $0x1c0] sm:$0xff] %vm3940, %v2502
      %3998 = vst.msk [vmem:[%s145 + $0x1c8] sm:$0xff] %vm3940, %v2505
      %3999 = vst.msk [vmem:[%s145 + $0x1d0] sm:$0xff] %vm3940, %v2510
      %4000 = vst.msk [vmem:[%s145 + $0x1d8] sm:$0xff] %vm3940, %v2513
      %4001 = vst.msk [vmem:[%s145 + $0x1e0] sm:$0xff] %vm3940, %v2518
      %4002 = vst.msk [vmem:[%s145 + $0x1e8] sm:$0xff] %vm3940, %v2521
      %4003 = vst.msk [vmem:[%s145 + $0x1f0] sm:$0xff] %vm3940, %v2526
      %4004 = vst.msk [vmem:[%s145 + $0x1f8] sm:$0xff] %vm3940, %v2529
      %4005 = vst.msk [vmem:[%s145 + $0x200] sm:$0xff] %vm3940, %v2534
      %4006 = vst.msk [vmem:[%s145 + $0x208] sm:$0xff] %vm3940, %v2537
      %4007 = vst.msk [vmem:[%s145 + $0x210] sm:$0xff] %vm3940, %v2542
      %4008 = vst.msk [vmem:[%s145 + $0x218] sm:$0xff] %vm3940, %v2545
      %4009 = vst.msk [vmem:[%s145 + $0x220] sm:$0xff] %vm3940, %v2550
      %4010 = vst.msk [vmem:[%s145 + $0x228] sm:$0xff] %vm3940, %v2553
      %4011 = vst.msk [vmem:[%s145 + $0x230] sm:$0xff] %vm3940, %v2558
      %4012 = vst.msk [vmem:[%s145 + $0x238] sm:$0xff] %vm3940, %v2561
      %4013 = vst.msk [vmem:[%s145 + $0x240] sm:$0xff] %vm3940, %v2566
      %4014 = vst.msk [vmem:[%s145 + $0x248] sm:$0xff] %vm3940, %v2569
      %4015 = vst.msk [vmem:[%s145 + $0x250] sm:$0xff] %vm3940, %v2574
      %4016 = vst.msk [vmem:[%s145 + $0x258] sm:$0xff] %vm3940, %v2577
      %4017 = vst.msk [vmem:[%s145 + $0x260] sm:$0xff] %vm3940, %v2582
      %4018 = vst.msk [vmem:[%s145 + $0x268] sm:$0xff] %vm3940, %v2585
      %4019 = vst.msk [vmem:[%s145 + $0x270] sm:$0xff] %vm3940, %v2590
      %4020 = vst.msk [vmem:[%s145 + $0x278] sm:$0xff] %vm3940, %v2593
      %4021 = vst.msk [vmem:[%s145 + $0x280] sm:$0xff] %vm3940, %v2598
      %4022 = vst.msk [vmem:[%s145 + $0x288] sm:$0xff] %vm3940, %v2601
      %4023 = vst.msk [vmem:[%s145 + $0x290] sm:$0xff] %vm3940, %v2606
      %4024 = vst.msk [vmem:[%s145 + $0x298] sm:$0xff] %vm3940, %v2609
      %4025 = vst.msk [vmem:[%s145 + $0x2a0] sm:$0xff] %vm3940, %v2614
      %4026 = vst.msk [vmem:[%s145 + $0x2a8] sm:$0xff] %vm3940, %v2617
      %4027 = vst.msk [vmem:[%s145 + $0x2b0] sm:$0xff] %vm3940, %v2622
      %4028 = vst.msk [vmem:[%s145 + $0x2b8] sm:$0xff] %vm3940, %v2625
      %4029 = vst.msk [vmem:[%s145 + $0x2c0] sm:$0xff] %vm3940, %v2630
      %4030 = vst.msk [vmem:[%s145 + $0x2c8] sm:$0xff] %vm3940, %v2633
      %4031 = vst.msk [vmem:[%s145 + $0x2d0] sm:$0xff] %vm3940, %v2638
      %4032 = vst.msk [vmem:[%s145 + $0x2d8] sm:$0xff] %vm3940, %v2641
      %4033 = vst.msk [vmem:[%s145 + $0x2e0] sm:$0xff] %vm3940, %v2646
      %4034 = vst.msk [vmem:[%s145 + $0x2e8] sm:$0xff] %vm3940, %v2649
      %4035 = vst.msk [vmem:[%s145 + $0x2f0] sm:$0xff] %vm3940, %v2654
      %4036 = vst.msk [vmem:[%s145 + $0x2f8] sm:$0xff] %vm3940, %v2657
      %4037 = vst.msk [vmem:[%s145 + $0x300] sm:$0xff] %vm3940, %v2662
      %4038 = vst.msk [vmem:[%s145 + $0x308] sm:$0xff] %vm3940, %v2665
      %4039 = vst.msk [vmem:[%s145 + $0x310] sm:$0xff] %vm3940, %v2670
      %4040 = vst.msk [vmem:[%s145 + $0x318] sm:$0xff] %vm3940, %v2673
      %4041 = vst.msk [vmem:[%s145 + $0x320] sm:$0xff] %vm3940, %v2678
      %4042 = vst.msk [vmem:[%s145 + $0x328] sm:$0xff] %vm3940, %v2681
      %4043 = vst.msk [vmem:[%s145 + $0x330] sm:$0xff] %vm3940, %v2686
      %4044 = vst.msk [vmem:[%s145 + $0x338] sm:$0xff] %vm3940, %v2689
      %4045 = vst.msk [vmem:[%s145 + $0x340] sm:$0xff] %vm3940, %v2694
      %4046 = vst.msk [vmem:[%s145 + $0x348] sm:$0xff] %vm3940, %v2697
      %4047 = vst.msk [vmem:[%s145 + $0x350] sm:$0xff] %vm3940, %v2702
      %4048 = vst.msk [vmem:[%s145 + $0x358] sm:$0xff] %vm3940, %v2705
      %4049 = vst.msk [vmem:[%s145 + $0x360] sm:$0xff] %vm3940, %v2710
      %4050 = vst.msk [vmem:[%s145 + $0x368] sm:$0xff] %vm3940, %v2713
      %4051 = vst.msk [vmem:[%s145 + $0x370] sm:$0xff] %vm3940, %v2718
      %4052 = vst.msk [vmem:[%s145 + $0x378] sm:$0xff] %vm3940, %v2721
      %4053 = vst.msk [vmem:[%s145 + $0x380] sm:$0xff] %vm3940, %v2726
      %4054 = vst.msk [vmem:[%s145 + $0x388] sm:$0xff] %vm3940, %v2729
      %4055 = vst.msk [vmem:[%s145 + $0x390] sm:$0xff] %vm3940, %v2734
      %4056 = vst.msk [vmem:[%s145 + $0x398] sm:$0xff] %vm3940, %v2737
      %4057 = vst.msk [vmem:[%s145 + $0x3a0] sm:$0xff] %vm3940, %v2742
      %4058 = vst.msk [vmem:[%s145 + $0x3a8] sm:$0xff] %vm3940, %v2745
      %4059 = vst.msk [vmem:[%s145 + $0x3b0] sm:$0xff] %vm3940, %v2750
      %4060 = vst.msk [vmem:[%s145 + $0x3b8] sm:$0xff] %vm3940, %v2753
      %4061 = vst.msk [vmem:[%s145 + $0x3c0] sm:$0xff] %vm3940, %v2758
      %4062 = vst.msk [vmem:[%s145 + $0x3c8] sm:$0xff] %vm3940, %v2761
      %4063 = vst.msk [vmem:[%s145 + $0x3d0] sm:$0xff] %vm3940, %v2766
      %4064 = vst.msk [vmem:[%s145 + $0x3d8] sm:$0xff] %vm3940, %v2769
      %4065 = vst.msk [vmem:[%s145 + $0x3e0] sm:$0xff] %vm3940, %v2774
      %4066 = vst.msk [vmem:[%s145 + $0x3e8] sm:$0xff] %vm3940, %v2777
      %4067 = vst.msk [vmem:[%s145 + $0x3f0] sm:$0xff] %vm3940, %v2782
      %4068 = vst.msk [vmem:[%s145 + $0x3f8] sm:$0xff] %vm3940, %v2785
      %4069 = vst.msk [vmem:[%s145 + $0x400] sm:$0xff] %vm3940, %v2790
      %4070 = vst.msk [vmem:[%s145 + $0x408] sm:$0xff] %vm3940, %v2793
      %4071 = vst.msk [vmem:[%s145 + $0x410] sm:$0xff] %vm3940, %v2798
      %4072 = vst.msk [vmem:[%s145 + $0x418] sm:$0xff] %vm3940, %v2801
      %4073 = vst.msk [vmem:[%s145 + $0x420] sm:$0xff] %vm3940, %v2806
      %4074 = vst.msk [vmem:[%s145 + $0x428] sm:$0xff] %vm3940, %v2809
      %4075 = vst.msk [vmem:[%s145 + $0x430] sm:$0xff] %vm3940, %v2814
      %4076 = vst.msk [vmem:[%s145 + $0x438] sm:$0xff] %vm3940, %v2817
      %4077 = vst.msk [vmem:[%s145 + $0x440] sm:$0xff] %vm3940, %v2822
      %4078 = vst.msk [vmem:[%s145 + $0x448] sm:$0xff] %vm3940, %v2825
      %4079 = vst.msk [vmem:[%s145 + $0x450] sm:$0xff] %vm3940, %v2830
      %4080 = vst.msk [vmem:[%s145 + $0x458] sm:$0xff] %vm3940, %v2833
      %4081 = vst.msk [vmem:[%s145 + $0x460] sm:$0xff] %vm3940, %v2838
      %4082 = vst.msk [vmem:[%s145 + $0x468] sm:$0xff] %vm3940, %v2841
      %4083 = vst.msk [vmem:[%s145 + $0x470] sm:$0xff] %vm3940, %v2846
      %4084 = vst.msk [vmem:[%s145 + $0x478] sm:$0xff] %vm3940, %v2849
      %4085 = vst.msk [vmem:[%s145 + $0x480] sm:$0xff] %vm3940, %v2854
      %4086 = vst.msk [vmem:[%s145 + $0x488] sm:$0xff] %vm3940, %v2857
      %4087 = vst.msk [vmem:[%s145 + $0x490] sm:$0xff] %vm3940, %v2862
      %4088 = vst.msk [vmem:[%s145 + $0x498] sm:$0xff] %vm3940, %v2865
      %4089 = vst.msk [vmem:[%s145 + $0x4a0] sm:$0xff] %vm3940, %v2870
      %4090 = vst.msk [vmem:[%s145 + $0x4a8] sm:$0xff] %vm3940, %v2873
      %4091 = vst.msk [vmem:[%s145 + $0x4b0] sm:$0xff] %vm3940, %v2878
      %4092 = vst.msk [vmem:[%s145 + $0x4b8] sm:$0xff] %vm3940, %v2881
      %4093 = vst.msk [vmem:[%s145 + $0x4c0] sm:$0xff] %vm3940, %v2886
      %4094 = vst.msk [vmem:[%s145 + $0x4c8] sm:$0xff] %vm3940, %v2889
      %4095 = vst.msk [vmem:[%s145 + $0x4d0] sm:$0xff] %vm3940, %v2894
      %4096 = vst.msk [vmem:[%s145 + $0x4d8] sm:$0xff] %vm3940, %v2897
      %4097 = vst.msk [vmem:[%s145 + $0x4e0] sm:$0xff] %vm3940, %v2902
      %4098 = vst.msk [vmem:[%s145 + $0x4e8] sm:$0xff] %vm3940, %v2905
      %4099 = vst.msk [vmem:[%s145 + $0x4f0] sm:$0xff] %vm3940, %v2910
      %4100 = vst.msk [vmem:[%s145 + $0x4f8] sm:$0xff] %vm3940, %v2913
      %4101 = vst.msk [vmem:[%s145 + $0x500] sm:$0xff] %vm3940, %v2918
      %4102 = vst.msk [vmem:[%s145 + $0x508] sm:$0xff] %vm3940, %v2921
      %4103 = vst.msk [vmem:[%s145 + $0x510] sm:$0xff] %vm3940, %v2926
      %4104 = vst.msk [vmem:[%s145 + $0x518] sm:$0xff] %vm3940, %v2929
      %4105 = vst.msk [vmem:[%s145 + $0x520] sm:$0xff] %vm3940, %v2934
      %4106 = vst.msk [vmem:[%s145 + $0x528] sm:$0xff] %vm3940, %v2937
      %4107 = vst.msk [vmem:[%s145 + $0x530] sm:$0xff] %vm3940, %v2942
      %4108 = vst.msk [vmem:[%s145 + $0x538] sm:$0xff] %vm3940, %v2945
      %4109 = vst.msk [vmem:[%s145 + $0x540] sm:$0xff] %vm3940, %v2950
      %4110 = vst.msk [vmem:[%s145 + $0x548] sm:$0xff] %vm3940, %v2953
      %4111 = vst.msk [vmem:[%s145 + $0x550] sm:$0xff] %vm3940, %v2958
      %4112 = vst.msk [vmem:[%s145 + $0x558] sm:$0xff] %vm3940, %v2961
      %4113 = vst.msk [vmem:[%s145 + $0x560] sm:$0xff] %vm3940, %v2966
      %4114 = vst.msk [vmem:[%s145 + $0x568] sm:$0xff] %vm3940, %v2969
      %4115 = vst.msk [vmem:[%s145 + $0x570] sm:$0xff] %vm3940, %v2974
      %4116 = vst.msk [vmem:[%s145 + $0x578] sm:$0xff] %vm3940, %v2977
      %4117 = vst.msk [vmem:[%s145 + $0x580] sm:$0xff] %vm3940, %v2982
      %4118 = vst.msk [vmem:[%s145 + $0x588] sm:$0xff] %vm3940, %v2985
      %4119 = vst.msk [vmem:[%s145 + $0x590] sm:$0xff] %vm3940, %v2990
      %4120 = vst.msk [vmem:[%s145 + $0x598] sm:$0xff] %vm3940, %v2993
      %4121 = vst.msk [vmem:[%s145 + $0x5a0] sm:$0xff] %vm3940, %v2998
      %4122 = vst.msk [vmem:[%s145 + $0x5a8] sm:$0xff] %vm3940, %v3001
      %4123 = vst.msk [vmem:[%s145 + $0x5b0] sm:$0xff] %vm3940, %v3006
      %4124 = vst.msk [vmem:[%s145 + $0x5b8] sm:$0xff] %vm3940, %v3009
      %4125 = vst.msk [vmem:[%s145 + $0x5c0] sm:$0xff] %vm3940, %v3014
      %4126 = vst.msk [vmem:[%s145 + $0x5c8] sm:$0xff] %vm3940, %v3017
      %4127 = vst.msk [vmem:[%s145 + $0x5d0] sm:$0xff] %vm3940, %v3022
      %4128 = vst.msk [vmem:[%s145 + $0x5d8] sm:$0xff] %vm3940, %v3025
      %4129 = vst.msk [vmem:[%s145 + $0x5e0] sm:$0xff] %vm3940, %v3030
      %4130 = vst.msk [vmem:[%s145 + $0x5e8] sm:$0xff] %vm3940, %v3033
      %4131 = vst.msk [vmem:[%s145 + $0x5f0] sm:$0xff] %vm3940, %v3038
      %4132 = vst.msk [vmem:[%s145 + $0x5f8] sm:$0xff] %vm3940, %v3041
      %4133 = vst.msk [vmem:[%s145 + $0x600] sm:$0xff] %vm3940, %v3046
      %4134 = vst.msk [vmem:[%s145 + $0x608] sm:$0xff] %vm3940, %v3049
      %4135 = vst.msk [vmem:[%s145 + $0x610] sm:$0xff] %vm3940, %v3054
      %4136 = vst.msk [vmem:[%s145 + $0x618] sm:$0xff] %vm3940, %v3057
      %4137 = vst.msk [vmem:[%s145 + $0x620] sm:$0xff] %vm3940, %v3062
      %4138 = vst.msk [vmem:[%s145 + $0x628] sm:$0xff] %vm3940, %v3065
      %4139 = vst.msk [vmem:[%s145 + $0x630] sm:$0xff] %vm3940, %v3070
      %4140 = vst.msk [vmem:[%s145 + $0x638] sm:$0xff] %vm3940, %v3073
      %4141 = vst.msk [vmem:[%s145 + $0x640] sm:$0xff] %vm3940, %v3078
      %4142 = vst.msk [vmem:[%s145 + $0x648] sm:$0xff] %vm3940, %v3081
      %4143 = vst.msk [vmem:[%s145 + $0x650] sm:$0xff] %vm3940, %v3086
      %4144 = vst.msk [vmem:[%s145 + $0x658] sm:$0xff] %vm3940, %v3089
      %4145 = vst.msk [vmem:[%s145 + $0x660] sm:$0xff] %vm3940, %v3094
      %4146 = vst.msk [vmem:[%s145 + $0x668] sm:$0xff] %vm3940, %v3097
      %4147 = vst.msk [vmem:[%s145 + $0x670] sm:$0xff] %vm3940, %v3102
      %4148 = vst.msk [vmem:[%s145 + $0x678] sm:$0xff] %vm3940, %v3105
      %4149 = vst.msk [vmem:[%s145 + $0x680] sm:$0xff] %vm3940, %v3110
      %4150 = vst.msk [vmem:[%s145 + $0x688] sm:$0xff] %vm3940, %v3113
      %4151 = vst.msk [vmem:[%s145 + $0x690] sm:$0xff] %vm3940, %v3118
      %4152 = vst.msk [vmem:[%s145 + $0x698] sm:$0xff] %vm3940, %v3121
      %4153 = vst.msk [vmem:[%s145 + $0x6a0] sm:$0xff] %vm3940, %v3126
      %4154 = vst.msk [vmem:[%s145 + $0x6a8] sm:$0xff] %vm3940, %v3129
      %4155 = vst.msk [vmem:[%s145 + $0x6b0] sm:$0xff] %vm3940, %v3134
      %4156 = vst.msk [vmem:[%s145 + $0x6b8] sm:$0xff] %vm3940, %v3137
      %4157 = vst.msk [vmem:[%s145 + $0x6c0] sm:$0xff] %vm3940, %v3142
      %4158 = vst.msk [vmem:[%s145 + $0x6c8] sm:$0xff] %vm3940, %v3145
      %4159 = vst.msk [vmem:[%s145 + $0x6d0] sm:$0xff] %vm3940, %v3150
      %4160 = vst.msk [vmem:[%s145 + $0x6d8] sm:$0xff] %vm3940, %v3153
      %4161 = vst.msk [vmem:[%s145 + $0x6e0] sm:$0xff] %vm3940, %v3158
      %4162 = vst.msk [vmem:[%s145 + $0x6e8] sm:$0xff] %vm3940, %v3161
      %4163 = vst.msk [vmem:[%s145 + $0x6f0] sm:$0xff] %vm3940, %v3166
      %4164 = vst.msk [vmem:[%s145 + $0x6f8] sm:$0xff] %vm3940, %v3169
      %4165 = vst.msk [vmem:[%s145 + $0x700] sm:$0xff] %vm3940, %v3174
      %4166 = vst.msk [vmem:[%s145 + $0x708] sm:$0xff] %vm3940, %v3177
      %4167 = vst.msk [vmem:[%s145 + $0x710] sm:$0xff] %vm3940, %v3182
      %4168 = vst.msk [vmem:[%s145 + $0x718] sm:$0xff] %vm3940, %v3185
      %4169 = vst.msk [vmem:[%s145 + $0x720] sm:$0xff] %vm3940, %v3190
      %4170 = vst.msk [vmem:[%s145 + $0x728] sm:$0xff] %vm3940, %v3193
      %4171 = vst.msk [vmem:[%s145 + $0x730] sm:$0xff] %vm3940, %v3198
      %4172 = vst.msk [vmem:[%s145 + $0x738] sm:$0xff] %vm3940, %v3201
      %4173 = vst.msk [vmem:[%s145 + $0x740] sm:$0xff] %vm3940, %v3206
      %4174 = vst.msk [vmem:[%s145 + $0x748] sm:$0xff] %vm3940, %v3209
      %4175 = vst.msk [vmem:[%s145 + $0x750] sm:$0xff] %vm3940, %v3214
      %4176 = vst.msk [vmem:[%s145 + $0x758] sm:$0xff] %vm3940, %v3217
      %4177 = vst.msk [vmem:[%s145 + $0x760] sm:$0xff] %vm3940, %v3222
      %4178 = vst.msk [vmem:[%s145 + $0x768] sm:$0xff] %vm3940, %v3225
      %4179 = vst.msk [vmem:[%s145 + $0x770] sm:$0xff] %vm3940, %v3230
      %4180 = vst.msk [vmem:[%s145 + $0x778] sm:$0xff] %vm3940, %v3233
      %4181 = vst.msk [vmem:[%s145 + $0x780] sm:$0xff] %vm3940, %v3238
      %4182 = vst.msk [vmem:[%s145 + $0x788] sm:$0xff] %vm3940, %v3241
      %4183 = vst.msk [vmem:[%s145 + $0x790] sm:$0xff] %vm3940, %v3246
      %4184 = vst.msk [vmem:[%s145 + $0x798] sm:$0xff] %vm3940, %v3249
      %4185 = vst.msk [vmem:[%s145 + $0x7a0] sm:$0xff] %vm3940, %v3254
      %4186 = vst.msk [vmem:[%s145 + $0x7a8] sm:$0xff] %vm3940, %v3257
      %4187 = vst.msk [vmem:[%s145 + $0x7b0] sm:$0xff] %vm3940, %v3262
      %4188 = vst.msk [vmem:[%s145 + $0x7b8] sm:$0xff] %vm3940, %v3265
      %4189 = vst.msk [vmem:[%s145 + $0x7c0] sm:$0xff] %vm3940, %v3270
      %4190 = vst.msk [vmem:[%s145 + $0x7c8] sm:$0xff] %vm3940, %v3273
      %4191 = vst.msk [vmem:[%s145 + $0x7d0] sm:$0xff] %vm3940, %v3278
      %4192 = vst.msk [vmem:[%s145 + $0x7d8] sm:$0xff] %vm3940, %v3281
      %4193 = vst.msk [vmem:[%s145 + $0x7e0] sm:$0xff] %vm3940, %v3286
      %4194 = vst.msk [vmem:[%s145 + $0x7e8] sm:$0xff] %vm3940, %v3289
      %4195 = vst.msk [vmem:[%s145 + $0x7f0] sm:$0xff] %vm3940, %v3294
      %4196 = vst.msk [vmem:[%s145 + $0x7f8] sm:$0xff] %vm3940, %v3297
      %4197 = vst.msk [vmem:[%s145 + $0x800] sm:$0xff] %vm3940, %v3302
      %4198 = vst.msk [vmem:[%s145 + $0x808] sm:$0xff] %vm3940, %v3305
      %4199 = vst.msk [vmem:[%s145 + $0x810] sm:$0xff] %vm3940, %v3310
      %4200 = vst.msk [vmem:[%s145 + $0x818] sm:$0xff] %vm3940, %v3313
      %4201 = vst.msk [vmem:[%s145 + $0x820] sm:$0xff] %vm3940, %v3318
      %4202 = vst.msk [vmem:[%s145 + $0x828] sm:$0xff] %vm3940, %v3321
      %4203 = vst.msk [vmem:[%s145 + $0x830] sm:$0xff] %vm3940, %v3326
      %4204 = vst.msk [vmem:[%s145 + $0x838] sm:$0xff] %vm3940, %v3329
      %4205 = vst.msk [vmem:[%s145 + $0x840] sm:$0xff] %vm3940, %v3334
      %4206 = vst.msk [vmem:[%s145 + $0x848] sm:$0xff] %vm3940, %v3337
      %4207 = vst.msk [vmem:[%s145 + $0x850] sm:$0xff] %vm3940, %v3342
      %4208 = vst.msk [vmem:[%s145 + $0x858] sm:$0xff] %vm3940, %v3345
      %4209 = vst.msk [vmem:[%s145 + $0x860] sm:$0xff] %vm3940, %v3350
      %4210 = vst.msk [vmem:[%s145 + $0x868] sm:$0xff] %vm3940, %v3353
      %4211 = vst.msk [vmem:[%s145 + $0x870] sm:$0xff] %vm3940, %v3358
      %4212 = vst.msk [vmem:[%s145 + $0x878] sm:$0xff] %vm3940, %v3361
      %4213 = vst.msk [vmem:[%s145 + $0x880] sm:$0xff] %vm3940, %v3366
      %4214 = vst.msk [vmem:[%s145 + $0x888] sm:$0xff] %vm3940, %v3369
      %4215 = vst.msk [vmem:[%s145 + $0x890] sm:$0xff] %vm3940, %v3374
      %4216 = vst.msk [vmem:[%s145 + $0x898] sm:$0xff] %vm3940, %v3377
      %4217 = vst.msk [vmem:[%s145 + $0x8a0] sm:$0xff] %vm3940, %v3382
      %4218 = vst.msk [vmem:[%s145 + $0x8a8] sm:$0xff] %vm3940, %v3385
      %4219 = vst.msk [vmem:[%s145 + $0x8b0] sm:$0xff] %vm3940, %v3390
      %4220 = vst.msk [vmem:[%s145 + $0x8b8] sm:$0xff] %vm3940, %v3393
      %4221 = vst.msk [vmem:[%s145 + $0x8c0] sm:$0xff] %vm3940, %v3398
      %4222 = vst.msk [vmem:[%s145 + $0x8c8] sm:$0xff] %vm3940, %v3401
      %4223 = vst.msk [vmem:[%s145 + $0x8d0] sm:$0xff] %vm3940, %v3406
      %4224 = vst.msk [vmem:[%s145 + $0x8d8] sm:$0xff] %vm3940, %v3409
      %4225 = vst.msk [vmem:[%s145 + $0x8e0] sm:$0xff] %vm3940, %v3414
      %4226 = vst.msk [vmem:[%s145 + $0x8e8] sm:$0xff] %vm3940, %v3417
      %4227 = vst.msk [vmem:[%s145 + $0x8f0] sm:$0xff] %vm3940, %v3422
      %4228 = vst.msk [vmem:[%s145 + $0x8f8] sm:$0xff] %vm3940, %v3425
      %4229 = vst.msk [vmem:[%s145 + $0x900] sm:$0xff] %vm3940, %v3430
      %4230 = vst.msk [vmem:[%s145 + $0x908] sm:$0xff] %vm3940, %v3433
      %4231 = vst.msk [vmem:[%s145 + $0x910] sm:$0xff] %vm3940, %v3438
      %4232 = vst.msk [vmem:[%s145 + $0x918] sm:$0xff] %vm3940, %v3441
      %4233 = vst.msk [vmem:[%s145 + $0x920] sm:$0xff] %vm3940, %v3446
      %4234 = vst.msk [vmem:[%s145 + $0x928] sm:$0xff] %vm3940, %v3449
      %4235 = vst.msk [vmem:[%s145 + $0x930] sm:$0xff] %vm3940, %v3454
      %4236 = vst.msk [vmem:[%s145 + $0x938] sm:$0xff] %vm3940, %v3457
      %4237 = vst.msk [vmem:[%s145 + $0x940] sm:$0xff] %vm3940, %v3462
      %4238 = vst.msk [vmem:[%s145 + $0x948] sm:$0xff] %vm3940, %v3465
      %4239 = vst.msk [vmem:[%s145 + $0x950] sm:$0xff] %vm3940, %v3470
      %4240 = vst.msk [vmem:[%s145 + $0x958] sm:$0xff] %vm3940, %v3473
      %4241 = vst.msk [vmem:[%s145 + $0x960] sm:$0xff] %vm3940, %v3478
      %4242 = vst.msk [vmem:[%s145 + $0x968] sm:$0xff] %vm3940, %v3481
      %4243 = vst.msk [vmem:[%s145 + $0x970] sm:$0xff] %vm3940, %v3486
      %4244 = vst.msk [vmem:[%s145 + $0x978] sm:$0xff] %vm3940, %v3489
      %4245 = vst.msk [vmem:[%s145 + $0x980] sm:$0xff] %vm3940, %v3494
      %4246 = vst.msk [vmem:[%s145 + $0x988] sm:$0xff] %vm3940, %v3497
      %4247 = vst.msk [vmem:[%s145 + $0x990] sm:$0xff] %vm3940, %v3502
      %4248 = vst.msk [vmem:[%s145 + $0x998] sm:$0xff] %vm3940, %v3505
      %4249 = vst.msk [vmem:[%s145 + $0x9a0] sm:$0xff] %vm3940, %v3510
      %4250 = vst.msk [vmem:[%s145 + $0x9a8] sm:$0xff] %vm3940, %v3513
      %4251 = vst.msk [vmem:[%s145 + $0x9b0] sm:$0xff] %vm3940, %v3518
      %4252 = vst.msk [vmem:[%s145 + $0x9b8] sm:$0xff] %vm3940, %v3521
      %4253 = vst.msk [vmem:[%s145 + $0x9c0] sm:$0xff] %vm3940, %v3526
      %4254 = vst.msk [vmem:[%s145 + $0x9c8] sm:$0xff] %vm3940, %v3529
      %4255 = vst.msk [vmem:[%s145 + $0x9d0] sm:$0xff] %vm3940, %v3534
      %4256 = vst.msk [vmem:[%s145 + $0x9d8] sm:$0xff] %vm3940, %v3537
      %4257 = vst.msk [vmem:[%s145 + $0x9e0] sm:$0xff] %vm3940, %v3542
      %4258 = vst.msk [vmem:[%s145 + $0x9e8] sm:$0xff] %vm3940, %v3545
      %4259 = vst.msk [vmem:[%s145 + $0x9f0] sm:$0xff] %vm3940, %v3550
      %4260 = vst.msk [vmem:[%s145 + $0x9f8] sm:$0xff] %vm3940, %v3553
      %4261 = vst.msk [vmem:[%s145 + $0xa00] sm:$0xff] %vm3940, %v3558
      %4262 = vst.msk [vmem:[%s145 + $0xa08] sm:$0xff] %vm3940, %v3561
      %4263 = vst.msk [vmem:[%s145 + $0xa10] sm:$0xff] %vm3940, %v3566
      %4264 = vst.msk [vmem:[%s145 + $0xa18] sm:$0xff] %vm3940, %v3569
      %4265 = vst.msk [vmem:[%s145 + $0xa20] sm:$0xff] %vm3940, %v3574
      %4266 = vst.msk [vmem:[%s145 + $0xa28] sm:$0xff] %vm3940, %v3577
      %4267 = vst.msk [vmem:[%s145 + $0xa30] sm:$0xff] %vm3940, %v3582
      %4268 = vst.msk [vmem:[%s145 + $0xa38] sm:$0xff] %vm3940, %v3585
      %4269 = vst.msk [vmem:[%s145 + $0xa40] sm:$0xff] %vm3940, %v3590
      %4270 = vst.msk [vmem:[%s145 + $0xa48] sm:$0xff] %vm3940, %v3593
      %4271 = vst.msk [vmem:[%s145 + $0xa50] sm:$0xff] %vm3940, %v3598
      %4272 = vst.msk [vmem:[%s145 + $0xa58] sm:$0xff] %vm3940, %v3601
      %4273 = vst.msk [vmem:[%s145 + $0xa60] sm:$0xff] %vm3940, %v3606
      %4274 = vst.msk [vmem:[%s145 + $0xa68] sm:$0xff] %vm3940, %v3609
      %4275 = vst.msk [vmem:[%s145 + $0xa70] sm:$0xff] %vm3940, %v3614
      %4276 = vst.msk [vmem:[%s145 + $0xa78] sm:$0xff] %vm3940, %v3617
      %4277 = vst.msk [vmem:[%s145 + $0xa80] sm:$0xff] %vm3940, %v3622
      %4278 = vst.msk [vmem:[%s145 + $0xa88] sm:$0xff] %vm3940, %v3625
      %4279 = vst.msk [vmem:[%s145 + $0xa90] sm:$0xff] %vm3940, %v3630
      %4280 = vst.msk [vmem:[%s145 + $0xa98] sm:$0xff] %vm3940, %v3633
      %4281 = vst.msk [vmem:[%s145 + $0xaa0] sm:$0xff] %vm3940, %v3638
      %4282 = vst.msk [vmem:[%s145 + $0xaa8] sm:$0xff] %vm3940, %v3641
      %4283 = vst.msk [vmem:[%s145 + $0xab0] sm:$0xff] %vm3940, %v3646
      %4284 = vst.msk [vmem:[%s145 + $0xab8] sm:$0xff] %vm3940, %v3649
      %4285 = vst.msk [vmem:[%s145 + $0xac0] sm:$0xff] %vm3940, %v3654
      %4286 = vst.msk [vmem:[%s145 + $0xac8] sm:$0xff] %vm3940, %v3657
      %4287 = vst.msk [vmem:[%s145 + $0xad0] sm:$0xff] %vm3940, %v3662
      %4288 = vst.msk [vmem:[%s145 + $0xad8] sm:$0xff] %vm3940, %v3665
      %4289 = vst.msk [vmem:[%s145 + $0xae0] sm:$0xff] %vm3940, %v3670
      %4290 = vst.msk [vmem:[%s145 + $0xae8] sm:$0xff] %vm3940, %v3673
      %4291 = vst.msk [vmem:[%s145 + $0xaf0] sm:$0xff] %vm3940, %v3678
      %4292 = vst.msk [vmem:[%s145 + $0xaf8] sm:$0xff] %vm3940, %v3681
      %4293 = vst.msk [vmem:[%s145 + $0xb00] sm:$0xff] %vm3940, %v3686
      %4294 = vst.msk [vmem:[%s145 + $0xb08] sm:$0xff] %vm3940, %v3689
      %4295 = vst.msk [vmem:[%s145 + $0xb10] sm:$0xff] %vm3940, %v3694
      %4296 = vst.msk [vmem:[%s145 + $0xb18] sm:$0xff] %vm3940, %v3697
      %4297 = vst.msk [vmem:[%s145 + $0xb20] sm:$0xff] %vm3940, %v3702
      %4298 = vst.msk [vmem:[%s145 + $0xb28] sm:$0xff] %vm3940, %v3705
      %4299 = vst.msk [vmem:[%s145 + $0xb30] sm:$0xff] %vm3940, %v3710
      %4300 = vst.msk [vmem:[%s145 + $0xb38] sm:$0xff] %vm3940, %v3713
      %4301 = vst.msk [vmem:[%s145 + $0xb40] sm:$0xff] %vm3940, %v3718
      %4302 = vst.msk [vmem:[%s145 + $0xb48] sm:$0xff] %vm3940, %v3721
      %4303 = vst.msk [vmem:[%s145 + $0xb50] sm:$0xff] %vm3940, %v3726
      %4304 = vst.msk [vmem:[%s145 + $0xb58] sm:$0xff] %vm3940, %v3729
      %4305 = vst.msk [vmem:[%s145 + $0xb60] sm:$0xff] %vm3940, %v3734
      %4306 = vst.msk [vmem:[%s145 + $0xb68] sm:$0xff] %vm3940, %v3737
      %4307 = vst.msk [vmem:[%s145 + $0xb70] sm:$0xff] %vm3940, %v3742
      %4308 = vst.msk [vmem:[%s145 + $0xb78] sm:$0xff] %vm3940, %v3745
      %4309 = vst.msk [vmem:[%s145 + $0xb80] sm:$0xff] %vm3940, %v3750
      %4310 = vst.msk [vmem:[%s145 + $0xb88] sm:$0xff] %vm3940, %v3753
      %4311 = vst.msk [vmem:[%s145 + $0xb90] sm:$0xff] %vm3940, %v3758
      %4312 = vst.msk [vmem:[%s145 + $0xb98] sm:$0xff] %vm3940, %v3761
      %4313 = vst.msk [vmem:[%s145 + $0xba0] sm:$0xff] %vm3940, %v3766
      %4314 = vst.msk [vmem:[%s145 + $0xba8] sm:$0xff] %vm3940, %v3769
      %4315 = vst.msk [vmem:[%s145 + $0xbb0] sm:$0xff] %vm3940, %v3774
      %4316 = vst.msk [vmem:[%s145 + $0xbb8] sm:$0xff] %vm3940, %v3777
      %4317 = vst.msk [vmem:[%s145 + $0xbc0] sm:$0xff] %vm3940, %v3782
      %4318 = vst.msk [vmem:[%s145 + $0xbc8] sm:$0xff] %vm3940, %v3785
      %4319 = vst.msk [vmem:[%s145 + $0xbd0] sm:$0xff] %vm3940, %v3790
      %4320 = vst.msk [vmem:[%s145 + $0xbd8] sm:$0xff] %vm3940, %v3793
      %4321 = vst.msk [vmem:[%s145 + $0xbe0] sm:$0xff] %vm3940, %v3798
      %4322 = vst.msk [vmem:[%s145 + $0xbe8] sm:$0xff] %vm3940, %v3801
      %4323 = vst.msk [vmem:[%s145 + $0xbf0] sm:$0xff] %vm3940, %v3806
      %4324 = vst.msk [vmem:[%s145 + $0xbf8] sm:$0xff] %vm3940, %v3809
      %4325 = vst.msk [vmem:[%s145 + $0xc00] sm:$0xff] %vm3940, %v3814
      %4326 = vst.msk [vmem:[%s145 + $0xc08] sm:$0xff] %vm3940, %v3817
      %4327 = vst.msk [vmem:[%s145 + $0xc10] sm:$0xff] %vm3940, %v3822
      %4328 = vst.msk [vmem:[%s145 + $0xc18] sm:$0xff] %vm3940, %v3825
      %4329 = vst.msk [vmem:[%s145 + $0xc20] sm:$0xff] %vm3940, %v3830
      %4330 = vst.msk [vmem:[%s145 + $0xc28] sm:$0xff] %vm3940, %v3833
      %4331 = vst.msk [vmem:[%s145 + $0xc30] sm:$0xff] %vm3940, %v3838
      %4332 = vst.msk [vmem:[%s145 + $0xc38] sm:$0xff] %vm3940, %v3841
      %4333 = vst.msk [vmem:[%s145 + $0xc40] sm:$0xff] %vm3940, %v3846
      %4334 = vst.msk [vmem:[%s145 + $0xc48] sm:$0xff] %vm3940, %v3849
      %4335 = vst.msk [vmem:[%s145 + $0xc50] sm:$0xff] %vm3940, %v3854
      %4336 = vst.msk [vmem:[%s145 + $0xc58] sm:$0xff] %vm3940, %v3857
      %4337 = vst.msk [vmem:[%s145 + $0xc60] sm:$0xff] %vm3940, %v3862
      %4338 = vst.msk [vmem:[%s145 + $0xc68] sm:$0xff] %vm3940, %v3865
      %4339 = vst.msk [vmem:[%s145 + $0xc70] sm:$0xff] %vm3940, %v3870
      %4340 = vst.msk [vmem:[%s145 + $0xc78] sm:$0xff] %vm3940, %v3873
      %4341 = vst.msk [vmem:[%s145 + $0xc80] sm:$0xff] %vm3940, %v3878
      %4342 = vst.msk [vmem:[%s145 + $0xc88] sm:$0xff] %vm3940, %v3881
      %4343 = vst.msk [vmem:[%s145 + $0xc90] sm:$0xff] %vm3940, %v3886
      %4344 = vst.msk [vmem:[%s145 + $0xc98] sm:$0xff] %vm3940, %v3889
      %4345 = vst.msk [vmem:[%s145 + $0xca0] sm:$0xff] %vm3940, %v3894
      %4346 = vst.msk [vmem:[%s145 + $0xca8] sm:$0xff] %vm3940, %v3897
      %4347 = vst.msk [vmem:[%s145 + $0xcb0] sm:$0xff] %vm3940, %v3902
      %4348 = vst.msk [vmem:[%s145 + $0xcb8] sm:$0xff] %vm3940, %v3905
      %4349 = vst.msk [vmem:[%s145 + $0xcc0] sm:$0xff] %vm3940, %v3910
      %4350 = vst.msk [vmem:[%s145 + $0xcc8] sm:$0xff] %vm3940, %v3913
      %4351 = vst.msk [vmem:[%s145 + $0xcd0] sm:$0xff] %vm3940, %v3918
      %4352 = vst.msk [vmem:[%s145 + $0xcd8] sm:$0xff] %vm3940, %v3921
      %4353 = vst.msk [vmem:[%s145 + $0xce0] sm:$0xff] %vm3940, %v3926
      %4354 = vst.msk [vmem:[%s145 + $0xce8] sm:$0xff] %vm3940, %v3929
      %4355 = vst.msk [vmem:[%s145 + $0xcf0] sm:$0xff] %vm3940, %v3934
      %4356 = vst.msk [vmem:[%s145 + $0xcf8] sm:$0xff] %vm3940, %v3937
      %s4357 = smul.u32 416, %s13
      %p4358 = scmp.lt.s32.totalorder %s4357, 10815
      %s4359 = scalar_select %p4358, %s4357, 10815
      %s4360 = smul.addr %s4359, 8
      %s4361 = scalar_lea.vmem %s2, %s4360
      // Predicated region
      $region29: #{tpu_custom_call.1} parent=27 // pred_check
        %p4362 = pneg %p78
      $region30: #{tpu_custom_call.1} parent=27 // pred_check_branch
        %4364 = sbr.rel (%p4362) target = $region32
      $region31: #{tpu_custom_call.1} parent=27 // pred_region
        %s4365 = smul.u32 416, %s13
      $region32: #{tpu_custom_call.1} parent=27 // pred_fallthru
        _
    $region28: #{tpu_custom_call.1} parent=5 // pred_fallthru
      _
    %p4366 = scmp.le.s32.totalorder 2, %s8
    // Predicated region
    $region33: #{tpu_custom_call.1} parent=5 // pred_check
      %p4367 = pneg %p4366
    $region34: #{tpu_custom_call.1} parent=5 // pred_check_branch
      %4369 = sbr.rel (%p4367) target = $region36
    $region35: #{tpu_custom_call.1} parent=5 // pred_region
      %s4370 = ssub.s32 %s8, 2
      // Predicated region
      $region37: #{tpu_custom_call.1} parent=35 // pred_check
        %p4371 = pneg %p84
      $region38: #{tpu_custom_call.1} parent=35 // pred_check_branch
        %4373 = sbr.rel (%p4371) target = $region40
      $region39: #{tpu_custom_call.1} parent=35 // pred_region
        %s4374 = smul.u32 416, %s14
        %p4375 = scmp.lt.s32.totalorder %s4374, 10815
        %s4376 = scalar_select %p4375, %s4374, 10815
        %s4377 = smul.addr %s4376, 8
        %s4378 = scalar_lea.vmem %s2, %s4377
      $region40: #{tpu_custom_call.1} parent=35 // pred_fallthru
        _
    $region36: #{tpu_custom_call.1} parent=5 // pred_fallthru
      _
  $region6: #{tpu_custom_call.1} parent=0 // loop_footer
    %s12 = sadd.s32 1, %s8
  $region7: #{tpu_custom_call.1} parent=0 // loop_footer_branch
    %7 = sbr.rel target = $region3
  $region8: #{tpu_custom_call.1} parent=0 // loop_exit
    _

</llo_original>
